<compile_context>
chip_gen: v6e
topology: v6e:2x2x1
jax: 0.10.0
libtpu: 0.0.40
codegen_flags: <defaults>
</compile_context>

<pallas_src>
import functools
import math

import jax
import jax.numpy as jnp
from jax import lax
from jax.experimental import pallas as pl
from jax.experimental.pallas import tpu as pltpu

BN_EPS = 1e-5
FC_HIDDEN = 256


# ------------------------------------------------------------------------------------------------
# Kernels
# ------------------------------------------------------------------------------------------------
def _conv_relu_pool_kernel(H, W, taps, sp, xp_ref, w_ref, b_ref, o_ref, acc_ref):
    """Fused 3x3 conv (pad=1) + bias(+BN) + ReLU + 2x2 max-pool, strip-mined over pooled rows.

    taps == 1: xp_ref is an im2col'd (1, H*W, K) bf16 block (layer 1, lane-dense K = 32).
    taps == 3: xp_ref is a zero-padded flattened (1, (H+3)*(W+2), Cin) bf16 block; the three dx
               taps are merged into the matmul K dim (lane-concat of shifted slabs), so each
               strip needs only 3 MXU matmuls.

    w_ref  : (taps, Km, Cout) bf16   conv weight (BN folded); Km = 3*Cin (taps=3) or 32 (taps=1)
    b_ref  : (1, Cout) f32           conv bias (BN folded)
    o_ref  : (1, H//2+3, W//2+2, Cout) bf16  pooled output, halo zeroed (next layer's padded input)
    acc_ref: (2*sp*wp, Cout) f32     strip scratch, written once per strip (no per-tap RMW)
    """
    wp = (W + 2) if taps == 3 else W          # flat row stride of the input / accumulator
    HO, WO = H // 2, W // 2
    Cout = w_ref.shape[-1]
    bias = b_ref[...]
    zcol = jnp.zeros((1, Cout), jnp.float32)

    # zero only the top/bottom halo rows of the padded output (left/right halo handled per row)
    zrow = jnp.zeros((WO + 2, Cout), o_ref.dtype)
    o_ref[0, 0] = zrow
    o_ref[0, HO + 1] = zrow
    o_ref[0, HO + 2] = zrow

    for p0 in range(0, HO, sp):               # strips of `sp` pooled rows (static unroll)
        ns = min(sp, HO - p0)
        rows = 2 * ns * wp
        base = 2 * p0 * wp

        # --- conv: value accumulation over the dy taps, single store of the strip ---
        if taps == 1:
            acc = jnp.dot(xp_ref[0, pl.ds(base, rows), :], w_ref[0],
                          preferred_element_type=jnp.float32)
        else:
            acc = None
            for dy in range(3):
                lhs = jnp.concatenate(
                    [xp_ref[0, pl.ds(base + dy * wp + dx, rows), :] for dx in range(3)],
                    axis=-1)                                           # (rows, 3*Cin) bf16
                part = jnp.dot(lhs, w_ref[dy], preferred_element_type=jnp.float32)
                acc = part if acc is None else acc + part
        acc_ref[pl.ds(0, rows), :] = acc

        # --- epilogue: 2x2 max-pool + bias + ReLU, one full-width store per pooled row ---
        # (pool before bias/ReLU is exact: bias-add and ReLU are monotone)
        for q in range(ns):
            r0 = 2 * q * wp
            r1 = r0 + wp
            m = jnp.maximum(
                jnp.maximum(acc_ref[pl.ds(r0, WO, 2), :], acc_ref[pl.ds(r0 + 1, WO, 2), :]),
                jnp.maximum(acc_ref[pl.ds(r1, WO, 2), :], acc_ref[pl.ds(r1 + 1, WO, 2), :]))
            row = jnp.concatenate([zcol, jnp.maximum(m + bias, 0.0), zcol], axis=0)
            o_ref[0, 1 + p0 + q] = row.astype(o_ref.dtype)


def _conv_relu_pool_head_kernel(H, W, sp, xp_ref, w_ref, b_ref,
                                w1_ref, b1_ref, w2_ref, b2_ref, o_ref, acc_ref):
    """Last conv block fused with the classifier head:
    conv3 + bias + ReLU + maxpool + AdaptiveAvgPool2d(1) + Flatten + FC1 + ReLU + FC2.
    (Dropout layers are identity in eval mode.)  o_ref: (1, 1, CLS_PAD) lane-dense f32 logits.
    """
    wp = W + 2
    HO, WO = H // 2, W // 2
    Cout = w_ref.shape[-1]
    bias = b_ref[...]

    gap = jnp.zeros((1, Cout), jnp.float32)
    for p0 in range(0, HO, sp):
        ns = min(sp, HO - p0)
        rows = 2 * ns * wp
        base = 2 * p0 * wp

        acc = None
        for dy in range(3):
            lhs = jnp.concatenate(
                [xp_ref[0, pl.ds(base + dy * wp + dx, rows), :] for dx in range(3)], axis=-1)
            part = jnp.dot(lhs, w_ref[dy], preferred_element_type=jnp.float32)
            acc = part if acc is None else acc + part
        acc_ref[pl.ds(0, rows), :] = acc

        for q in range(ns):
            r0 = 2 * q * wp
            r1 = r0 + wp
            m = jnp.maximum(
                jnp.maximum(acc_ref[pl.ds(r0, WO, 2), :], acc_ref[pl.ds(r0 + 1, WO, 2), :]),
                jnp.maximum(acc_ref[pl.ds(r1, WO, 2), :], acc_ref[pl.ds(r1 + 1, WO, 2), :]))
            pooled = jnp.maximum(m + bias, 0.0)                        # (WO, Cout) f32
            gap = gap + jnp.sum(pooled, axis=0, keepdims=True)

    gap = gap * (1.0 / float(HO * WO))                                 # GAP + Flatten
    h = jnp.maximum(
        jnp.dot(gap.astype(jnp.bfloat16), w1_ref[...],
                preferred_element_type=jnp.float32) + b1_ref[...], 0.0)
    o_ref[0] = (jnp.dot(h.astype(jnp.bfloat16), w2_ref[...],
                        preferred_element_type=jnp.float32) + b2_ref[...])


# ------------------------------------------------------------------------------------------------
# Wrappers
# ------------------------------------------------------------------------------------------------
def _tiled_bytes(shape, itemsize):
    """(8,128)-tiled upper-bound footprint of one buffer (lane/sublane padding counted)."""
    lanes = 128 * ((shape[-1] + 127) // 128)
    subl = 8 * ((shape[-2] + 7) // 8)
    lead = 1
    for d in shape[:-2]:
        lead *= d
    return lead * subl * lanes * itemsize


def _strip_rows(HO, wp):
    return max(1, min(HO, 512 // (2 * wp)))


def _conv_block(xf, H, W, taps, w, b):
    """One Conv+BN+ReLU+MaxPool block. Returns the zero-padded pooled map
    (N, H//2+3, W//2+2, Cout) bf16, directly consumable by the next block."""
    N, L, K = xf.shape
    Cout = w.shape[-1]
    HO, WO = H // 2, W // 2
    wp = (W + 2) if taps == 3 else W
    assert H % 2 == 0 and W % 2 == 0, "MaxPool2d(2) here assumes even spatial dims"
    if taps == 3:
        assert L == (H + 3) * (W + 2) and w.shape[1] == 3 * K
    else:
        assert L == H * W and w.shape[1] == K
    sp = _strip_rows(HO, wp)

    flops = 2 * N * (H * wp) * (taps * w.shape[1]) * Cout
    bytes_accessed = (xf.size * 2 + w.size * 2 + b.size * 4
                      + N * (HO + 3) * (WO + 2) * Cout * 2)
    need = (2 * _tiled_bytes((L, K), 2)                       # input block (double-buffered)
            + 2 * _tiled_bytes((HO + 3, WO + 2, Cout), 2)     # output block
            + 2 * _tiled_bytes(w.shape, 2) + 2 * _tiled_bytes((1, Cout), 4)
            + _tiled_bytes((2 * sp * wp, Cout), 4)            # strip acc scratch
            + 2 * _tiled_bytes((2 * sp * wp, w.shape[1]), 4))  # live matmul operands / partials
    vmem_limit = int(min(max(2 * need, 32 << 20), 64 << 20))

    return pl.pallas_call(
        functools.partial(_conv_relu_pool_kernel, H, W, taps, sp),
        out_shape=jax.ShapeDtypeStruct((N, HO + 3, WO + 2, Cout), jnp.bfloat16),
        grid=(N,),
        in_specs=[
            pl.BlockSpec((1, L, K), lambda n: (n, 0, 0)),
            pl.BlockSpec(w.shape, lambda n: (0, 0, 0)),
            pl.BlockSpec((1, Cout), lambda n: (0, 0)),
        ],
        out_specs=pl.BlockSpec((1, HO + 3, WO + 2, Cout), lambda n: (n, 0, 0, 0)),
        scratch_shapes=[pltpu.VMEM((2 * sp * wp, Cout), jnp.float32)],
        compiler_params=pltpu.CompilerParams(dimension_semantics=("parallel",),
                                             vmem_limit_bytes=vmem_limit),
        cost_estimate=pl.CostEstimate(flops=flops, transcendentals=0,
                                      bytes_accessed=bytes_accessed),
    )(xf, w, b)


def _conv_head_block(xf, H, W, w, b, fc1_w, fc1_b, fc2_w, fc2_b):
    """Last conv block fused with GAP + FC1 + ReLU + FC2. Returns (N, CLS_PAD) f32 logits."""
    N, L, K = xf.shape
    Cout = w.shape[-1]
    HO, WO = H // 2, W // 2
    wp = W + 2
    cls_pad = fc2_w.shape[-1]
    assert H % 2 == 0 and W % 2 == 0
    assert L == (H + 3) * (W + 2) and w.shape[1] == 3 * K
    sp = _strip_rows(HO, wp)

    flops = (2 * N * (H * wp) * (3 * w.shape[1]) * Cout
             + 2 * N * (Cout * FC_HIDDEN + FC_HIDDEN * cls_pad))
    bytes_accessed = (xf.size * 2 + w.size * 2 + (fc1_w.size + fc2_w.size) * 2
                      + N * cls_pad * 4)
    need = (2 * _tiled_bytes((L, K), 2) + 2 * _tiled_bytes(w.shape, 2)
            + _tiled_bytes((2 * sp * wp, Cout), 4)
            + 2 * _tiled_bytes((2 * sp * wp, w.shape[1]), 4)
            + 2 * _tiled_bytes(fc1_w.shape, 2) + 2 * _tiled_bytes(fc2_w.shape, 2)
            + 2 * _tiled_bytes((1, cls_pad), 4))
    vmem_limit = int(min(max(2 * need, 32 << 20), 64 << 20))

    out = pl.pallas_call(
        functools.partial(_conv_relu_pool_head_kernel, H, W, sp),
        out_shape=jax.ShapeDtypeStruct((N, 1, cls_pad), jnp.float32),
        grid=(N,),
        in_specs=[
            pl.BlockSpec((1, L, K), lambda n: (n, 0, 0)),
            pl.BlockSpec(w.shape, lambda n: (0, 0, 0)),
            pl.BlockSpec((1, Cout), lambda n: (0, 0)),
            pl.BlockSpec(fc1_w.shape, lambda n: (0, 0)),
            pl.BlockSpec((1, FC_HIDDEN), lambda n: (0, 0)),
            pl.BlockSpec(fc2_w.shape, lambda n: (0, 0)),
            pl.BlockSpec((1, cls_pad), lambda n: (0, 0)),
        ],
        out_specs=pl.BlockSpec((1, 1, cls_pad), lambda n: (n, 0, 0)),
        scratch_shapes=[pltpu.VMEM((2 * sp * wp, Cout), jnp.float32)],
        compiler_params=pltpu.CompilerParams(dimension_semantics=("parallel",),
                                             vmem_limit_bytes=vmem_limit),
        cost_estimate=pl.CostEstimate(flops=flops, transcendentals=0,
                                      bytes_accessed=bytes_accessed),
    )(xf, w, b, fc1_w, fc1_b, fc2_w, fc2_b)
    return out[:, 0, :]


@functools.partial(jax.jit, static_argnames=("num_classes",))
def cnn_forward(x_nchw, params, *, num_classes):
    x = jnp.transpose(x_nchw, (0, 2, 3, 1)).astype(jnp.bfloat16)       # NCHW -> NHWC, bf16
    N, H, W, _ = x.shape

    # --- layer 1: im2col in the wrapper (lane-dense K = 27 -> 32), single matmul per strip ---
    xp = jnp.pad(x, ((0, 0), (1, 1), (1, 1), (0, 0)))
    cols = jnp.concatenate(
        [xp[:, dy:dy + H, dx:dx + W, :] for dy in range(3) for dx in range(3)], axis=-1)
    K1 = params["convs"][0][0].shape[1]                                # 32 (27 zero-padded)
    cols = jnp.pad(cols, ((0, 0), (0, 0), (0, 0), (0, K1 - cols.shape[-1])))
    xf = cols.reshape(N, H * W, K1)

    w, b = params["convs"][0]
    out = _conv_block(xf, H, W, 1, w, b)                               # halo zeroed in-kernel
    H, W = H // 2, W // 2
    xf = out.reshape(N, (H + 3) * (W + 2), out.shape[-1])

    # --- layer 2: dx-merged 3-matmul conv ---
    w, b = params["convs"][1]
    out = _conv_block(xf, H, W, 3, w, b)
    H, W = H // 2, W // 2
    xf = out.reshape(N, (H + 3) * (W + 2), out.shape[-1])

    # --- layer 3 fused with GAP + FC1 + ReLU + FC2 ---
    w, b = params["convs"][2]
    logits_pad = _conv_head_block(xf, H, W, w, b,
                                  params["fc1_w"], params["fc1_b"],
                                  params["fc2_w"], params["fc2_b"])
    return logits_pad[:, :num_classes]


# ------------------------------------------------------------------------------------------------
# Parameters (mirrors CNNModel._initialize_weights, eval-mode BN folded in)
# ------------------------------------------------------------------------------------------------
def init_params(key, num_classes):
    keys = jax.random.split(key, 5)
    bn_scale = 1.0 / math.sqrt(1.0 + BN_EPS)   # fresh BN stats: mean=0, var=1, gamma=1, beta=0

    def conv_w(k, cin, cout):
        std = math.sqrt(2.0 / (cout * 9))      # kaiming_normal_(fan_out, relu); bias init 0
        return jax.random.normal(k, (3, 3, cin, cout), jnp.float32) * std * bn_scale

    # layer 1: im2col layout (1, 32, 32) — K index = (dy*3 + dx)*3 + c, zero-padded 27 -> 32
    w1 = conv_w(keys[0], 3, 32).reshape(27, 32)
    w1 = jnp.pad(w1, ((0, 5), (0, 0))).reshape(1, 32, 32).astype(jnp.bfloat16)
    b1 = jnp.zeros((1, 32), jnp.float32)

    # layers 2/3: dx-merged layout (3, 3*Cin, Cout) — [dy, dx*Cin + c, :]
    def conv_dx_merged(k, cin, cout):
        w = conv_w(k, cin, cout).reshape(3, 3 * cin, cout).astype(jnp.bfloat16)
        return w, jnp.zeros((1, cout), jnp.float32)

    w2, b2 = conv_dx_merged(keys[1], 32, 64)
    w3, b3 = conv_dx_merged(keys[2], 64, 128)

    cls_pad = 128 * ((num_classes + 127) // 128)        # lane-dense logits, sliced in wrapper
    fc1_w = (jax.random.normal(keys[3], (128, FC_HIDDEN), jnp.float32) * 0.01).astype(jnp.bfloat16)
    fc1_b = jnp.zeros((1, FC_HIDDEN), jnp.float32)
    fc2_w = jnp.zeros((FC_HIDDEN, cls_pad), jnp.float32)
    fc2_w = fc2_w.at[:, :num_classes].set(
        jax.random.normal(keys[4], (FC_HIDDEN, num_classes), jnp.float32) * 0.01)
    fc2_w = fc2_w.astype(jnp.bfloat16)
    fc2_b = jnp.zeros((1, cls_pad), jnp.float32)
    return dict(convs=[(w1, b1), (w2, b2), (w3, b3)],
                fc1_w=fc1_w, fc1_b=fc1_b, fc2_w=fc2_w, fc2_b=fc2_b)


# ------------------------------------------------------------------------------------------------
# Pure-XLA reference (same bf16/f32 cast points) for a sanity check
# ------------------------------------------------------------------------------------------------
def reference_forward(x_nchw, params, num_classes):
    x = jnp.transpose(x_nchw, (0, 2, 3, 1)).astype(jnp.bfloat16)
    cins = (3, 32, 64)
    n_layers = len(params["convs"])
    for i, ((wk, b), cin) in enumerate(zip(params["convs"], cins)):
        cout = wk.shape[-1]
        if i == 0:
            w = wk[0][:27].reshape(3, 3, cin, cout)      # undo K zero-padding
        else:
            w = wk.reshape(3, 3, cin, cout)
        y = lax.conv_general_dilated(
            x, w, window_strides=(1, 1), padding=((1, 1), (1, 1)),
            dimension_numbers=("NHWC", "HWIO", "NHWC"),
            preferred_element_type=jnp.float32)
        y = jnp.maximum(y + b.reshape(1, 1, 1, cout), 0.0)
        y = lax.reduce_window(y, -jnp.inf, lax.max, (1, 2, 2, 1), (1, 2, 2, 1), "VALID")
        x = y.astype(jnp.bfloat16) if i < n_layers - 1 else y
    gap = jnp.mean(x.astype(jnp.float32), axis=(1, 2))
    h = jnp.maximum(jnp.dot(gap.astype(jnp.bfloat16), params["fc1_w"],
                            preferred_element_type=jnp.float32) + params["fc1_b"], 0.0)
    logits = jnp.dot(h.astype(jnp.bfloat16), params["fc2_w"],
                     preferred_element_type=jnp.float32) + params["fc2_b"]
    return logits[:, :num_classes]


if __name__ == "__main__":
    num_classes = 10
    key = jax.random.PRNGKey(0)
    k_params, k_x = jax.random.split(key)

    params = init_params(k_params, num_classes)
    x = jax.random.normal(k_x, (2, 3, 16, 16), jnp.float32)   # NCHW, matches Conv2d(3, 32, ...)

    logits = jax.block_until_ready(cnn_forward(x, params, num_classes=num_classes))
    assert logits.shape == (2, num_classes)
    assert bool(jnp.all(jnp.isfinite(logits)))

    ref = reference_forward(x, params, num_classes)
    assert bool(jnp.allclose(logits, ref, rtol=1e-1, atol=2e-3)), (logits, ref)

    print("KERNEL_OK")
</pallas_src>

<mosaic_0001>
module attributes {stable_mosaic.version = 11 : i64} {
  func.func @_conv_relu_pool_kernel(%arg0: i32, %arg1: memref<1x256x32xbf16, #tpu.memory_space<vmem>>, %arg2: memref<1x32x32xbf16, #tpu.memory_space<vmem>>, %arg3: memref<1x32xf32, #tpu.memory_space<vmem>>, %arg4: memref<1x11x10x32xbf16, #tpu.memory_space<vmem>>, %arg5: memref<256x32xf32, #tpu.memory_space<vmem>>) attributes {dimension_semantics = [#tpu.dimension_semantics<parallel>], iteration_bounds = array<i64: 2>, scalar_prefetch = 0 : i64, scratch_operands = 1 : i64, tpu.core_type = #tpu.core_type<tc>, window_params = [{transform_indices = @transform_0, window_bounds = array<i64: 1, 256, 32>}, {pipeline_mode = #tpu.pipeline_mode<synchronous>, transform_indices = @transform_1, window_bounds = array<i64: 1, 32, 32>}, {pipeline_mode = #tpu.pipeline_mode<synchronous>, transform_indices = @transform_2, window_bounds = array<i64: 1, 32>}, {transform_indices = @transform_3, window_bounds = array<i64: 1, 11, 10, 32>}]} {
    %c0 = arith.constant 0 : index
    %c0_0 = arith.constant 0 : index
    %0 = vector.load %arg3[%c0, %c0_0] : memref<1x32xf32, #tpu.memory_space<vmem>>, vector<1x32xf32>
    %cst = arith.constant 0.000000e+00 : f32
    %1 = vector.broadcast %cst : f32 to vector<1x32xf32>
    %cst_1 = arith.constant 0.000000e+00 : bf16
    %2 = vector.broadcast %cst_1 : bf16 to vector<10x32xbf16>
    %c0_2 = arith.constant 0 : index
    %c0_3 = arith.constant 0 : index
    %c0_4 = arith.constant 0 : index
    %c0_5 = arith.constant 0 : index
    %3 = vector.load %arg4[%c0_2, %c0_3, %c0_4, %c0_5] : memref<1x11x10x32xbf16, #tpu.memory_space<vmem>>, vector<1x1x10x32xbf16>
    %4 = vector.shape_cast %3 : vector<1x1x10x32xbf16> to vector<10x32xbf16>
    %5 = vector.shape_cast %2 : vector<10x32xbf16> to vector<1x1x10x32xbf16>
    tpu.vector_store %arg4[%c0_2, %c0_3, %c0_4, %c0_5], %5 {strides = array<i32>} : memref<1x11x10x32xbf16, #tpu.memory_space<vmem>>, vector<1x1x10x32xbf16>,
    %c0_6 = arith.constant 0 : index
    %c9 = arith.constant 9 : index
    %c0_7 = arith.constant 0 : index
    %c0_8 = arith.constant 0 : index
    %6 = vector.load %arg4[%c0_6, %c9, %c0_7, %c0_8] : memref<1x11x10x32xbf16, #tpu.memory_space<vmem>>, vector<1x1x10x32xbf16>
    %7 = vector.shape_cast %6 : vector<1x1x10x32xbf16> to vector<10x32xbf16>
    %8 = vector.shape_cast %2 : vector<10x32xbf16> to vector<1x1x10x32xbf16>
    tpu.vector_store %arg4[%c0_6, %c9, %c0_7, %c0_8], %8 {strides = array<i32>} : memref<1x11x10x32xbf16, #tpu.memory_space<vmem>>, vector<1x1x10x32xbf16>,
    %c0_9 = arith.constant 0 : index
    %c10 = arith.constant 10 : index
    %c0_10 = arith.constant 0 : index
    %c0_11 = arith.constant 0 : index
    %9 = vector.load %arg4[%c0_9, %c10, %c0_10, %c0_11] : memref<1x11x10x32xbf16, #tpu.memory_space<vmem>>, vector<1x1x10x32xbf16>
    %10 = vector.shape_cast %9 : vector<1x1x10x32xbf16> to vector<10x32xbf16>
    %11 = vector.shape_cast %2 : vector<10x32xbf16> to vector<1x1x10x32xbf16>
    tpu.vector_store %arg4[%c0_9, %c10, %c0_10, %c0_11], %11 {strides = array<i32>} : memref<1x11x10x32xbf16, #tpu.memory_space<vmem>>, vector<1x1x10x32xbf16>,
    %c0_12 = arith.constant 0 : index
    %c0_13 = arith.constant 0 : index
    %c0_14 = arith.constant 0 : index
    %12 = vector.load %arg1[%c0_12, %c0_13, %c0_14] : memref<1x256x32xbf16, #tpu.memory_space<vmem>>, vector<1x256x32xbf16>
    %13 = vector.shape_cast %12 : vector<1x256x32xbf16> to vector<256x32xbf16>
    %c0_15 = arith.constant 0 : index
    %c0_16 = arith.constant 0 : index
    %c0_17 = arith.constant 0 : index
    %14 = vector.load %arg2[%c0_15, %c0_16, %c0_17] : memref<1x32x32xbf16, #tpu.memory_space<vmem>>, vector<1x32x32xbf16>
    %15 = vector.shape_cast %14 : vector<1x32x32xbf16> to vector<32x32xbf16>
    %cst_18 = arith.constant dense<0.000000e+00> : vector<256x32xf32>
    %16 = tpu.matmul %13, %15, %cst_18 {dimension_numbers = #tpu.dot_dimension_numbers<[1], [0], [0], [1], [0, 0, 1, 1], [], []>} : vector<256x32xbf16>, vector<32x32xbf16>, vector<256x32xf32> -> vector<256x32xf32>
    %c0_19 = arith.constant 0 : index
    %c0_20 = arith.constant 0 : index
    %17 = vector.load %arg5[%c0_19, %c0_20] : memref<256x32xf32, #tpu.memory_space<vmem>>, vector<256x32xf32>
    tpu.vector_store %arg5[%c0_19, %c0_20], %16 {strides = array<i32>} : memref<256x32xf32, #tpu.memory_space<vmem>>, vector<256x32xf32>,
    %c0_21 = arith.constant 0 : index
    %c0_22 = arith.constant 0 : index
    %18 = tpu.strided_load %arg5[%c0_21, %c0_22] {strides = array<i32: 2, 1>} : memref<256x32xf32, #tpu.memory_space<vmem>>, vector<8x32xf32>
    %c1 = arith.constant 1 : index
    %c0_23 = arith.constant 0 : index
    %19 = tpu.strided_load %arg5[%c1, %c0_23] {strides = array<i32: 2, 1>} : memref<256x32xf32, #tpu.memory_space<vmem>>, vector<8x32xf32>
    %20 = arith.maximumf %18, %19 : vector<8x32xf32>
    %c16 = arith.constant 16 : index
    %c0_24 = arith.constant 0 : index
    %21 = tpu.strided_load %arg5[%c16, %c0_24] {strides = array<i32: 2, 1>} : memref<256x32xf32, #tpu.memory_space<vmem>>, vector<8x32xf32>
    %c17 = arith.constant 17 : index
    %c0_25 = arith.constant 0 : index
    %22 = tpu.strided_load %arg5[%c17, %c0_25] {strides = array<i32: 2, 1>} : memref<256x32xf32, #tpu.memory_space<vmem>>, vector<8x32xf32>
    %23 = arith.maximumf %21, %22 : vector<8x32xf32>
    %24 = arith.maximumf %20, %23 : vector<8x32xf32>
    %25 = vector.broadcast %0 : vector<1x32xf32> to vector<8x32xf32>
    %26 = arith.addf %24, %25 : vector<8x32xf32>
    %cst_26 = arith.constant 0.000000e+00 : f32
    %27 = vector.broadcast %cst_26 : f32 to vector<8x32xf32>
    %28 = arith.maximumf %26, %27 : vector<8x32xf32>
    %29 = tpu.concatenate %1, %28, %1 in 0 : vector<1x32xf32>, vector<8x32xf32>, vector<1x32xf32> -> vector<10x32xf32>
    %30 = arith.truncf %29 : vector<10x32xf32> to vector<10x32xbf16>
    %c0_27 = arith.constant 0 : index
    %c1_28 = arith.constant 1 : index
    %c0_29 = arith.constant 0 : index
    %c0_30 = arith.constant 0 : index
    %31 = vector.load %arg4[%c0_27, %c1_28, %c0_29, %c0_30] : memref<1x11x10x32xbf16, #tpu.memory_space<vmem>>, vector<1x1x10x32xbf16>
    %32 = vector.shape_cast %31 : vector<1x1x10x32xbf16> to vector<10x32xbf16>
    %33 = vector.shape_cast %30 : vector<10x32xbf16> to vector<1x1x10x32xbf16>
    tpu.vector_store %arg4[%c0_27, %c1_28, %c0_29, %c0_30], %33 {strides = array<i32>} : memref<1x11x10x32xbf16, #tpu.memory_space<vmem>>, vector<1x1x10x32xbf16>,
    %c32 = arith.constant 32 : index
    %c0_31 = arith.constant 0 : index
    %34 = tpu.strided_load %arg5[%c32, %c0_31] {strides = array<i32: 2, 1>} : memref<256x32xf32, #tpu.memory_space<vmem>>, vector<8x32xf32>
    %c33 = arith.constant 33 : index
    %c0_32 = arith.constant 0 : index
    %35 = tpu.strided_load %arg5[%c33, %c0_32] {strides = array<i32: 2, 1>} : memref<256x32xf32, #tpu.memory_space<vmem>>, vector<8x32xf32>
    %36 = arith.maximumf %34, %35 : vector<8x32xf32>
    %c48 = arith.constant 48 : index
    %c0_33 = arith.constant 0 : index
    %37 = tpu.strided_load %arg5[%c48, %c0_33] {strides = array<i32: 2, 1>} : memref<256x32xf32, #tpu.memory_space<vmem>>, vector<8x32xf32>
    %c49 = arith.constant 49 : index
    %c0_34 = arith.constant 0 : index
    %38 = tpu.strided_load %arg5[%c49, %c0_34] {strides = array<i32: 2, 1>} : memref<256x32xf32, #tpu.memory_space<vmem>>, vector<8x32xf32>
    %39 = arith.maximumf %37, %38 : vector<8x32xf32>
    %40 = arith.maximumf %36, %39 : vector<8x32xf32>
    %41 = vector.broadcast %0 : vector<1x32xf32> to vector<8x32xf32>
    %42 = arith.addf %40, %41 : vector<8x32xf32>
    %cst_35 = arith.constant 0.000000e+00 : f32
    %43 = vector.broadcast %cst_35 : f32 to vector<8x32xf32>
    %44 = arith.maximumf %42, %43 : vector<8x32xf32>
    %45 = tpu.concatenate %1, %44, %1 in 0 : vector<1x32xf32>, vector<8x32xf32>, vector<1x32xf32> -> vector<10x32xf32>
    %46 = arith.truncf %45 : vector<10x32xf32> to vector<10x32xbf16>
    %c0_36 = arith.constant 0 : index
    %c2 = arith.constant 2 : index
    %c0_37 = arith.constant 0 : index
    %c0_38 = arith.constant 0 : index
    %47 = vector.load %arg4[%c0_36, %c2, %c0_37, %c0_38] : memref<1x11x10x32xbf16, #tpu.memory_space<vmem>>, vector<1x1x10x32xbf16>
    %48 = vector.shape_cast %47 : vector<1x1x10x32xbf16> to vector<10x32xbf16>
    %49 = vector.shape_cast %46 : vector<10x32xbf16> to vector<1x1x10x32xbf16>
    tpu.vector_store %arg4[%c0_36, %c2, %c0_37, %c0_38], %49 {strides = array<i32>} : memref<1x11x10x32xbf16, #tpu.memory_space<vmem>>, vector<1x1x10x32xbf16>,
    %c64 = arith.constant 64 : index
    %c0_39 = arith.constant 0 : index
    %50 = tpu.strided_load %arg5[%c64, %c0_39] {strides = array<i32: 2, 1>} : memref<256x32xf32, #tpu.memory_space<vmem>>, vector<8x32xf32>
    %c65 = arith.constant 65 : index
    %c0_40 = arith.constant 0 : index
    %51 = tpu.strided_load %arg5[%c65, %c0_40] {strides = array<i32: 2, 1>} : memref<256x32xf32, #tpu.memory_space<vmem>>, vector<8x32xf32>
    %52 = arith.maximumf %50, %51 : vector<8x32xf32>
    %c80 = arith.constant 80 : index
    %c0_41 = arith.constant 0 : index
    %53 = tpu.strided_load %arg5[%c80, %c0_41] {strides = array<i32: 2, 1>} : memref<256x32xf32, #tpu.memory_space<vmem>>, vector<8x32xf32>
    %c81 = arith.constant 81 : index
    %c0_42 = arith.constant 0 : index
    %54 = tpu.strided_load %arg5[%c81, %c0_42] {strides = array<i32: 2, 1>} : memref<256x32xf32, #tpu.memory_space<vmem>>, vector<8x32xf32>
    %55 = arith.maximumf %53, %54 : vector<8x32xf32>
    %56 = arith.maximumf %52, %55 : vector<8x32xf32>
    %57 = vector.broadcast %0 : vector<1x32xf32> to vector<8x32xf32>
    %58 = arith.addf %56, %57 : vector<8x32xf32>
    %cst_43 = arith.constant 0.000000e+00 : f32
    %59 = vector.broadcast %cst_43 : f32 to vector<8x32xf32>
    %60 = arith.maximumf %58, %59 : vector<8x32xf32>
    %61 = tpu.concatenate %1, %60, %1 in 0 : vector<1x32xf32>, vector<8x32xf32>, vector<1x32xf32> -> vector<10x32xf32>
    %62 = arith.truncf %61 : vector<10x32xf32> to vector<10x32xbf16>
    %c0_44 = arith.constant 0 : index
    %c3 = arith.constant 3 : index
    %c0_45 = arith.constant 0 : index
    %c0_46 = arith.constant 0 : index
    %63 = vector.load %arg4[%c0_44, %c3, %c0_45, %c0_46] : memref<1x11x10x32xbf16, #tpu.memory_space<vmem>>, vector<1x1x10x32xbf16>
    %64 = vector.shape_cast %63 : vector<1x1x10x32xbf16> to vector<10x32xbf16>
    %65 = vector.shape_cast %62 : vector<10x32xbf16> to vector<1x1x10x32xbf16>
    tpu.vector_store %arg4[%c0_44, %c3, %c0_45, %c0_46], %65 {strides = array<i32>} : memref<1x11x10x32xbf16, #tpu.memory_space<vmem>>, vector<1x1x10x32xbf16>,
    %c96 = arith.constant 96 : index
    %c0_47 = arith.constant 0 : index
    %66 = tpu.strided_load %arg5[%c96, %c0_47] {strides = array<i32: 2, 1>} : memref<256x32xf32, #tpu.memory_space<vmem>>, vector<8x32xf32>
    %c97 = arith.constant 97 : index
    %c0_48 = arith.constant 0 : index
    %67 = tpu.strided_load %arg5[%c97, %c0_48] {strides = array<i32: 2, 1>} : memref<256x32xf32, #tpu.memory_space<vmem>>, vector<8x32xf32>
    %68 = arith.maximumf %66, %67 : vector<8x32xf32>
    %c112 = arith.constant 112 : index
    %c0_49 = arith.constant 0 : index
    %69 = tpu.strided_load %arg5[%c112, %c0_49] {strides = array<i32: 2, 1>} : memref<256x32xf32, #tpu.memory_space<vmem>>, vector<8x32xf32>
    %c113 = arith.constant 113 : index
    %c0_50 = arith.constant 0 : index
    %70 = tpu.strided_load %arg5[%c113, %c0_50] {strides = array<i32: 2, 1>} : memref<256x32xf32, #tpu.memory_space<vmem>>, vector<8x32xf32>
    %71 = arith.maximumf %69, %70 : vector<8x32xf32>
    %72 = arith.maximumf %68, %71 : vector<8x32xf32>
    %73 = vector.broadcast %0 : vector<1x32xf32> to vector<8x32xf32>
    %74 = arith.addf %72, %73 : vector<8x32xf32>
    %cst_51 = arith.constant 0.000000e+00 : f32
    %75 = vector.broadcast %cst_51 : f32 to vector<8x32xf32>
    %76 = arith.maximumf %74, %75 : vector<8x32xf32>
    %77 = tpu.concatenate %1, %76, %1 in 0 : vector<1x32xf32>, vector<8x32xf32>, vector<1x32xf32> -> vector<10x32xf32>
    %78 = arith.truncf %77 : vector<10x32xf32> to vector<10x32xbf16>
    %c0_52 = arith.constant 0 : index
    %c4 = arith.constant 4 : index
    %c0_53 = arith.constant 0 : index
    %c0_54 = arith.constant 0 : index
    %79 = vector.load %arg4[%c0_52, %c4, %c0_53, %c0_54] : memref<1x11x10x32xbf16, #tpu.memory_space<vmem>>, vector<1x1x10x32xbf16>
    %80 = vector.shape_cast %79 : vector<1x1x10x32xbf16> to vector<10x32xbf16>
    %81 = vector.shape_cast %78 : vector<10x32xbf16> to vector<1x1x10x32xbf16>
    tpu.vector_store %arg4[%c0_52, %c4, %c0_53, %c0_54], %81 {strides = array<i32>} : memref<1x11x10x32xbf16, #tpu.memory_space<vmem>>, vector<1x1x10x32xbf16>,
    %c128 = arith.constant 128 : index
    %c0_55 = arith.constant 0 : index
    %82 = tpu.strided_load %arg5[%c128, %c0_55] {strides = array<i32: 2, 1>} : memref<256x32xf32, #tpu.memory_space<vmem>>, vector<8x32xf32>
    %c129 = arith.constant 129 : index
    %c0_56 = arith.constant 0 : index
    %83 = tpu.strided_load %arg5[%c129, %c0_56] {strides = array<i32: 2, 1>} : memref<256x32xf32, #tpu.memory_space<vmem>>, vector<8x32xf32>
    %84 = arith.maximumf %82, %83 : vector<8x32xf32>
    %c144 = arith.constant 144 : index
    %c0_57 = arith.constant 0 : index
    %85 = tpu.strided_load %arg5[%c144, %c0_57] {strides = array<i32: 2, 1>} : memref<256x32xf32, #tpu.memory_space<vmem>>, vector<8x32xf32>
    %c145 = arith.constant 145 : index
    %c0_58 = arith.constant 0 : index
    %86 = tpu.strided_load %arg5[%c145, %c0_58] {strides = array<i32: 2, 1>} : memref<256x32xf32, #tpu.memory_space<vmem>>, vector<8x32xf32>
    %87 = arith.maximumf %85, %86 : vector<8x32xf32>
    %88 = arith.maximumf %84, %87 : vector<8x32xf32>
    %89 = vector.broadcast %0 : vector<1x32xf32> to vector<8x32xf32>
    %90 = arith.addf %88, %89 : vector<8x32xf32>
    %cst_59 = arith.constant 0.000000e+00 : f32
    %91 = vector.broadcast %cst_59 : f32 to vector<8x32xf32>
    %92 = arith.maximumf %90, %91 : vector<8x32xf32>
    %93 = tpu.concatenate %1, %92, %1 in 0 : vector<1x32xf32>, vector<8x32xf32>, vector<1x32xf32> -> vector<10x32xf32>
    %94 = arith.truncf %93 : vector<10x32xf32> to vector<10x32xbf16>
    %c0_60 = arith.constant 0 : index
    %c5 = arith.constant 5 : index
    %c0_61 = arith.constant 0 : index
    %c0_62 = arith.constant 0 : index
    %95 = vector.load %arg4[%c0_60, %c5, %c0_61, %c0_62] : memref<1x11x10x32xbf16, #tpu.memory_space<vmem>>, vector<1x1x10x32xbf16>
    %96 = vector.shape_cast %95 : vector<1x1x10x32xbf16> to vector<10x32xbf16>
    %97 = vector.shape_cast %94 : vector<10x32xbf16> to vector<1x1x10x32xbf16>
    tpu.vector_store %arg4[%c0_60, %c5, %c0_61, %c0_62], %97 {strides = array<i32>} : memref<1x11x10x32xbf16, #tpu.memory_space<vmem>>, vector<1x1x10x32xbf16>,
    %c160 = arith.constant 160 : index
    %c0_63 = arith.constant 0 : index
    %98 = tpu.strided_load %arg5[%c160, %c0_63] {strides = array<i32: 2, 1>} : memref<256x32xf32, #tpu.memory_space<vmem>>, vector<8x32xf32>
    %c161 = arith.constant 161 : index
    %c0_64 = arith.constant 0 : index
    %99 = tpu.strided_load %arg5[%c161, %c0_64] {strides = array<i32: 2, 1>} : memref<256x32xf32, #tpu.memory_space<vmem>>, vector<8x32xf32>
    %100 = arith.maximumf %98, %99 : vector<8x32xf32>
    %c176 = arith.constant 176 : index
    %c0_65 = arith.constant 0 : index
    %101 = tpu.strided_load %arg5[%c176, %c0_65] {strides = array<i32: 2, 1>} : memref<256x32xf32, #tpu.memory_space<vmem>>, vector<8x32xf32>
    %c177 = arith.constant 177 : index
    %c0_66 = arith.constant 0 : index
    %102 = tpu.strided_load %arg5[%c177, %c0_66] {strides = array<i32: 2, 1>} : memref<256x32xf32, #tpu.memory_space<vmem>>, vector<8x32xf32>
    %103 = arith.maximumf %101, %102 : vector<8x32xf32>
    %104 = arith.maximumf %100, %103 : vector<8x32xf32>
    %105 = vector.broadcast %0 : vector<1x32xf32> to vector<8x32xf32>
    %106 = arith.addf %104, %105 : vector<8x32xf32>
    %cst_67 = arith.constant 0.000000e+00 : f32
    %107 = vector.broadcast %cst_67 : f32 to vector<8x32xf32>
    %108 = arith.maximumf %106, %107 : vector<8x32xf32>
    %109 = tpu.concatenate %1, %108, %1 in 0 : vector<1x32xf32>, vector<8x32xf32>, vector<1x32xf32> -> vector<10x32xf32>
    %110 = arith.truncf %109 : vector<10x32xf32> to vector<10x32xbf16>
    %c0_68 = arith.constant 0 : index
    %c6 = arith.constant 6 : index
    %c0_69 = arith.constant 0 : index
    %c0_70 = arith.constant 0 : index
    %111 = vector.load %arg4[%c0_68, %c6, %c0_69, %c0_70] : memref<1x11x10x32xbf16, #tpu.memory_space<vmem>>, vector<1x1x10x32xbf16>
    %112 = vector.shape_cast %111 : vector<1x1x10x32xbf16> to vector<10x32xbf16>
    %113 = vector.shape_cast %110 : vector<10x32xbf16> to vector<1x1x10x32xbf16>
    tpu.vector_store %arg4[%c0_68, %c6, %c0_69, %c0_70], %113 {strides = array<i32>} : memref<1x11x10x32xbf16, #tpu.memory_space<vmem>>, vector<1x1x10x32xbf16>,
    %c192 = arith.constant 192 : index
    %c0_71 = arith.constant 0 : index
    %114 = tpu.strided_load %arg5[%c192, %c0_71] {strides = array<i32: 2, 1>} : memref<256x32xf32, #tpu.memory_space<vmem>>, vector<8x32xf32>
    %c193 = arith.constant 193 : index
    %c0_72 = arith.constant 0 : index
    %115 = tpu.strided_load %arg5[%c193, %c0_72] {strides = array<i32: 2, 1>} : memref<256x32xf32, #tpu.memory_space<vmem>>, vector<8x32xf32>
    %116 = arith.maximumf %114, %115 : vector<8x32xf32>
    %c208 = arith.constant 208 : index
    %c0_73 = arith.constant 0 : index
    %117 = tpu.strided_load %arg5[%c208, %c0_73] {strides = array<i32: 2, 1>} : memref<256x32xf32, #tpu.memory_space<vmem>>, vector<8x32xf32>
    %c209 = arith.constant 209 : index
    %c0_74 = arith.constant 0 : index
    %118 = tpu.strided_load %arg5[%c209, %c0_74] {strides = array<i32: 2, 1>} : memref<256x32xf32, #tpu.memory_space<vmem>>, vector<8x32xf32>
    %119 = arith.maximumf %117, %118 : vector<8x32xf32>
    %120 = arith.maximumf %116, %119 : vector<8x32xf32>
    %121 = vector.broadcast %0 : vector<1x32xf32> to vector<8x32xf32>
    %122 = arith.addf %120, %121 : vector<8x32xf32>
    %cst_75 = arith.constant 0.000000e+00 : f32
    %123 = vector.broadcast %cst_75 : f32 to vector<8x32xf32>
    %124 = arith.maximumf %122, %123 : vector<8x32xf32>
    %125 = tpu.concatenate %1, %124, %1 in 0 : vector<1x32xf32>, vector<8x32xf32>, vector<1x32xf32> -> vector<10x32xf32>
    %126 = arith.truncf %125 : vector<10x32xf32> to vector<10x32xbf16>
    %c0_76 = arith.constant 0 : index
    %c7 = arith.constant 7 : index
    %c0_77 = arith.constant 0 : index
    %c0_78 = arith.constant 0 : index
    %127 = vector.load %arg4[%c0_76, %c7, %c0_77, %c0_78] : memref<1x11x10x32xbf16, #tpu.memory_space<vmem>>, vector<1x1x10x32xbf16>
    %128 = vector.shape_cast %127 : vector<1x1x10x32xbf16> to vector<10x32xbf16>
    %129 = vector.shape_cast %126 : vector<10x32xbf16> to vector<1x1x10x32xbf16>
    tpu.vector_store %arg4[%c0_76, %c7, %c0_77, %c0_78], %129 {strides = array<i32>} : memref<1x11x10x32xbf16, #tpu.memory_space<vmem>>, vector<1x1x10x32xbf16>,
    %c224 = arith.constant 224 : index
    %c0_79 = arith.constant 0 : index
    %130 = tpu.strided_load %arg5[%c224, %c0_79] {strides = array<i32: 2, 1>} : memref<256x32xf32, #tpu.memory_space<vmem>>, vector<8x32xf32>
    %c225 = arith.constant 225 : index
    %c0_80 = arith.constant 0 : index
    %131 = tpu.strided_load %arg5[%c225, %c0_80] {strides = array<i32: 2, 1>} : memref<256x32xf32, #tpu.memory_space<vmem>>, vector<8x32xf32>
    %132 = arith.maximumf %130, %131 : vector<8x32xf32>
    %c240 = arith.constant 240 : index
    %c0_81 = arith.constant 0 : index
    %133 = tpu.strided_load %arg5[%c240, %c0_81] {strides = array<i32: 2, 1>} : memref<256x32xf32, #tpu.memory_space<vmem>>, vector<8x32xf32>
    %c241 = arith.constant 241 : index
    %c0_82 = arith.constant 0 : index
    %134 = tpu.strided_load %arg5[%c241, %c0_82] {strides = array<i32: 2, 1>} : memref<256x32xf32, #tpu.memory_space<vmem>>, vector<8x32xf32>
    %135 = arith.maximumf %133, %134 : vector<8x32xf32>
    %136 = arith.maximumf %132, %135 : vector<8x32xf32>
    %137 = vector.broadcast %0 : vector<1x32xf32> to vector<8x32xf32>
    %138 = arith.addf %136, %137 : vector<8x32xf32>
    %cst_83 = arith.constant 0.000000e+00 : f32
    %139 = vector.broadcast %cst_83 : f32 to vector<8x32xf32>
    %140 = arith.maximumf %138, %139 : vector<8x32xf32>
    %141 = tpu.concatenate %1, %140, %1 in 0 : vector<1x32xf32>, vector<8x32xf32>, vector<1x32xf32> -> vector<10x32xf32>
    %142 = arith.truncf %141 : vector<10x32xf32> to vector<10x32xbf16>
    %c0_84 = arith.constant 0 : index
    %c8 = arith.constant 8 : index
    %c0_85 = arith.constant 0 : index
    %c0_86 = arith.constant 0 : index
    %143 = vector.load %arg4[%c0_84, %c8, %c0_85, %c0_86] : memref<1x11x10x32xbf16, #tpu.memory_space<vmem>>, vector<1x1x10x32xbf16>
    %144 = vector.shape_cast %143 : vector<1x1x10x32xbf16> to vector<10x32xbf16>
    %145 = vector.shape_cast %142 : vector<10x32xbf16> to vector<1x1x10x32xbf16>
    tpu.vector_store %arg4[%c0_84, %c8, %c0_85, %c0_86], %145 {strides = array<i32>} : memref<1x11x10x32xbf16, #tpu.memory_space<vmem>>, vector<1x1x10x32xbf16>,
    return
  }
  func.func @transform_0(%arg0: i32) -> (i32, i32, i32) {
    %c0_i32 = arith.constant 0 : i32
    %c0_i32_0 = arith.constant 0 : i32
    %c0_i32_1 = arith.constant 0 : i32
    return %arg0, %c0_i32, %c0_i32_0 : i32, i32, i32
  }
  func.func @transform_1(%arg0: i32) -> (i32, i32, i32) {
    %c0_i32 = arith.constant 0 : i32
    %c0_i32_0 = arith.constant 0 : i32
    %c0_i32_1 = arith.constant 0 : i32
    %c0_i32_2 = arith.constant 0 : i32
    return %c0_i32, %c0_i32_0, %c0_i32_1 : i32, i32, i32
  }
  func.func @transform_2(%arg0: i32) -> (i32, i32) {
    %c0_i32 = arith.constant 0 : i32
    %c0_i32_0 = arith.constant 0 : i32
    %c0_i32_1 = arith.constant 0 : i32
    return %c0_i32, %c0_i32_0 : i32, i32
  }
  func.func @transform_3(%arg0: i32) -> (i32, i32, i32, i32) {
    %c0_i32 = arith.constant 0 : i32
    %c0_i32_0 = arith.constant 0 : i32
    %c0_i32_1 = arith.constant 0 : i32
    %c0_i32_2 = arith.constant 0 : i32
    return %arg0, %c0_i32, %c0_i32_0, %c0_i32_1 : i32, i32, i32, i32
  }
}

module attributes {stable_mosaic.version = 11 : i64} {
  func.func @_conv_relu_pool_kernel(%arg0: i32, %arg1: memref<1x110x32xbf16, #tpu.memory_space<vmem>>, %arg2: memref<3x96x64xbf16, #tpu.memory_space<vmem>>, %arg3: memref<1x64xf32, #tpu.memory_space<vmem>>, %arg4: memref<1x7x6x64xbf16, #tpu.memory_space<vmem>>, %arg5: memref<80x64xf32, #tpu.memory_space<vmem>>) attributes {dimension_semantics = [#tpu.dimension_semantics<parallel>], iteration_bounds = array<i64: 2>, scalar_prefetch = 0 : i64, scratch_operands = 1 : i64, tpu.core_type = #tpu.core_type<tc>, window_params = [{transform_indices = @transform_0, window_bounds = array<i64: 1, 110, 32>}, {pipeline_mode = #tpu.pipeline_mode<synchronous>, transform_indices = @transform_1, window_bounds = array<i64: 3, 96, 64>}, {pipeline_mode = #tpu.pipeline_mode<synchronous>, transform_indices = @transform_2, window_bounds = array<i64: 1, 64>}, {transform_indices = @transform_3, window_bounds = array<i64: 1, 7, 6, 64>}]} {
    %c0 = arith.constant 0 : index
    %c0_0 = arith.constant 0 : index
    %0 = vector.load %arg3[%c0, %c0_0] : memref<1x64xf32, #tpu.memory_space<vmem>>, vector<1x64xf32>
    %cst = arith.constant 0.000000e+00 : f32
    %1 = vector.broadcast %cst : f32 to vector<1x64xf32>
    %cst_1 = arith.constant 0.000000e+00 : bf16
    %2 = vector.broadcast %cst_1 : bf16 to vector<6x64xbf16>
    %c0_2 = arith.constant 0 : index
    %c0_3 = arith.constant 0 : index
    %c0_4 = arith.constant 0 : index
    %c0_5 = arith.constant 0 : index
    %3 = vector.load %arg4[%c0_2, %c0_3, %c0_4, %c0_5] : memref<1x7x6x64xbf16, #tpu.memory_space<vmem>>, vector<1x1x6x64xbf16>
    %4 = vector.shape_cast %3 : vector<1x1x6x64xbf16> to vector<6x64xbf16>
    %5 = vector.shape_cast %2 : vector<6x64xbf16> to vector<1x1x6x64xbf16>
    tpu.vector_store %arg4[%c0_2, %c0_3, %c0_4, %c0_5], %5 {strides = array<i32>} : memref<1x7x6x64xbf16, #tpu.memory_space<vmem>>, vector<1x1x6x64xbf16>,
    %c0_6 = arith.constant 0 : index
    %c5 = arith.constant 5 : index
    %c0_7 = arith.constant 0 : index
    %c0_8 = arith.constant 0 : index
    %6 = vector.load %arg4[%c0_6, %c5, %c0_7, %c0_8] : memref<1x7x6x64xbf16, #tpu.memory_space<vmem>>, vector<1x1x6x64xbf16>
    %7 = vector.shape_cast %6 : vector<1x1x6x64xbf16> to vector<6x64xbf16>
    %8 = vector.shape_cast %2 : vector<6x64xbf16> to vector<1x1x6x64xbf16>
    tpu.vector_store %arg4[%c0_6, %c5, %c0_7, %c0_8], %8 {strides = array<i32>} : memref<1x7x6x64xbf16, #tpu.memory_space<vmem>>, vector<1x1x6x64xbf16>,
    %c0_9 = arith.constant 0 : index
    %c6 = arith.constant 6 : index
    %c0_10 = arith.constant 0 : index
    %c0_11 = arith.constant 0 : index
    %9 = vector.load %arg4[%c0_9, %c6, %c0_10, %c0_11] : memref<1x7x6x64xbf16, #tpu.memory_space<vmem>>, vector<1x1x6x64xbf16>
    %10 = vector.shape_cast %9 : vector<1x1x6x64xbf16> to vector<6x64xbf16>
    %11 = vector.shape_cast %2 : vector<6x64xbf16> to vector<1x1x6x64xbf16>
    tpu.vector_store %arg4[%c0_9, %c6, %c0_10, %c0_11], %11 {strides = array<i32>} : memref<1x7x6x64xbf16, #tpu.memory_space<vmem>>, vector<1x1x6x64xbf16>,
    %c0_12 = arith.constant 0 : index
    %c0_13 = arith.constant 0 : index
    %c0_14 = arith.constant 0 : index
    %12 = vector.load %arg1[%c0_12, %c0_13, %c0_14] : memref<1x110x32xbf16, #tpu.memory_space<vmem>>, vector<1x80x32xbf16>
    %13 = vector.shape_cast %12 : vector<1x80x32xbf16> to vector<80x32xbf16>
    %c0_15 = arith.constant 0 : index
    %c1 = arith.constant 1 : index
    %c0_16 = arith.constant 0 : index
    %14 = vector.load %arg1[%c0_15, %c1, %c0_16] : memref<1x110x32xbf16, #tpu.memory_space<vmem>>, vector<1x80x32xbf16>
    %15 = vector.shape_cast %14 : vector<1x80x32xbf16> to vector<80x32xbf16>
    %c0_17 = arith.constant 0 : index
    %c2 = arith.constant 2 : index
    %c0_18 = arith.constant 0 : index
    %16 = vector.load %arg1[%c0_17, %c2, %c0_18] : memref<1x110x32xbf16, #tpu.memory_space<vmem>>, vector<1x80x32xbf16>
    %17 = vector.shape_cast %16 : vector<1x80x32xbf16> to vector<80x32xbf16>
    %18 = tpu.concatenate %13, %15, %17 in 1 : vector<80x32xbf16>, vector<80x32xbf16>, vector<80x32xbf16> -> vector<80x96xbf16>
    %c0_19 = arith.constant 0 : index
    %c0_20 = arith.constant 0 : index
    %c0_21 = arith.constant 0 : index
    %19 = vector.load %arg2[%c0_19, %c0_20, %c0_21] : memref<3x96x64xbf16, #tpu.memory_space<vmem>>, vector<1x96x64xbf16>
    %20 = vector.shape_cast %19 : vector<1x96x64xbf16> to vector<96x64xbf16>
    %cst_22 = arith.constant dense<0.000000e+00> : vector<80x64xf32>
    %21 = tpu.matmul %18, %20, %cst_22 {dimension_numbers = #tpu.dot_dimension_numbers<[1], [0], [0], [1], [0, 0, 1, 1], [], []>} : vector<80x96xbf16>, vector<96x64xbf16>, vector<80x64xf32> -> vector<80x64xf32>
    %c0_23 = arith.constant 0 : index
    %c10 = arith.constant 10 : index
    %c0_24 = arith.constant 0 : index
    %22 = vector.load %arg1[%c0_23, %c10, %c0_24] : memref<1x110x32xbf16, #tpu.memory_space<vmem>>, vector<1x80x32xbf16>
    %23 = vector.shape_cast %22 : vector<1x80x32xbf16> to vector<80x32xbf16>
    %c0_25 = arith.constant 0 : index
    %c11 = arith.constant 11 : index
    %c0_26 = arith.constant 0 : index
    %24 = vector.load %arg1[%c0_25, %c11, %c0_26] : memref<1x110x32xbf16, #tpu.memory_space<vmem>>, vector<1x80x32xbf16>
    %25 = vector.shape_cast %24 : vector<1x80x32xbf16> to vector<80x32xbf16>
    %c0_27 = arith.constant 0 : index
    %c12 = arith.constant 12 : index
    %c0_28 = arith.constant 0 : index
    %26 = vector.load %arg1[%c0_27, %c12, %c0_28] : memref<1x110x32xbf16, #tpu.memory_space<vmem>>, vector<1x80x32xbf16>
    %27 = vector.shape_cast %26 : vector<1x80x32xbf16> to vector<80x32xbf16>
    %28 = tpu.concatenate %23, %25, %27 in 1 : vector<80x32xbf16>, vector<80x32xbf16>, vector<80x32xbf16> -> vector<80x96xbf16>
    %c1_29 = arith.constant 1 : index
    %c0_30 = arith.constant 0 : index
    %c0_31 = arith.constant 0 : index
    %29 = vector.load %arg2[%c1_29, %c0_30, %c0_31] : memref<3x96x64xbf16, #tpu.memory_space<vmem>>, vector<1x96x64xbf16>
    %30 = vector.shape_cast %29 : vector<1x96x64xbf16> to vector<96x64xbf16>
    %cst_32 = arith.constant dense<0.000000e+00> : vector<80x64xf32>
    %31 = tpu.matmul %28, %30, %cst_32 {dimension_numbers = #tpu.dot_dimension_numbers<[1], [0], [0], [1], [0, 0, 1, 1], [], []>} : vector<80x96xbf16>, vector<96x64xbf16>, vector<80x64xf32> -> vector<80x64xf32>
    %32 = arith.addf %21, %31 : vector<80x64xf32>
    %c0_33 = arith.constant 0 : index
    %c20 = arith.constant 20 : index
    %c0_34 = arith.constant 0 : index
    %33 = vector.load %arg1[%c0_33, %c20, %c0_34] : memref<1x110x32xbf16, #tpu.memory_space<vmem>>, vector<1x80x32xbf16>
    %34 = vector.shape_cast %33 : vector<1x80x32xbf16> to vector<80x32xbf16>
    %c0_35 = arith.constant 0 : index
    %c21 = arith.constant 21 : index
    %c0_36 = arith.constant 0 : index
    %35 = vector.load %arg1[%c0_35, %c21, %c0_36] : memref<1x110x32xbf16, #tpu.memory_space<vmem>>, vector<1x80x32xbf16>
    %36 = vector.shape_cast %35 : vector<1x80x32xbf16> to vector<80x32xbf16>
    %c0_37 = arith.constant 0 : index
    %c22 = arith.constant 22 : index
    %c0_38 = arith.constant 0 : index
    %37 = vector.load %arg1[%c0_37, %c22, %c0_38] : memref<1x110x32xbf16, #tpu.memory_space<vmem>>, vector<1x80x32xbf16>
    %38 = vector.shape_cast %37 : vector<1x80x32xbf16> to vector<80x32xbf16>
    %39 = tpu.concatenate %34, %36, %38 in 1 : vector<80x32xbf16>, vector<80x32xbf16>, vector<80x32xbf16> -> vector<80x96xbf16>
    %c2_39 = arith.constant 2 : index
    %c0_40 = arith.constant 0 : index
    %c0_41 = arith.constant 0 : index
    %40 = vector.load %arg2[%c2_39, %c0_40, %c0_41] : memref<3x96x64xbf16, #tpu.memory_space<vmem>>, vector<1x96x64xbf16>
    %41 = vector.shape_cast %40 : vector<1x96x64xbf16> to vector<96x64xbf16>
    %cst_42 = arith.constant dense<0.000000e+00> : vector<80x64xf32>
    %42 = tpu.matmul %39, %41, %cst_42 {dimension_numbers = #tpu.dot_dimension_numbers<[1], [0], [0], [1], [0, 0, 1, 1], [], []>} : vector<80x96xbf16>, vector<96x64xbf16>, vector<80x64xf32> -> vector<80x64xf32>
    %43 = arith.addf %32, %42 : vector<80x64xf32>
    %c0_43 = arith.constant 0 : index
    %c0_44 = arith.constant 0 : index
    %44 = vector.load %arg5[%c0_43, %c0_44] : memref<80x64xf32, #tpu.memory_space<vmem>>, vector<80x64xf32>
    tpu.vector_store %arg5[%c0_43, %c0_44], %43 {strides = array<i32>} : memref<80x64xf32, #tpu.memory_space<vmem>>, vector<80x64xf32>,
    %c0_45 = arith.constant 0 : index
    %c0_46 = arith.constant 0 : index
    %45 = tpu.strided_load %arg5[%c0_45, %c0_46] {strides = array<i32: 2, 1>} : memref<80x64xf32, #tpu.memory_space<vmem>>, vector<4x64xf32>
    %c1_47 = arith.constant 1 : index
    %c0_48 = arith.constant 0 : index
    %46 = tpu.strided_load %arg5[%c1_47, %c0_48] {strides = array<i32: 2, 1>} : memref<80x64xf32, #tpu.memory_space<vmem>>, vector<4x64xf32>
    %47 = arith.maximumf %45, %46 : vector<4x64xf32>
    %c10_49 = arith.constant 10 : index
    %c0_50 = arith.constant 0 : index
    %48 = tpu.strided_load %arg5[%c10_49, %c0_50] {strides = array<i32: 2, 1>} : memref<80x64xf32, #tpu.memory_space<vmem>>, vector<4x64xf32>
    %c11_51 = arith.constant 11 : index
    %c0_52 = arith.constant 0 : index
    %49 = tpu.strided_load %arg5[%c11_51, %c0_52] {strides = array<i32: 2, 1>} : memref<80x64xf32, #tpu.memory_space<vmem>>, vector<4x64xf32>
    %50 = arith.maximumf %48, %49 : vector<4x64xf32>
    %51 = arith.maximumf %47, %50 : vector<4x64xf32>
    %52 = vector.broadcast %0 : vector<1x64xf32> to vector<4x64xf32>
    %53 = arith.addf %51, %52 : vector<4x64xf32>
    %cst_53 = arith.constant 0.000000e+00 : f32
    %54 = vector.broadcast %cst_53 : f32 to vector<4x64xf32>
    %55 = arith.maximumf %53, %54 : vector<4x64xf32>
    %56 = tpu.concatenate %1, %55, %1 in 0 : vector<1x64xf32>, vector<4x64xf32>, vector<1x64xf32> -> vector<6x64xf32>
    %57 = arith.truncf %56 : vector<6x64xf32> to vector<6x64xbf16>
    %c0_54 = arith.constant 0 : index
    %c1_55 = arith.constant 1 : index
    %c0_56 = arith.constant 0 : index
    %c0_57 = arith.constant 0 : index
    %58 = vector.load %arg4[%c0_54, %c1_55, %c0_56, %c0_57] : memref<1x7x6x64xbf16, #tpu.memory_space<vmem>>, vector<1x1x6x64xbf16>
    %59 = vector.shape_cast %58 : vector<1x1x6x64xbf16> to vector<6x64xbf16>
    %60 = vector.shape_cast %57 : vector<6x64xbf16> to vector<1x1x6x64xbf16>
    tpu.vector_store %arg4[%c0_54, %c1_55, %c0_56, %c0_57], %60 {strides = array<i32>} : memref<1x7x6x64xbf16, #tpu.memory_space<vmem>>, vector<1x1x6x64xbf16>,
    %c20_58 = arith.constant 20 : index
    %c0_59 = arith.constant 0 : index
    %61 = tpu.strided_load %arg5[%c20_58, %c0_59] {strides = array<i32: 2, 1>} : memref<80x64xf32, #tpu.memory_space<vmem>>, vector<4x64xf32>
    %c21_60 = arith.constant 21 : index
    %c0_61 = arith.constant 0 : index
    %62 = tpu.strided_load %arg5[%c21_60, %c0_61] {strides = array<i32: 2, 1>} : memref<80x64xf32, #tpu.memory_space<vmem>>, vector<4x64xf32>
    %63 = arith.maximumf %61, %62 : vector<4x64xf32>
    %c30 = arith.constant 30 : index
    %c0_62 = arith.constant 0 : index
    %64 = tpu.strided_load %arg5[%c30, %c0_62] {strides = array<i32: 2, 1>} : memref<80x64xf32, #tpu.memory_space<vmem>>, vector<4x64xf32>
    %c31 = arith.constant 31 : index
    %c0_63 = arith.constant 0 : index
    %65 = tpu.strided_load %arg5[%c31, %c0_63] {strides = array<i32: 2, 1>} : memref<80x64xf32, #tpu.memory_space<vmem>>, vector<4x64xf32>
    %66 = arith.maximumf %64, %65 : vector<4x64xf32>
    %67 = arith.maximumf %63, %66 : vector<4x64xf32>
    %68 = vector.broadcast %0 : vector<1x64xf32> to vector<4x64xf32>
    %69 = arith.addf %67, %68 : vector<4x64xf32>
    %cst_64 = arith.constant 0.000000e+00 : f32
    %70 = vector.broadcast %cst_64 : f32 to vector<4x64xf32>
    %71 = arith.maximumf %69, %70 : vector<4x64xf32>
    %72 = tpu.concatenate %1, %71, %1 in 0 : vector<1x64xf32>, vector<4x64xf32>, vector<1x64xf32> -> vector<6x64xf32>
    %73 = arith.truncf %72 : vector<6x64xf32> to vector<6x64xbf16>
    %c0_65 = arith.constant 0 : index
    %c2_66 = arith.constant 2 : index
    %c0_67 = arith.constant 0 : index
    %c0_68 = arith.constant 0 : index
    %74 = vector.load %arg4[%c0_65, %c2_66, %c0_67, %c0_68] : memref<1x7x6x64xbf16, #tpu.memory_space<vmem>>, vector<1x1x6x64xbf16>
    %75 = vector.shape_cast %74 : vector<1x1x6x64xbf16> to vector<6x64xbf16>
    %76 = vector.shape_cast %73 : vector<6x64xbf16> to vector<1x1x6x64xbf16>
    tpu.vector_store %arg4[%c0_65, %c2_66, %c0_67, %c0_68], %76 {strides = array<i32>} : memref<1x7x6x64xbf16, #tpu.memory_space<vmem>>, vector<1x1x6x64xbf16>,
    %c40 = arith.constant 40 : index
    %c0_69 = arith.constant 0 : index
    %77 = tpu.strided_load %arg5[%c40, %c0_69] {strides = array<i32: 2, 1>} : memref<80x64xf32, #tpu.memory_space<vmem>>, vector<4x64xf32>
    %c41 = arith.constant 41 : index
    %c0_70 = arith.constant 0 : index
    %78 = tpu.strided_load %arg5[%c41, %c0_70] {strides = array<i32: 2, 1>} : memref<80x64xf32, #tpu.memory_space<vmem>>, vector<4x64xf32>
    %79 = arith.maximumf %77, %78 : vector<4x64xf32>
    %c50 = arith.constant 50 : index
    %c0_71 = arith.constant 0 : index
    %80 = tpu.strided_load %arg5[%c50, %c0_71] {strides = array<i32: 2, 1>} : memref<80x64xf32, #tpu.memory_space<vmem>>, vector<4x64xf32>
    %c51 = arith.constant 51 : index
    %c0_72 = arith.constant 0 : index
    %81 = tpu.strided_load %arg5[%c51, %c0_72] {strides = array<i32: 2, 1>} : memref<80x64xf32, #tpu.memory_space<vmem>>, vector<4x64xf32>
    %82 = arith.maximumf %80, %81 : vector<4x64xf32>
    %83 = arith.maximumf %79, %82 : vector<4x64xf32>
    %84 = vector.broadcast %0 : vector<1x64xf32> to vector<4x64xf32>
    %85 = arith.addf %83, %84 : vector<4x64xf32>
    %cst_73 = arith.constant 0.000000e+00 : f32
    %86 = vector.broadcast %cst_73 : f32 to vector<4x64xf32>
    %87 = arith.maximumf %85, %86 : vector<4x64xf32>
    %88 = tpu.concatenate %1, %87, %1 in 0 : vector<1x64xf32>, vector<4x64xf32>, vector<1x64xf32> -> vector<6x64xf32>
    %89 = arith.truncf %88 : vector<6x64xf32> to vector<6x64xbf16>
    %c0_74 = arith.constant 0 : index
    %c3 = arith.constant 3 : index
    %c0_75 = arith.constant 0 : index
    %c0_76 = arith.constant 0 : index
    %90 = vector.load %arg4[%c0_74, %c3, %c0_75, %c0_76] : memref<1x7x6x64xbf16, #tpu.memory_space<vmem>>, vector<1x1x6x64xbf16>
    %91 = vector.shape_cast %90 : vector<1x1x6x64xbf16> to vector<6x64xbf16>
    %92 = vector.shape_cast %89 : vector<6x64xbf16> to vector<1x1x6x64xbf16>
    tpu.vector_store %arg4[%c0_74, %c3, %c0_75, %c0_76], %92 {strides = array<i32>} : memref<1x7x6x64xbf16, #tpu.memory_space<vmem>>, vector<1x1x6x64xbf16>,
    %c60 = arith.constant 60 : index
    %c0_77 = arith.constant 0 : index
    %93 = tpu.strided_load %arg5[%c60, %c0_77] {strides = array<i32: 2, 1>} : memref<80x64xf32, #tpu.memory_space<vmem>>, vector<4x64xf32>
    %c61 = arith.constant 61 : index
    %c0_78 = arith.constant 0 : index
    %94 = tpu.strided_load %arg5[%c61, %c0_78] {strides = array<i32: 2, 1>} : memref<80x64xf32, #tpu.memory_space<vmem>>, vector<4x64xf32>
    %95 = arith.maximumf %93, %94 : vector<4x64xf32>
    %c70 = arith.constant 70 : index
    %c0_79 = arith.constant 0 : index
    %96 = tpu.strided_load %arg5[%c70, %c0_79] {strides = array<i32: 2, 1>} : memref<80x64xf32, #tpu.memory_space<vmem>>, vector<4x64xf32>
    %c71 = arith.constant 71 : index
    %c0_80 = arith.constant 0 : index
    %97 = tpu.strided_load %arg5[%c71, %c0_80] {strides = array<i32: 2, 1>} : memref<80x64xf32, #tpu.memory_space<vmem>>, vector<4x64xf32>
    %98 = arith.maximumf %96, %97 : vector<4x64xf32>
    %99 = arith.maximumf %95, %98 : vector<4x64xf32>
    %100 = vector.broadcast %0 : vector<1x64xf32> to vector<4x64xf32>
    %101 = arith.addf %99, %100 : vector<4x64xf32>
    %cst_81 = arith.constant 0.000000e+00 : f32
    %102 = vector.broadcast %cst_81 : f32 to vector<4x64xf32>
    %103 = arith.maximumf %101, %102 : vector<4x64xf32>
    %104 = tpu.concatenate %1, %103, %1 in 0 : vector<1x64xf32>, vector<4x64xf32>, vector<1x64xf32> -> vector<6x64xf32>
    %105 = arith.truncf %104 : vector<6x64xf32> to vector<6x64xbf16>
    %c0_82 = arith.constant 0 : index
    %c4 = arith.constant 4 : index
    %c0_83 = arith.constant 0 : index
    %c0_84 = arith.constant 0 : index
    %106 = vector.load %arg4[%c0_82, %c4, %c0_83, %c0_84] : memref<1x7x6x64xbf16, #tpu.memory_space<vmem>>, vector<1x1x6x64xbf16>
    %107 = vector.shape_cast %106 : vector<1x1x6x64xbf16> to vector<6x64xbf16>
    %108 = vector.shape_cast %105 : vector<6x64xbf16> to vector<1x1x6x64xbf16>
    tpu.vector_store %arg4[%c0_82, %c4, %c0_83, %c0_84], %108 {strides = array<i32>} : memref<1x7x6x64xbf16, #tpu.memory_space<vmem>>, vector<1x1x6x64xbf16>,
    return
  }
  func.func @transform_0(%arg0: i32) -> (i32, i32, i32) {
    %c0_i32 = arith.constant 0 : i32
    %c0_i32_0 = arith.constant 0 : i32
    %c0_i32_1 = arith.constant 0 : i32
    return %arg0, %c0_i32, %c0_i32_0 : i32, i32, i32
  }
  func.func @transform_1(%arg0: i32) -> (i32, i32, i32) {
    %c0_i32 = arith.constant 0 : i32
    %c0_i32_0 = arith.constant 0 : i32
    %c0_i32_1 = arith.constant 0 : i32
    %c0_i32_2 = arith.constant 0 : i32
    return %c0_i32, %c0_i32_0, %c0_i32_1 : i32, i32, i32
  }
  func.func @transform_2(%arg0: i32) -> (i32, i32) {
    %c0_i32 = arith.constant 0 : i32
    %c0_i32_0 = arith.constant 0 : i32
    %c0_i32_1 = arith.constant 0 : i32
    return %c0_i32, %c0_i32_0 : i32, i32
  }
  func.func @transform_3(%arg0: i32) -> (i32, i32, i32, i32) {
    %c0_i32 = arith.constant 0 : i32
    %c0_i32_0 = arith.constant 0 : i32
    %c0_i32_1 = arith.constant 0 : i32
    %c0_i32_2 = arith.constant 0 : i32
    return %arg0, %c0_i32, %c0_i32_0, %c0_i32_1 : i32, i32, i32, i32
  }
}

module attributes {stable_mosaic.version = 11 : i64} {
  func.func @_conv_relu_pool_head_kernel(%arg0: i32, %arg1: memref<1x42x64xbf16, #tpu.memory_space<vmem>>, %arg2: memref<3x192x128xbf16, #tpu.memory_space<vmem>>, %arg3: memref<1x128xf32, #tpu.memory_space<vmem>>, %arg4: memref<128x256xbf16, #tpu.memory_space<vmem>>, %arg5: memref<1x256xf32, #tpu.memory_space<vmem>>, %arg6: memref<256x128xbf16, #tpu.memory_space<vmem>>, %arg7: memref<1x128xf32, #tpu.memory_space<vmem>>, %arg8: memref<1x1x128xf32, #tpu.memory_space<vmem>>, %arg9: memref<24x128xf32, #tpu.memory_space<vmem>>) attributes {dimension_semantics = [#tpu.dimension_semantics<parallel>], iteration_bounds = array<i64: 2>, scalar_prefetch = 0 : i64, scratch_operands = 1 : i64, tpu.core_type = #tpu.core_type<tc>, window_params = [{transform_indices = @transform_0, window_bounds = array<i64: 1, 42, 64>}, {pipeline_mode = #tpu.pipeline_mode<synchronous>, transform_indices = @transform_1, window_bounds = array<i64: 3, 192, 128>}, {pipeline_mode = #tpu.pipeline_mode<synchronous>, transform_indices = @transform_2, window_bounds = array<i64: 1, 128>}, {pipeline_mode = #tpu.pipeline_mode<synchronous>, transform_indices = @transform_3, window_bounds = array<i64: 128, 256>}, {pipeline_mode = #tpu.pipeline_mode<synchronous>, transform_indices = @transform_4, window_bounds = array<i64: 1, 256>}, {pipeline_mode = #tpu.pipeline_mode<synchronous>, transform_indices = @transform_5, window_bounds = array<i64: 256, 128>}, {pipeline_mode = #tpu.pipeline_mode<synchronous>, transform_indices = @transform_6, window_bounds = array<i64: 1, 128>}, {transform_indices = @transform_7, window_bounds = array<i64: 1, 1, 128>}]} {
    %c0 = arith.constant 0 : index
    %c0_0 = arith.constant 0 : index
    %0 = vector.load %arg3[%c0, %c0_0] : memref<1x128xf32, #tpu.memory_space<vmem>>, vector<1x128xf32>
    %cst = arith.constant 0.000000e+00 : f32
    %1 = vector.broadcast %cst : f32 to vector<1x128xf32>
    %c0_1 = arith.constant 0 : index
    %c0_2 = arith.constant 0 : index
    %c0_3 = arith.constant 0 : index
    %2 = vector.load %arg1[%c0_1, %c0_2, %c0_3] : memref<1x42x64xbf16, #tpu.memory_space<vmem>>, vector<1x24x64xbf16>
    %3 = vector.shape_cast %2 : vector<1x24x64xbf16> to vector<24x64xbf16>
    %c0_4 = arith.constant 0 : index
    %c1 = arith.constant 1 : index
    %c0_5 = arith.constant 0 : index
    %4 = vector.load %arg1[%c0_4, %c1, %c0_5] : memref<1x42x64xbf16, #tpu.memory_space<vmem>>, vector<1x24x64xbf16>
    %5 = vector.shape_cast %4 : vector<1x24x64xbf16> to vector<24x64xbf16>
    %c0_6 = arith.constant 0 : index
    %c2 = arith.constant 2 : index
    %c0_7 = arith.constant 0 : index
    %6 = vector.load %arg1[%c0_6, %c2, %c0_7] : memref<1x42x64xbf16, #tpu.memory_space<vmem>>, vector<1x24x64xbf16>
    %7 = vector.shape_cast %6 : vector<1x24x64xbf16> to vector<24x64xbf16>
    %8 = tpu.concatenate %3, %5, %7 in 1 : vector<24x64xbf16>, vector<24x64xbf16>, vector<24x64xbf16> -> vector<24x192xbf16>
    %c0_8 = arith.constant 0 : index
    %c0_9 = arith.constant 0 : index
    %c0_10 = arith.constant 0 : index
    %9 = vector.load %arg2[%c0_8, %c0_9, %c0_10] : memref<3x192x128xbf16, #tpu.memory_space<vmem>>, vector<1x192x128xbf16>
    %10 = vector.shape_cast %9 : vector<1x192x128xbf16> to vector<192x128xbf16>
    %cst_11 = arith.constant dense<0.000000e+00> : vector<24x128xf32>
    %11 = tpu.matmul %8, %10, %cst_11 {dimension_numbers = #tpu.dot_dimension_numbers<[1], [0], [0], [1], [0, 0, 1, 1], [], []>} : vector<24x192xbf16>, vector<192x128xbf16>, vector<24x128xf32> -> vector<24x128xf32>
    %c0_12 = arith.constant 0 : index
    %c6 = arith.constant 6 : index
    %c0_13 = arith.constant 0 : index
    %12 = vector.load %arg1[%c0_12, %c6, %c0_13] : memref<1x42x64xbf16, #tpu.memory_space<vmem>>, vector<1x24x64xbf16>
    %13 = vector.shape_cast %12 : vector<1x24x64xbf16> to vector<24x64xbf16>
    %c0_14 = arith.constant 0 : index
    %c7 = arith.constant 7 : index
    %c0_15 = arith.constant 0 : index
    %14 = vector.load %arg1[%c0_14, %c7, %c0_15] : memref<1x42x64xbf16, #tpu.memory_space<vmem>>, vector<1x24x64xbf16>
    %15 = vector.shape_cast %14 : vector<1x24x64xbf16> to vector<24x64xbf16>
    %c0_16 = arith.constant 0 : index
    %c8 = arith.constant 8 : index
    %c0_17 = arith.constant 0 : index
    %16 = vector.load %arg1[%c0_16, %c8, %c0_17] : memref<1x42x64xbf16, #tpu.memory_space<vmem>>, vector<1x24x64xbf16>
    %17 = vector.shape_cast %16 : vector<1x24x64xbf16> to vector<24x64xbf16>
    %18 = tpu.concatenate %13, %15, %17 in 1 : vector<24x64xbf16>, vector<24x64xbf16>, vector<24x64xbf16> -> vector<24x192xbf16>
    %c1_18 = arith.constant 1 : index
    %c0_19 = arith.constant 0 : index
    %c0_20 = arith.constant 0 : index
    %19 = vector.load %arg2[%c1_18, %c0_19, %c0_20] : memref<3x192x128xbf16, #tpu.memory_space<vmem>>, vector<1x192x128xbf16>
    %20 = vector.shape_cast %19 : vector<1x192x128xbf16> to vector<192x128xbf16>
    %cst_21 = arith.constant dense<0.000000e+00> : vector<24x128xf32>
    %21 = tpu.matmul %18, %20, %cst_21 {dimension_numbers = #tpu.dot_dimension_numbers<[1], [0], [0], [1], [0, 0, 1, 1], [], []>} : vector<24x192xbf16>, vector<192x128xbf16>, vector<24x128xf32> -> vector<24x128xf32>
    %22 = arith.addf %11, %21 : vector<24x128xf32>
    %c0_22 = arith.constant 0 : index
    %c12 = arith.constant 12 : index
    %c0_23 = arith.constant 0 : index
    %23 = vector.load %arg1[%c0_22, %c12, %c0_23] : memref<1x42x64xbf16, #tpu.memory_space<vmem>>, vector<1x24x64xbf16>
    %24 = vector.shape_cast %23 : vector<1x24x64xbf16> to vector<24x64xbf16>
    %c0_24 = arith.constant 0 : index
    %c13 = arith.constant 13 : index
    %c0_25 = arith.constant 0 : index
    %25 = vector.load %arg1[%c0_24, %c13, %c0_25] : memref<1x42x64xbf16, #tpu.memory_space<vmem>>, vector<1x24x64xbf16>
    %26 = vector.shape_cast %25 : vector<1x24x64xbf16> to vector<24x64xbf16>
    %c0_26 = arith.constant 0 : index
    %c14 = arith.constant 14 : index
    %c0_27 = arith.constant 0 : index
    %27 = vector.load %arg1[%c0_26, %c14, %c0_27] : memref<1x42x64xbf16, #tpu.memory_space<vmem>>, vector<1x24x64xbf16>
    %28 = vector.shape_cast %27 : vector<1x24x64xbf16> to vector<24x64xbf16>
    %29 = tpu.concatenate %24, %26, %28 in 1 : vector<24x64xbf16>, vector<24x64xbf16>, vector<24x64xbf16> -> vector<24x192xbf16>
    %c2_28 = arith.constant 2 : index
    %c0_29 = arith.constant 0 : index
    %c0_30 = arith.constant 0 : index
    %30 = vector.load %arg2[%c2_28, %c0_29, %c0_30] : memref<3x192x128xbf16, #tpu.memory_space<vmem>>, vector<1x192x128xbf16>
    %31 = vector.shape_cast %30 : vector<1x192x128xbf16> to vector<192x128xbf16>
    %cst_31 = arith.constant dense<0.000000e+00> : vector<24x128xf32>
    %32 = tpu.matmul %29, %31, %cst_31 {dimension_numbers = #tpu.dot_dimension_numbers<[1], [0], [0], [1], [0, 0, 1, 1], [], []>} : vector<24x192xbf16>, vector<192x128xbf16>, vector<24x128xf32> -> vector<24x128xf32>
    %33 = arith.addf %22, %32 : vector<24x128xf32>
    %c0_32 = arith.constant 0 : index
    %c0_33 = arith.constant 0 : index
    %34 = vector.load %arg9[%c0_32, %c0_33] : memref<24x128xf32, #tpu.memory_space<vmem>>, vector<24x128xf32>
    tpu.vector_store %arg9[%c0_32, %c0_33], %33 {strides = array<i32>} : memref<24x128xf32, #tpu.memory_space<vmem>>, vector<24x128xf32>,
    %c0_34 = arith.constant 0 : index
    %c0_35 = arith.constant 0 : index
    %35 = tpu.strided_load %arg9[%c0_34, %c0_35] {strides = array<i32: 2, 1>} : memref<24x128xf32, #tpu.memory_space<vmem>>, vector<2x128xf32>
    %c1_36 = arith.constant 1 : index
    %c0_37 = arith.constant 0 : index
    %36 = tpu.strided_load %arg9[%c1_36, %c0_37] {strides = array<i32: 2, 1>} : memref<24x128xf32, #tpu.memory_space<vmem>>, vector<2x128xf32>
    %37 = arith.maximumf %35, %36 : vector<2x128xf32>
    %c6_38 = arith.constant 6 : index
    %c0_39 = arith.constant 0 : index
    %38 = tpu.strided_load %arg9[%c6_38, %c0_39] {strides = array<i32: 2, 1>} : memref<24x128xf32, #tpu.memory_space<vmem>>, vector<2x128xf32>
    %c7_40 = arith.constant 7 : index
    %c0_41 = arith.constant 0 : index
    %39 = tpu.strided_load %arg9[%c7_40, %c0_41] {strides = array<i32: 2, 1>} : memref<24x128xf32, #tpu.memory_space<vmem>>, vector<2x128xf32>
    %40 = arith.maximumf %38, %39 : vector<2x128xf32>
    %41 = arith.maximumf %37, %40 : vector<2x128xf32>
    %42 = vector.broadcast %0 : vector<1x128xf32> to vector<2x128xf32>
    %43 = arith.addf %41, %42 : vector<2x128xf32>
    %cst_42 = arith.constant 0.000000e+00 : f32
    %44 = vector.broadcast %cst_42 : f32 to vector<2x128xf32>
    %45 = arith.maximumf %43, %44 : vector<2x128xf32>
    %cst_43 = arith.constant dense<0.000000e+00> : vector<128xf32>
    %46 = vector.multi_reduction <add>, %45, %cst_43 [0] : vector<2x128xf32> to vector<128xf32>
    %47 = vector.shape_cast %46 : vector<128xf32> to vector<1x128xf32>
    %48 = arith.addf %1, %47 : vector<1x128xf32>
    %c12_44 = arith.constant 12 : index
    %c0_45 = arith.constant 0 : index
    %49 = tpu.strided_load %arg9[%c12_44, %c0_45] {strides = array<i32: 2, 1>} : memref<24x128xf32, #tpu.memory_space<vmem>>, vector<2x128xf32>
    %c13_46 = arith.constant 13 : index
    %c0_47 = arith.constant 0 : index
    %50 = tpu.strided_load %arg9[%c13_46, %c0_47] {strides = array<i32: 2, 1>} : memref<24x128xf32, #tpu.memory_space<vmem>>, vector<2x128xf32>
    %51 = arith.maximumf %49, %50 : vector<2x128xf32>
    %c18 = arith.constant 18 : index
    %c0_48 = arith.constant 0 : index
    %52 = tpu.strided_load %arg9[%c18, %c0_48] {strides = array<i32: 2, 1>} : memref<24x128xf32, #tpu.memory_space<vmem>>, vector<2x128xf32>
    %c19 = arith.constant 19 : index
    %c0_49 = arith.constant 0 : index
    %53 = tpu.strided_load %arg9[%c19, %c0_49] {strides = array<i32: 2, 1>} : memref<24x128xf32, #tpu.memory_space<vmem>>, vector<2x128xf32>
    %54 = arith.maximumf %52, %53 : vector<2x128xf32>
    %55 = arith.maximumf %51, %54 : vector<2x128xf32>
    %56 = vector.broadcast %0 : vector<1x128xf32> to vector<2x128xf32>
    %57 = arith.addf %55, %56 : vector<2x128xf32>
    %cst_50 = arith.constant 0.000000e+00 : f32
    %58 = vector.broadcast %cst_50 : f32 to vector<2x128xf32>
    %59 = arith.maximumf %57, %58 : vector<2x128xf32>
    %cst_51 = arith.constant dense<0.000000e+00> : vector<128xf32>
    %60 = vector.multi_reduction <add>, %59, %cst_51 [0] : vector<2x128xf32> to vector<128xf32>
    %61 = vector.shape_cast %60 : vector<128xf32> to vector<1x128xf32>
    %62 = arith.addf %48, %61 : vector<1x128xf32>
    %cst_52 = arith.constant 2.500000e-01 : f32
    %63 = vector.broadcast %cst_52 : f32 to vector<1x128xf32>
    %64 = arith.mulf %62, %63 : vector<1x128xf32>
    %65 = arith.truncf %64 : vector<1x128xf32> to vector<1x128xbf16>
    %c0_53 = arith.constant 0 : index
    %c0_54 = arith.constant 0 : index
    %66 = vector.load %arg4[%c0_53, %c0_54] : memref<128x256xbf16, #tpu.memory_space<vmem>>, vector<128x256xbf16>
    %cst_55 = arith.constant dense<0.000000e+00> : vector<1x256xf32>
    %67 = tpu.matmul %65, %66, %cst_55 {dimension_numbers = #tpu.dot_dimension_numbers<[1], [0], [0], [1], [0, 0, 1, 1], [], []>} : vector<1x128xbf16>, vector<128x256xbf16>, vector<1x256xf32> -> vector<1x256xf32>
    %c0_56 = arith.constant 0 : index
    %c0_57 = arith.constant 0 : index
    %68 = vector.load %arg5[%c0_56, %c0_57] : memref<1x256xf32, #tpu.memory_space<vmem>>, vector<1x256xf32>
    %69 = arith.addf %67, %68 : vector<1x256xf32>
    %cst_58 = arith.constant 0.000000e+00 : f32
    %70 = vector.broadcast %cst_58 : f32 to vector<1x256xf32>
    %71 = arith.maximumf %69, %70 : vector<1x256xf32>
    %72 = arith.truncf %71 : vector<1x256xf32> to vector<1x256xbf16>
    %c0_59 = arith.constant 0 : index
    %c0_60 = arith.constant 0 : index
    %73 = vector.load %arg6[%c0_59, %c0_60] : memref<256x128xbf16, #tpu.memory_space<vmem>>, vector<256x128xbf16>
    %cst_61 = arith.constant dense<0.000000e+00> : vector<1x128xf32>
    %74 = tpu.matmul %72, %73, %cst_61 {dimension_numbers = #tpu.dot_dimension_numbers<[1], [0], [0], [1], [0, 0, 1, 1], [], []>} : vector<1x256xbf16>, vector<256x128xbf16>, vector<1x128xf32> -> vector<1x128xf32>
    %c0_62 = arith.constant 0 : index
    %c0_63 = arith.constant 0 : index
    %75 = vector.load %arg7[%c0_62, %c0_63] : memref<1x128xf32, #tpu.memory_space<vmem>>, vector<1x128xf32>
    %76 = arith.addf %74, %75 : vector<1x128xf32>
    %c0_64 = arith.constant 0 : index
    %c0_65 = arith.constant 0 : index
    %c0_66 = arith.constant 0 : index
    %77 = vector.load %arg8[%c0_64, %c0_65, %c0_66] : memref<1x1x128xf32, #tpu.memory_space<vmem>>, vector<1x1x128xf32>
    %78 = vector.shape_cast %77 : vector<1x1x128xf32> to vector<1x128xf32>
    %79 = vector.shape_cast %76 : vector<1x128xf32> to vector<1x1x128xf32>
    tpu.vector_store %arg8[%c0_64, %c0_65, %c0_66], %79 {strides = array<i32>} : memref<1x1x128xf32, #tpu.memory_space<vmem>>, vector<1x1x128xf32>,
    return
  }
  func.func @transform_0(%arg0: i32) -> (i32, i32, i32) {
    %c0_i32 = arith.constant 0 : i32
    %c0_i32_0 = arith.constant 0 : i32
    %c0_i32_1 = arith.constant 0 : i32
    return %arg0, %c0_i32, %c0_i32_0 : i32, i32, i32
  }
  func.func @transform_1(%arg0: i32) -> (i32, i32, i32) {
    %c0_i32 = arith.constant 0 : i32
    %c0_i32_0 = arith.constant 0 : i32
    %c0_i32_1 = arith.constant 0 : i32
    %c0_i32_2 = arith.constant 0 : i32
    return %c0_i32, %c0_i32_0, %c0_i32_1 : i32, i32, i32
  }
  func.func @transform_2(%arg0: i32) -> (i32, i32) {
    %c0_i32 = arith.constant 0 : i32
    %c0_i32_0 = arith.constant 0 : i32
    %c0_i32_1 = arith.constant 0 : i32
    return %c0_i32, %c0_i32_0 : i32, i32
  }
  func.func @transform_3(%arg0: i32) -> (i32, i32) {
    %c0_i32 = arith.constant 0 : i32
    %c0_i32_0 = arith.constant 0 : i32
    %c0_i32_1 = arith.constant 0 : i32
    return %c0_i32, %c0_i32_0 : i32, i32
  }
  func.func @transform_4(%arg0: i32) -> (i32, i32) {
    %c0_i32 = arith.constant 0 : i32
    %c0_i32_0 = arith.constant 0 : i32
    %c0_i32_1 = arith.constant 0 : i32
    return %c0_i32, %c0_i32_0 : i32, i32
  }
  func.func @transform_5(%arg0: i32) -> (i32, i32) {
    %c0_i32 = arith.constant 0 : i32
    %c0_i32_0 = arith.constant 0 : i32
    %c0_i32_1 = arith.constant 0 : i32
    return %c0_i32, %c0_i32_0 : i32, i32
  }
  func.func @transform_6(%arg0: i32) -> (i32, i32) {
    %c0_i32 = arith.constant 0 : i32
    %c0_i32_0 = arith.constant 0 : i32
    %c0_i32_1 = arith.constant 0 : i32
    return %c0_i32, %c0_i32_0 : i32, i32
  }
  func.func @transform_7(%arg0: i32) -> (i32, i32, i32) {
    %c0_i32 = arith.constant 0 : i32
    %c0_i32_0 = arith.constant 0 : i32
    %c0_i32_1 = arith.constant 0 : i32
    return %arg0, %c0_i32, %c0_i32_0 : i32, i32, i32
  }
}

</mosaic_0001>

<llo_original>
// kernel: cnn_forward.3
$region0: #{cnn_forward.3}
  #allocation0 [shape = 'u32[]', space=smem, size = 0x4, offset = 0x4, fixed_abs, tag = 'smem constant byte address 0x4 - core index']
  #allocation1 [shape = 'u32[144,128]{1,0:T(1,128)}', space=vmem, size = 0x12000, scoped, tag = 'internal scratch']
  #allocation2 [shape = 'f32[256,32]{1,0:T(8,128)}', space=vmem, size = 0x20000, scoped, tag = 'scratch operand']
  %s0 = inlined_call_operand.vmem [shape: bf16[2,256,32], index: 0, kind: input, shape index: {}]
  %s1 = inlined_call_operand.vmem [shape: bf16[1,32,32], index: 1, kind: input, shape index: {}]
  %s2 = inlined_call_operand.vmem [shape: f32[1,32], index: 2, kind: input, shape index: {}]
  %s3 = inlined_call_operand.vmem [shape: bf16[2,11,10,32], index: 3, kind: output, shape index: {}]
  %s4 = sld [smem:[#allocation0]]
  $region45: #{cnn_forward.3} parent=0
    _
  %s6 = ssub.s32 1, %s4
  %s7 = scalar_select 0, %s6, %s4
  loop: start=0, step=1, limit=4
  $region2: #{cnn_forward.3} parent=0 // loop_pre_header
    _
  $region3: #{cnn_forward.3} parent=0 // loop_header
    %s9 = sphi 0, %s13
    %p10 = scmp.ge.s32.totalorder %s9, 4
    %s19 = sphi 0, %s21
    %s22 = sphi 0, %s19
    %s23 = sphi 0, %s22
    %s39 = sphi 0, %s23
    %s43 = sphi 0, %s43
    %s45 = sphi 0, %s43
    %s46 = sphi 0, %s45
    %s60 = sphi 0, %s46
    %s64 = sphi 0, %s64
    %s66 = sphi 0, %s64
    %s67 = sphi 0, %s66
    %s81 = sphi 0, %s67
    %s87 = sphi 0, %s89
    %s90 = sphi 0, %s87
    %s91 = sphi 0, %s90
    %s107 = sphi 0, %s91
  $region4: #{cnn_forward.3} parent=0 // loop_header_branch
    %12 = sbr.rel (%p10) target = $region8
  $region5: #{cnn_forward.3} parent=0 // loop_body
    %s14 = ssub.s32 %s9, 1
    %s15 = ssub.s32 %s9, 2
    %s16 = sadd.s32 %s9, 1
    %s17 = ssub.s32 %s9, %s16
    %p18 = scmp.eq.s32.totalorder %s17, 0
    %s20 = sadd.s32 %s19, 1
    %s21 = scalar_select %p18, %s19, %s20
    %p24 = pneg %p18
    %p25 = scmp.eq.s32.totalorder %s9, 1
    %p26 = por %p24, %p25
    %p27 = scmp.ne.s32.totalorder %s19, %s22
    %p28 = scmp.eq.s32.totalorder %s9, 0
    %p29 = por %p27, %p28
    %p30 = scmp.ne.s32.totalorder %s19, %s22
    %p31 = scmp.eq.s32.totalorder %s14, 1
    %p32 = por %p30, %p31
    %p33 = scmp.ne.s32.totalorder %s22, %s23
    %p34 = scmp.eq.s32.totalorder %s14, 0
    %p35 = por %p33, %p34
    %p36 = scmp.ne.s32.totalorder %s22, %s23
    %p37 = scmp.eq.s32.totalorder %s15, 1
    %p38 = por %p36, %p37
    %p40 = scmp.ne.s32.totalorder %s23, %s39
    %p41 = scmp.eq.s32.totalorder %s15, 0
    %p42 = por %p40, %p41
    %s44 = sadd.s32 %s43, 1
    %p47 = scmp.eq.s32.totalorder %s9, 1
    %p48 = scmp.ne.s32.totalorder %s43, %s45
    %p49 = scmp.eq.s32.totalorder %s9, 0
    %p50 = por %p48, %p49
    %p51 = scmp.ne.s32.totalorder %s43, %s45
    %p52 = scmp.eq.s32.totalorder %s14, 1
    %p53 = por %p51, %p52
    %p54 = scmp.ne.s32.totalorder %s45, %s46
    %p55 = scmp.eq.s32.totalorder %s14, 0
    %p56 = por %p54, %p55
    %p57 = scmp.ne.s32.totalorder %s45, %s46
    %p58 = scmp.eq.s32.totalorder %s15, 1
    %p59 = por %p57, %p58
    %p61 = scmp.ne.s32.totalorder %s46, %s60
    %p62 = scmp.eq.s32.totalorder %s15, 0
    %p63 = por %p61, %p62
    %s65 = sadd.s32 %s64, 1
    %p68 = scmp.eq.s32.totalorder %s9, 1
    %p69 = scmp.ne.s32.totalorder %s64, %s66
    %p70 = scmp.eq.s32.totalorder %s9, 0
    %p71 = por %p69, %p70
    %p72 = scmp.ne.s32.totalorder %s64, %s66
    %p73 = scmp.eq.s32.totalorder %s14, 1
    %p74 = por %p72, %p73
    %p75 = scmp.ne.s32.totalorder %s66, %s67
    %p76 = scmp.eq.s32.totalorder %s14, 0
    %p77 = por %p75, %p76
    %p78 = scmp.ne.s32.totalorder %s66, %s67
    %p79 = scmp.eq.s32.totalorder %s15, 1
    %p80 = por %p78, %p79
    %p82 = scmp.ne.s32.totalorder %s67, %s81
    %p83 = scmp.eq.s32.totalorder %s15, 0
    %p84 = por %p82, %p83
    %s85 = ssub.s32 %s9, %s16
    %p86 = scmp.eq.s32.totalorder %s85, 0
    %s88 = sadd.s32 %s87, 1
    %s89 = scalar_select %p86, %s87, %s88
    %p92 = pneg %p86
    %p93 = scmp.eq.s32.totalorder %s9, 1
    %p94 = por %p92, %p93
    %p95 = scmp.ne.s32.totalorder %s87, %s90
    %p96 = scmp.eq.s32.totalorder %s9, 0
    %p97 = por %p95, %p96
    %p98 = scmp.ne.s32.totalorder %s87, %s90
    %p99 = scmp.eq.s32.totalorder %s14, 1
    %p100 = por %p98, %p99
    %p101 = scmp.ne.s32.totalorder %s90, %s91
    %p102 = scmp.eq.s32.totalorder %s14, 0
    %p103 = por %p101, %p102
    %p104 = scmp.ne.s32.totalorder %s90, %s91
    %p105 = scmp.eq.s32.totalorder %s15, 1
    %p106 = por %p104, %p105
    %p108 = scmp.ne.s32.totalorder %s91, %s107
    %p109 = scmp.eq.s32.totalorder %s15, 0
    %p110 = por %p108, %p109
    %p111 = scmp.le.s32.totalorder 1, %s9
    %p112 = scmp.lt.s32.totalorder %s9, 3
    %p113 = pnand %p111, %p112
    %p114 = pneg %p113
    // Predicated region
    $region9: #{cnn_forward.3} parent=5 // pred_check
      _
    $region10: #{cnn_forward.3} parent=5 // pred_check_branch
      %116 = sbr.rel (%p113) target = $region12
    $region11: #{cnn_forward.3} parent=5 // pred_region
      %s117 = ssub.s32 %s9, 1
      // Predicated region
      $region13: #{cnn_forward.3} parent=11 // pred_check
        %p118 = pneg %p56
      $region14: #{cnn_forward.3} parent=11 // pred_check_branch
        %120 = sbr.rel (%p118) target = $region16
      $region15: #{cnn_forward.3} parent=11 // pred_region
        _
      $region16: #{cnn_forward.3} parent=11 // pred_fallthru
        _
      // Predicated region
      $region17: #{cnn_forward.3} parent=11 // pred_check
        %p121 = pneg %p77
      $region18: #{cnn_forward.3} parent=11 // pred_check_branch
        %123 = sbr.rel (%p121) target = $region20
      $region19: #{cnn_forward.3} parent=11 // pred_region
        _
      $region20: #{cnn_forward.3} parent=11 // pred_fallthru
        _
    $region12: #{cnn_forward.3} parent=5 // pred_fallthru
      _
    %p124 = scmp.lt.s32.totalorder %s9, 2
    // Predicated region
    $region21: #{cnn_forward.3} parent=5 // pred_check
      %p125 = pneg %p124
    $region22: #{cnn_forward.3} parent=5 // pred_check_branch
      %127 = sbr.rel (%p125) target = $region24
    $region23: #{cnn_forward.3} parent=5 // pred_region
      // Predicated region
      $region25: #{cnn_forward.3} parent=23 // pred_check
        %p128 = pneg %p29
      $region26: #{cnn_forward.3} parent=23 // pred_check_branch
        %130 = sbr.rel (%p128) target = $region28
      $region27: #{cnn_forward.3} parent=23 // pred_region
        %p131 = scmp.lt.s32.totalorder %s9, 1
        %s132 = scalar_select %p131, %s9, 1
        %s133 = smul.addr %s132, 32
        %s134 = smul.addr %s133, 4
        %s135 = scalar_lea.vmem %s0, %s134
      $region28: #{cnn_forward.3} parent=23 // pred_fallthru
        _
    $region24: #{cnn_forward.3} parent=5 // pred_fallthru
      _
    %p136 = scmp.le.s32.totalorder 1, %s9
    %p137 = scmp.lt.s32.totalorder %s9, 3
    %p138 = pnand %p136, %p137
    %p139 = pneg %p138
    // Predicated region
    $region29: #{cnn_forward.3} parent=5 // pred_check
      _
    $region30: #{cnn_forward.3} parent=5 // pred_check_branch
      %141 = sbr.rel (%p138) target = $region32
    $region31: #{cnn_forward.3} parent=5 // pred_region
      %s142 = ssub.s32 %s9, 1
      %p143 = scmp.lt.s32.totalorder %s14, 1
      %s144 = scalar_select %p143, %s14, 1
      %s145 = smul.addr %s144, 32
      %s146 = smul.addr %s145, 4
      %s147 = scalar_lea.vmem %s0, %s146
      %p148 = pneg %p35
      %p149 = pneg %p32
      %p150 = pneg %p56
      %p151 = pneg %p53
      %p152 = pneg %p77
      %p153 = pneg %p74
      %p154 = pneg %p103
      %p155 = pneg %p100
      %p156 = scmp.lt.s32.totalorder %s14, 1
      %s157 = scalar_select %p156, %s14, 1
      %s158 = smul.addr %s157, 22
      %s159 = smul.addr %s158, 4
      %s160 = scalar_lea.vmem %s3, %s159
      %p161 = scmp.lt.s32.totalorder %s14, 1
      %s162 = scalar_select %p161, %s14, 1
      %s163 = smul.addr %s162, 32
      %s164 = smul.addr %s163, 4
      %s165 = scalar_lea.vmem %s0, %s164
      %p166 = scmp.lt.s32.totalorder %s14, 1
      %s167 = scalar_select %p166, %s14, 1
      %s168 = smul.addr %s167, 22
      %s169 = smul.addr %s168, 4
      %s170 = scalar_lea.vmem %s3, %s169
      %v172 = vld [vmem:[%s2] sm:$0x1]
      %vm173 = vcmask 257024
      %174 = vst.msk [vmem:[%s170] sm:$0xf] %vm173, 0
      %vm175 = vcmask 253952
      %176 = vst.msk [vmem:[%s170 + $0x4] sm:$0x1] %vm175, 0
      %s177 = scalar_lea.vmem %s170, 72
      %178 = vst.msk [vmem:[%s177] sm:$0xf] %vm173, 0
      %179 = vst.msk [vmem:[%s177 + $0x4] sm:$0x1] %vm175, 0
      %s180 = scalar_lea.vmem %s170, 80
      %181 = vst.msk [vmem:[%s180] sm:$0xf] %vm173, 0
      %182 = vst.msk [vmem:[%s180 + $0x4] sm:$0x1] %vm175, 0
      %v183 = vld [vmem:[%s165] sm:$0xf]
      %v184 = vld [vmem:[%s165 + $0x4] sm:$0xf]
      %v185 = vld [vmem:[%s165 + $0x8] sm:$0xf]
      %v186 = vld [vmem:[%s165 + $0xc] sm:$0xf]
      %v187 = vld [vmem:[%s165 + $0x10] sm:$0xf]
      %v188 = vld [vmem:[%s165 + $0x14] sm:$0xf]
      %v189 = vld [vmem:[%s165 + $0x18] sm:$0xf]
      %v190 = vld [vmem:[%s165 + $0x1c] sm:$0xf]
      %v191 = vld [vmem:[%s165 + $0x20] sm:$0xf]
      %v192 = vld [vmem:[%s165 + $0x24] sm:$0xf]
      %v193 = vld [vmem:[%s165 + $0x28] sm:$0xf]
      %v194 = vld [vmem:[%s165 + $0x2c] sm:$0xf]
      %v195 = vld [vmem:[%s165 + $0x30] sm:$0xf]
      %v196 = vld [vmem:[%s165 + $0x34] sm:$0xf]
      %v197 = vld [vmem:[%s165 + $0x38] sm:$0xf]
      %v198 = vld [vmem:[%s165 + $0x3c] sm:$0xf]
      %v199 = vld [vmem:[%s165 + $0x40] sm:$0xf]
      %v200 = vld [vmem:[%s165 + $0x44] sm:$0xf]
      %v201 = vld [vmem:[%s165 + $0x48] sm:$0xf]
      %v202 = vld [vmem:[%s165 + $0x4c] sm:$0xf]
      %v203 = vld [vmem:[%s165 + $0x50] sm:$0xf]
      %v204 = vld [vmem:[%s165 + $0x54] sm:$0xf]
      %v205 = vld [vmem:[%s165 + $0x58] sm:$0xf]
      %v206 = vld [vmem:[%s165 + $0x5c] sm:$0xf]
      %v207 = vld [vmem:[%s165 + $0x60] sm:$0xf]
      %v208 = vld [vmem:[%s165 + $0x64] sm:$0xf]
      %v209 = vld [vmem:[%s165 + $0x68] sm:$0xf]
      %v210 = vld [vmem:[%s165 + $0x6c] sm:$0xf]
      %v211 = vld [vmem:[%s165 + $0x70] sm:$0xf]
      %v212 = vld [vmem:[%s165 + $0x74] sm:$0xf]
      %v213 = vld [vmem:[%s165 + $0x78] sm:$0xf]
      %v214 = vld [vmem:[%s165 + $0x7c] sm:$0xf]
      %v215 = vld [vmem:[%s1] sm:$0xf]
      %v216 = vld [vmem:[%s1 + $0x4] sm:$0xf]
      %v217 = vld [vmem:[%s1 + $0x8] sm:$0xf]
      %v218 = vld [vmem:[%s1 + $0xc] sm:$0xf]
      %v251 = vunpack.c.l.b16 %v183
      %v252 = vunpack.c.l.b16 %v184
      %v253 = vunpack.c.l.b16 %v185
      %v254 = vunpack.c.l.b16 %v186
      %v255 = vunpack.c.l.b16 %v187
      %v256 = vunpack.c.l.b16 %v188
      %v257 = vunpack.c.l.b16 %v189
      %v258 = vunpack.c.l.b16 %v190
      %v259 = vunpack.c.l.b16 %v191
      %v260 = vunpack.c.l.b16 %v192
      %v261 = vunpack.c.l.b16 %v193
      %v262 = vunpack.c.l.b16 %v194
      %v263 = vunpack.c.l.b16 %v195
      %v264 = vunpack.c.l.b16 %v196
      %v265 = vunpack.c.l.b16 %v197
      %v266 = vunpack.c.l.b16 %v198
      %v267 = vunpack.c.l.b16 %v199
      %v268 = vunpack.c.l.b16 %v200
      %v269 = vunpack.c.l.b16 %v201
      %v270 = vunpack.c.l.b16 %v202
      %v271 = vunpack.c.l.b16 %v203
      %v272 = vunpack.c.l.b16 %v204
      %v273 = vunpack.c.l.b16 %v205
      %v274 = vunpack.c.l.b16 %v206
      %v275 = vunpack.c.l.b16 %v207
      %v276 = vunpack.c.l.b16 %v208
      %v277 = vunpack.c.l.b16 %v209
      %v278 = vunpack.c.l.b16 %v210
      %v279 = vunpack.c.l.b16 %v211
      %v280 = vunpack.c.l.b16 %v212
      %v281 = vunpack.c.l.b16 %v213
      %v282 = vunpack.c.l.b16 %v214
      %v283 = vpack.c.b16 %v252, %v251
      %v284 = vpack.c.b16 %v254, %v253
      %v285 = vpack.c.b16 %v256, %v255
      %v286 = vpack.c.b16 %v258, %v257
      %v287 = vpack.c.b16 %v260, %v259
      %v288 = vpack.c.b16 %v262, %v261
      %v289 = vpack.c.b16 %v264, %v263
      %v290 = vpack.c.b16 %v266, %v265
      %v291 = vpack.c.b16 %v268, %v267
      %v292 = vpack.c.b16 %v270, %v269
      %v293 = vpack.c.b16 %v272, %v271
      %v294 = vpack.c.b16 %v274, %v273
      %v295 = vpack.c.b16 %v276, %v275
      %v296 = vpack.c.b16 %v278, %v277
      %v297 = vpack.c.b16 %v280, %v279
      %v298 = vpack.c.b16 %v282, %v281
      %v303 = vunpack.c.l.b16 %v215
      %v304 = vunpack.c.l.b16 %v216
      %v305 = vunpack.c.l.b16 %v217
      %v306 = vunpack.c.l.b16 %v218
      %v307 = vpack.c.b16 %v304, %v303
      %v308 = vpack.c.b16 %v306, %v305
      %vm311 = vcmask 261120
      %v313 = vsel %vm311, %v283, 0
      %v316 = vsel %vm311, %v284, 0
      %v319 = vsel %vm311, %v285, 0
      %v322 = vsel %vm311, %v286, 0
      %v325 = vsel %vm311, %v287, 0
      %v328 = vsel %vm311, %v288, 0
      %v331 = vsel %vm311, %v289, 0
      %v334 = vsel %vm311, %v290, 0
      %v337 = vsel %vm311, %v291, 0
      %v340 = vsel %vm311, %v292, 0
      %v343 = vsel %vm311, %v293, 0
      %v346 = vsel %vm311, %v294, 0
      %v349 = vsel %vm311, %v295, 0
      %v352 = vsel %vm311, %v296, 0
      %v355 = vsel %vm311, %v297, 0
      %v358 = vsel %vm311, %v298, 0
      %360 = vmatprep.subr.bf16.mxu0 0
      %361 = vmatpush1.bf16.msra.mxu0 0
      %362 = vmatprep.subr.bf16.mxu0 0
      %363 = vmatpush1.bf16.msra.mxu0 0
      %364 = vmatprep.subr.bf16.mxu0 0
      %365 = vmatpush1.bf16.msra.mxu0 0
      %366 = vmatprep.subr.bf16.mxu0 0
      %367 = vmatpush1.bf16.msra.mxu0 0
      %368 = vmatprep.subr.bf16.mxu0 0
      %369 = vmatpush1.bf16.msra.mxu0 0
      %370 = vmatprep.subr.bf16.mxu0 0
      %371 = vmatpush1.bf16.msra.mxu0 0
      %372 = vmatprep.subr.bf16.mxu0 0
      %373 = vmatpush1.bf16.msra.mxu0 %v308
      %374 = vmatprep.subr.bf16.mxu0 0
      %375 = vmatpush1.bf16.msra.mxu0 %v307
      %376 = vmatprep.subr.bf16.mxu0 0
      %377 = vmatpush2.bf16.msra.mxu0 0
      %378 = vmatprep.subr.bf16.mxu0 0
      %379 = vmatpush2.bf16.msra.mxu0 0
      %380 = vmatprep.subr.bf16.mxu0 0
      %381 = vmatpush2.bf16.msra.mxu0 0
      %382 = vmatprep.subr.bf16.mxu0 0
      %383 = vmatpush2.bf16.msra.mxu0 0
      %384 = vmatprep.subr.bf16.mxu0 0
      %385 = vmatpush2.bf16.msra.mxu0 0
      %386 = vmatprep.subr.bf16.mxu0 0
      %387 = vmatpush2.bf16.msra.mxu0 0
      %388 = vmatprep.subr.bf16.mxu0 0
      %389 = vmatpush2.bf16.msra.mxu0 0
      %390 = vmatprep.subr.bf16.mxu0 0
      %391 = vmatpush2.bf16.msra.mxu0 0
      %392 = vmatprep.mubr.bf16.mxu0 0
      %393 = vmatmul.mubr.bf16.gmra.mxu0 %v313
      %v394 = vpop.f32.mrf.mxu0
      %v395 = vadd.f32 0.0, %v394
      %v396 = vpop.f32.mrf.mxu0
      %v397 = vpop.f32.mrf.mxu0
      %v398 = vadd.f32 0.0, %v397
      %v399 = vpop.f32.mrf.mxu0
      %400 = vmatprep.mubr.bf16.mxu0 0
      %401 = vmatmul.mubr.bf16.gmra.mxu0 %v316
      %v402 = vpop.f32.mrf.mxu0
      %v403 = vadd.f32 0.0, %v402
      %v404 = vpop.f32.mrf.mxu0
      %v405 = vpop.f32.mrf.mxu0
      %v406 = vadd.f32 0.0, %v405
      %v407 = vpop.f32.mrf.mxu0
      %408 = vmatprep.mubr.bf16.mxu0 0
      %409 = vmatmul.mubr.bf16.gmra.mxu0 %v319
      %v410 = vpop.f32.mrf.mxu0
      %v411 = vadd.f32 0.0, %v410
      %v412 = vpop.f32.mrf.mxu0
      %v413 = vpop.f32.mrf.mxu0
      %v414 = vadd.f32 0.0, %v413
      %v415 = vpop.f32.mrf.mxu0
      %416 = vmatprep.mubr.bf16.mxu0 0
      %417 = vmatmul.mubr.bf16.gmra.mxu0 %v322
      %v418 = vpop.f32.mrf.mxu0
      %v419 = vadd.f32 0.0, %v418
      %v420 = vpop.f32.mrf.mxu0
      %v421 = vpop.f32.mrf.mxu0
      %v422 = vadd.f32 0.0, %v421
      %v423 = vpop.f32.mrf.mxu0
      %424 = vmatprep.mubr.bf16.mxu0 0
      %425 = vmatmul.mubr.bf16.gmra.mxu0 %v325
      %v426 = vpop.f32.mrf.mxu0
      %v427 = vadd.f32 0.0, %v426
      %v428 = vpop.f32.mrf.mxu0
      %v429 = vpop.f32.mrf.mxu0
      %v430 = vadd.f32 0.0, %v429
      %v431 = vpop.f32.mrf.mxu0
      %432 = vmatprep.mubr.bf16.mxu0 0
      %433 = vmatmul.mubr.bf16.gmra.mxu0 %v328
      %v434 = vpop.f32.mrf.mxu0
      %v435 = vadd.f32 0.0, %v434
      %v436 = vpop.f32.mrf.mxu0
      %v437 = vpop.f32.mrf.mxu0
      %v438 = vadd.f32 0.0, %v437
      %v439 = vpop.f32.mrf.mxu0
      %440 = vmatprep.mubr.bf16.mxu0 0
      %441 = vmatmul.mubr.bf16.gmra.mxu0 %v331
      %v442 = vpop.f32.mrf.mxu0
      %v443 = vadd.f32 0.0, %v442
      %v444 = vpop.f32.mrf.mxu0
      %v445 = vpop.f32.mrf.mxu0
      %v446 = vadd.f32 0.0, %v445
      %v447 = vpop.f32.mrf.mxu0
      %448 = vmatprep.mubr.bf16.mxu0 0
      %449 = vmatmul.mubr.bf16.gmra.mxu0 %v334
      %v450 = vpop.f32.mrf.mxu0
      %v451 = vadd.f32 0.0, %v450
      %v452 = vpop.f32.mrf.mxu0
      %v453 = vpop.f32.mrf.mxu0
      %v454 = vadd.f32 0.0, %v453
      %v455 = vpop.f32.mrf.mxu0
      %456 = vmatprep.mubr.bf16.mxu0 0
      %457 = vmatmul.mubr.bf16.gmra.mxu0 %v337
      %v458 = vpop.f32.mrf.mxu0
      %v459 = vadd.f32 0.0, %v458
      %v460 = vpop.f32.mrf.mxu0
      %v461 = vpop.f32.mrf.mxu0
      %v462 = vadd.f32 0.0, %v461
      %v463 = vpop.f32.mrf.mxu0
      %464 = vmatprep.mubr.bf16.mxu0 0
      %465 = vmatmul.mubr.bf16.gmra.mxu0 %v340
      %v466 = vpop.f32.mrf.mxu0
      %v467 = vadd.f32 0.0, %v466
      %v468 = vpop.f32.mrf.mxu0
      %v469 = vpop.f32.mrf.mxu0
      %v470 = vadd.f32 0.0, %v469
      %v471 = vpop.f32.mrf.mxu0
      %472 = vmatprep.mubr.bf16.mxu0 0
      %473 = vmatmul.mubr.bf16.gmra.mxu0 %v343
      %v474 = vpop.f32.mrf.mxu0
      %v475 = vadd.f32 0.0, %v474
      %v476 = vpop.f32.mrf.mxu0
      %v477 = vpop.f32.mrf.mxu0
      %v478 = vadd.f32 0.0, %v477
      %v479 = vpop.f32.mrf.mxu0
      %480 = vmatprep.mubr.bf16.mxu0 0
      %481 = vmatmul.mubr.bf16.gmra.mxu0 %v346
      %v482 = vpop.f32.mrf.mxu0
      %v483 = vadd.f32 0.0, %v482
      %v484 = vpop.f32.mrf.mxu0
      %v485 = vpop.f32.mrf.mxu0
      %v486 = vadd.f32 0.0, %v485
      %v487 = vpop.f32.mrf.mxu0
      %488 = vmatprep.mubr.bf16.mxu0 0
      %489 = vmatmul.mubr.bf16.gmra.mxu0 %v349
      %v490 = vpop.f32.mrf.mxu0
      %v491 = vadd.f32 0.0, %v490
      %v492 = vpop.f32.mrf.mxu0
      %v493 = vpop.f32.mrf.mxu0
      %v494 = vadd.f32 0.0, %v493
      %v495 = vpop.f32.mrf.mxu0
      %496 = vmatprep.mubr.bf16.mxu0 0
      %497 = vmatmul.mubr.bf16.gmra.mxu0 %v352
      %v498 = vpop.f32.mrf.mxu0
      %v499 = vadd.f32 0.0, %v498
      %v500 = vpop.f32.mrf.mxu0
      %v501 = vpop.f32.mrf.mxu0
      %v502 = vadd.f32 0.0, %v501
      %v503 = vpop.f32.mrf.mxu0
      %504 = vmatprep.mubr.bf16.mxu0 0
      %505 = vmatmul.mubr.bf16.gmra.mxu0 %v355
      %v506 = vpop.f32.mrf.mxu0
      %v507 = vadd.f32 0.0, %v506
      %v508 = vpop.f32.mrf.mxu0
      %v509 = vpop.f32.mrf.mxu0
      %v510 = vadd.f32 0.0, %v509
      %v511 = vpop.f32.mrf.mxu0
      %512 = vmatprep.mubr.bf16.mxu0 0
      %513 = vmatmul.mubr.bf16.gmra.mxu0 %v358
      %v514 = vpop.f32.mrf.mxu0
      %v515 = vadd.f32 0.0, %v514
      %v516 = vpop.f32.mrf.mxu0
      %v517 = vpop.f32.mrf.mxu0
      %v518 = vadd.f32 0.0, %v517
      %v519 = vpop.f32.mrf.mxu0
      %520 = vdwg.mxu0
      %521 = vst.msk [vmem:[#allocation2] sm:$0xff] %vm311, %v395
      %522 = vst.msk [vmem:[#allocation2 + $0x8] sm:$0xff] %vm311, %v398
      %523 = vst.msk [vmem:[#allocation2 + $0x10] sm:$0xff] %vm311, %v403
      %524 = vst.msk [vmem:[#allocation2 + $0x18] sm:$0xff] %vm311, %v406
      %525 = vst.msk [vmem:[#allocation2 + $0x20] sm:$0xff] %vm311, %v411
      %526 = vst.msk [vmem:[#allocation2 + $0x28] sm:$0xff] %vm311, %v414
      %527 = vst.msk [vmem:[#allocation2 + $0x30] sm:$0xff] %vm311, %v419
      %528 = vst.msk [vmem:[#allocation2 + $0x38] sm:$0xff] %vm311, %v422
      %529 = vst.msk [vmem:[#allocation2 + $0x40] sm:$0xff] %vm311, %v427
      %530 = vst.msk [vmem:[#allocation2 + $0x48] sm:$0xff] %vm311, %v430
      %531 = vst.msk [vmem:[#allocation2 + $0x50] sm:$0xff] %vm311, %v435
      %532 = vst.msk [vmem:[#allocation2 + $0x58] sm:$0xff] %vm311, %v438
      %533 = vst.msk [vmem:[#allocation2 + $0x60] sm:$0xff] %vm311, %v443
      %534 = vst.msk [vmem:[#allocation2 + $0x68] sm:$0xff] %vm311, %v446
      %535 = vst.msk [vmem:[#allocation2 + $0x70] sm:$0xff] %vm311, %v451
      %536 = vst.msk [vmem:[#allocation2 + $0x78] sm:$0xff] %vm311, %v454
      %537 = vst.msk [vmem:[#allocation2 + $0x80] sm:$0xff] %vm311, %v459
      %538 = vst.msk [vmem:[#allocation2 + $0x88] sm:$0xff] %vm311, %v462
      %539 = vst.msk [vmem:[#allocation2 + $0x90] sm:$0xff] %vm311, %v467
      %540 = vst.msk [vmem:[#allocation2 + $0x98] sm:$0xff] %vm311, %v470
      %541 = vst.msk [vmem:[#allocation2 + $0xa0] sm:$0xff] %vm311, %v475
      %542 = vst.msk [vmem:[#allocation2 + $0xa8] sm:$0xff] %vm311, %v478
      %543 = vst.msk [vmem:[#allocation2 + $0xb0] sm:$0xff] %vm311, %v483
      %544 = vst.msk [vmem:[#allocation2 + $0xb8] sm:$0xff] %vm311, %v486
      %545 = vst.msk [vmem:[#allocation2 + $0xc0] sm:$0xff] %vm311, %v491
      %546 = vst.msk [vmem:[#allocation2 + $0xc8] sm:$0xff] %vm311, %v494
      %547 = vst.msk [vmem:[#allocation2 + $0xd0] sm:$0xff] %vm311, %v499
      %548 = vst.msk [vmem:[#allocation2 + $0xd8] sm:$0xff] %vm311, %v502
      %549 = vst.msk [vmem:[#allocation2 + $0xe0] sm:$0xff] %vm311, %v507
      %550 = vst.msk [vmem:[#allocation2 + $0xe8] sm:$0xff] %vm311, %v510
      %551 = vst.msk [vmem:[#allocation2 + $0xf0] sm:$0xff] %vm311, %v515
      %552 = vst.msk [vmem:[#allocation2 + $0xf8] sm:$0xff] %vm311, %v518
      %v553 = vld [vmem:[#allocation2] ss:$2 sm:$0xff]
      %s554 = scalar_lea.vmem [#allocation2], 1
      %v555 = vld [vmem:[%s554] ss:$2 sm:$0xff]
      %v556 = vmax.f32 %v553, %v555
      %s557 = scalar_lea.vmem [#allocation2], 16
      %v558 = vld [vmem:[%s557] ss:$2 sm:$0xff]
      %s559 = scalar_lea.vmem [#allocation2], 17
      %v560 = vld [vmem:[%s559] ss:$2 sm:$0xff]
      %v561 = vmax.f32 %v558, %v560
      %v562 = vmax.f32 %v556, %v561
      %v564 = vlaneseq
      %v565 = vshrl.u32 %v564, 7
      %v566 = vsub.s32 0, %v565
      %v567 = vrot.slane %v172, %v566
      %v569 = vadd.f32 %v562, %v567
      %v570 = vmax.f32 %v569, 0.0
      %v572 = vrot.slane %v570, 7
      %vm574 = vcmask 1040384
      %v575 = vsel %vm574, 0.0, %v572
      %v576 = vsel %vm574, %v572, 0.0
      %v577 = vpack.c.bf16 %v576, %v575
      %v579 = vunpack.c.l.b16 %v577
      %v580 = vunpack.c.h.b16 %v577
      %v581 = vpack.c.b16 %v579, %v579
      %v582 = vpack.c.b16 %v580, %v580
      %s585 = scalar_lea.vmem %s170, 8
      %586 = vst.msk [vmem:[%s585] sm:$0xf] %vm173, %v581
      %587 = vst.msk [vmem:[%s585 + $0x4] sm:$0x1] %vm175, %v582
      %s588 = scalar_lea.vmem [#allocation2], 32
      %v589 = vld [vmem:[%s588] ss:$2 sm:$0xff]
      %s590 = scalar_lea.vmem [#allocation2], 33
      %v591 = vld [vmem:[%s590] ss:$2 sm:$0xff]
      %v592 = vmax.f32 %v589, %v591
      %s593 = scalar_lea.vmem [#allocation2], 48
      %v594 = vld [vmem:[%s593] ss:$2 sm:$0xff]
      %s595 = scalar_lea.vmem [#allocation2], 49
      %v596 = vld [vmem:[%s595] ss:$2 sm:$0xff]
      %v597 = vmax.f32 %v594, %v596
      %v598 = vmax.f32 %v592, %v597
      %v599 = vadd.f32 %v598, %v567
      %v600 = vmax.f32 %v599, 0.0
      %v602 = vrot.slane %v600, 7
      %v604 = vsel %vm574, 0.0, %v602
      %v605 = vsel %vm574, %v602, 0.0
      %v606 = vpack.c.bf16 %v605, %v604
      %v608 = vunpack.c.l.b16 %v606
      %v609 = vunpack.c.h.b16 %v606
      %v610 = vpack.c.b16 %v608, %v608
      %v611 = vpack.c.b16 %v609, %v609
      %s614 = scalar_lea.vmem %s170, 16
      %615 = vst.msk [vmem:[%s614] sm:$0xf] %vm173, %v610
      %616 = vst.msk [vmem:[%s614 + $0x4] sm:$0x1] %vm175, %v611
      %s617 = scalar_lea.vmem [#allocation2], 64
      %v618 = vld [vmem:[%s617] ss:$2 sm:$0xff]
      %s619 = scalar_lea.vmem [#allocation2], 65
      %v620 = vld [vmem:[%s619] ss:$2 sm:$0xff]
      %v621 = vmax.f32 %v618, %v620
      %s622 = scalar_lea.vmem [#allocation2], 80
      %v623 = vld [vmem:[%s622] ss:$2 sm:$0xff]
      %s624 = scalar_lea.vmem [#allocation2], 81
      %v625 = vld [vmem:[%s624] ss:$2 sm:$0xff]
      %v626 = vmax.f32 %v623, %v625
      %v627 = vmax.f32 %v621, %v626
      %v628 = vadd.f32 %v627, %v567
      %v629 = vmax.f32 %v628, 0.0
      %v631 = vrot.slane %v629, 7
      %v633 = vsel %vm574, 0.0, %v631
      %v634 = vsel %vm574, %v631, 0.0
      %v635 = vpack.c.bf16 %v634, %v633
      %v637 = vunpack.c.l.b16 %v635
      %v638 = vunpack.c.h.b16 %v635
      %v639 = vpack.c.b16 %v637, %v637
      %v640 = vpack.c.b16 %v638, %v638
      %s643 = scalar_lea.vmem %s170, 24
      %644 = vst.msk [vmem:[%s643] sm:$0xf] %vm173, %v639
      %645 = vst.msk [vmem:[%s643 + $0x4] sm:$0x1] %vm175, %v640
      %s646 = scalar_lea.vmem [#allocation2], 96
      %v647 = vld [vmem:[%s646] ss:$2 sm:$0xff]
      %s648 = scalar_lea.vmem [#allocation2], 97
      %v649 = vld [vmem:[%s648] ss:$2 sm:$0xff]
      %v650 = vmax.f32 %v647, %v649
      %s651 = scalar_lea.vmem [#allocation2], 112
      %v652 = vld [vmem:[%s651] ss:$2 sm:$0xff]
      %s653 = scalar_lea.vmem [#allocation2], 113
      %v654 = vld [vmem:[%s653] ss:$2 sm:$0xff]
      %v655 = vmax.f32 %v652, %v654
      %v656 = vmax.f32 %v650, %v655
      %v657 = vadd.f32 %v656, %v567
      %v658 = vmax.f32 %v657, 0.0
      %v660 = vrot.slane %v658, 7
      %v662 = vsel %vm574, 0.0, %v660
      %v663 = vsel %vm574, %v660, 0.0
      %v664 = vpack.c.bf16 %v663, %v662
      %v666 = vunpack.c.l.b16 %v664
      %v667 = vunpack.c.h.b16 %v664
      %v668 = vpack.c.b16 %v666, %v666
      %v669 = vpack.c.b16 %v667, %v667
      %s672 = scalar_lea.vmem %s170, 32
      %673 = vst.msk [vmem:[%s672] sm:$0xf] %vm173, %v668
      %674 = vst.msk [vmem:[%s672 + $0x4] sm:$0x1] %vm175, %v669
      %s675 = scalar_lea.vmem [#allocation2], 128
      %v676 = vld [vmem:[%s675] ss:$2 sm:$0xff]
      %s677 = scalar_lea.vmem [#allocation2], 129
      %v678 = vld [vmem:[%s677] ss:$2 sm:$0xff]
      %v679 = vmax.f32 %v676, %v678
      %s680 = scalar_lea.vmem [#allocation2], 144
      %v681 = vld [vmem:[%s680] ss:$2 sm:$0xff]
      %s682 = scalar_lea.vmem [#allocation2], 145
      %v683 = vld [vmem:[%s682] ss:$2 sm:$0xff]
      %v684 = vmax.f32 %v681, %v683
      %v685 = vmax.f32 %v679, %v684
      %v686 = vadd.f32 %v685, %v567
      %v687 = vmax.f32 %v686, 0.0
      %v689 = vrot.slane %v687, 7
      %v691 = vsel %vm574, 0.0, %v689
      %v692 = vsel %vm574, %v689, 0.0
      %v693 = vpack.c.bf16 %v692, %v691
      %v695 = vunpack.c.l.b16 %v693
      %v696 = vunpack.c.h.b16 %v693
      %v697 = vpack.c.b16 %v695, %v695
      %v698 = vpack.c.b16 %v696, %v696
      %s701 = scalar_lea.vmem %s170, 40
      %702 = vst.msk [vmem:[%s701] sm:$0xf] %vm173, %v697
      %703 = vst.msk [vmem:[%s701 + $0x4] sm:$0x1] %vm175, %v698
      %s704 = scalar_lea.vmem [#allocation2], 160
      %v705 = vld [vmem:[%s704] ss:$2 sm:$0xff]
      %s706 = scalar_lea.vmem [#allocation2], 161
      %v707 = vld [vmem:[%s706] ss:$2 sm:$0xff]
      %v708 = vmax.f32 %v705, %v707
      %s709 = scalar_lea.vmem [#allocation2], 176
      %v710 = vld [vmem:[%s709] ss:$2 sm:$0xff]
      %s711 = scalar_lea.vmem [#allocation2], 177
      %v712 = vld [vmem:[%s711] ss:$2 sm:$0xff]
      %v713 = vmax.f32 %v710, %v712
      %v714 = vmax.f32 %v708, %v713
      %v715 = vadd.f32 %v714, %v567
      %v716 = vmax.f32 %v715, 0.0
      %v718 = vrot.slane %v716, 7
      %v720 = vsel %vm574, 0.0, %v718
      %v721 = vsel %vm574, %v718, 0.0
      %v722 = vpack.c.bf16 %v721, %v720
      %v724 = vunpack.c.l.b16 %v722
      %v725 = vunpack.c.h.b16 %v722
      %v726 = vpack.c.b16 %v724, %v724
      %v727 = vpack.c.b16 %v725, %v725
      %s730 = scalar_lea.vmem %s170, 48
      %731 = vst.msk [vmem:[%s730] sm:$0xf] %vm173, %v726
      %732 = vst.msk [vmem:[%s730 + $0x4] sm:$0x1] %vm175, %v727
      %s733 = scalar_lea.vmem [#allocation2], 192
      %v734 = vld [vmem:[%s733] ss:$2 sm:$0xff]
      %s735 = scalar_lea.vmem [#allocation2], 193
      %v736 = vld [vmem:[%s735] ss:$2 sm:$0xff]
      %v737 = vmax.f32 %v734, %v736
      %s738 = scalar_lea.vmem [#allocation2], 208
      %v739 = vld [vmem:[%s738] ss:$2 sm:$0xff]
      %s740 = scalar_lea.vmem [#allocation2], 209
      %v741 = vld [vmem:[%s740] ss:$2 sm:$0xff]
      %v742 = vmax.f32 %v739, %v741
      %v743 = vmax.f32 %v737, %v742
      %v744 = vadd.f32 %v743, %v567
      %v745 = vmax.f32 %v744, 0.0
      %v747 = vrot.slane %v745, 7
      %v749 = vsel %vm574, 0.0, %v747
      %v750 = vsel %vm574, %v747, 0.0
      %v751 = vpack.c.bf16 %v750, %v749
      %v753 = vunpack.c.l.b16 %v751
      %v754 = vunpack.c.h.b16 %v751
      %v755 = vpack.c.b16 %v753, %v753
      %v756 = vpack.c.b16 %v754, %v754
      %s759 = scalar_lea.vmem %s170, 56
      %760 = vst.msk [vmem:[%s759] sm:$0xf] %vm173, %v755
      %761 = vst.msk [vmem:[%s759 + $0x4] sm:$0x1] %vm175, %v756
      %s762 = scalar_lea.vmem [#allocation2], 224
      %v763 = vld [vmem:[%s762] ss:$2 sm:$0xff]
      %s764 = scalar_lea.vmem [#allocation2], 225
      %v765 = vld [vmem:[%s764] ss:$2 sm:$0xff]
      %v766 = vmax.f32 %v763, %v765
      %s767 = scalar_lea.vmem [#allocation2], 240
      %v768 = vld [vmem:[%s767] ss:$2 sm:$0xff]
      %s769 = scalar_lea.vmem [#allocation2], 241
      %v770 = vld [vmem:[%s769] ss:$2 sm:$0xff]
      %v771 = vmax.f32 %v768, %v770
      %v772 = vmax.f32 %v766, %v771
      %v773 = vadd.f32 %v772, %v567
      %v774 = vmax.f32 %v773, 0.0
      %v776 = vrot.slane %v774, 7
      %v778 = vsel %vm574, 0.0, %v776
      %v779 = vsel %vm574, %v776, 0.0
      %v780 = vpack.c.bf16 %v779, %v778
      %v782 = vunpack.c.l.b16 %v780
      %v783 = vunpack.c.h.b16 %v780
      %v784 = vpack.c.b16 %v782, %v782
      %v785 = vpack.c.b16 %v783, %v783
      %s788 = scalar_lea.vmem %s170, 64
      %789 = vst.msk [vmem:[%s788] sm:$0xf] %vm173, %v784
      %790 = vst.msk [vmem:[%s788 + $0x4] sm:$0x1] %vm175, %v785
      %p791 = scmp.lt.s32.totalorder %s14, 1
      %s792 = scalar_select %p791, %s14, 1
      %s793 = smul.addr %s792, 22
      %s794 = smul.addr %s793, 4
      %s795 = scalar_lea.vmem %s3, %s794
      // Predicated region
      $region33: #{cnn_forward.3} parent=31 // pred_check
        %p796 = pneg %p100
      $region34: #{cnn_forward.3} parent=31 // pred_check_branch
        %798 = sbr.rel (%p796) target = $region36
      $region35: #{cnn_forward.3} parent=31 // pred_region
        _
      $region36: #{cnn_forward.3} parent=31 // pred_fallthru
        _
    $region32: #{cnn_forward.3} parent=5 // pred_fallthru
      _
    %p799 = scmp.le.s32.totalorder 2, %s9
    // Predicated region
    $region37: #{cnn_forward.3} parent=5 // pred_check
      %p800 = pneg %p799
    $region38: #{cnn_forward.3} parent=5 // pred_check_branch
      %802 = sbr.rel (%p800) target = $region40
    $region39: #{cnn_forward.3} parent=5 // pred_region
      %s803 = ssub.s32 %s9, 2
      // Predicated region
      $region41: #{cnn_forward.3} parent=39 // pred_check
        %p804 = pneg %p106
      $region42: #{cnn_forward.3} parent=39 // pred_check_branch
        %806 = sbr.rel (%p804) target = $region44
      $region43: #{cnn_forward.3} parent=39 // pred_region
        %p807 = scmp.lt.s32.totalorder %s15, 1
        %s808 = scalar_select %p807, %s15, 1
        %s809 = smul.addr %s808, 22
        %s810 = smul.addr %s809, 4
        %s811 = scalar_lea.vmem %s3, %s810
      $region44: #{cnn_forward.3} parent=39 // pred_fallthru
        _
    $region40: #{cnn_forward.3} parent=5 // pred_fallthru
      _
  $region6: #{cnn_forward.3} parent=0 // loop_footer
    %s13 = sadd.s32 1, %s9
  $region7: #{cnn_forward.3} parent=0 // loop_footer_branch
    %8 = sbr.rel target = $region3
  $region8: #{cnn_forward.3} parent=0 // loop_exit
    _

// kernel: cnn_forward.4
$region0: #{cnn_forward.4}
  #allocation0 [shape = 'u32[]', space=smem, size = 0x4, offset = 0x4, fixed_abs, tag = 'smem constant byte address 0x4 - core index']
  #allocation1 [shape = 'u32[144,128]{1,0:T(1,128)}', space=vmem, size = 0x12000, scoped, tag = 'internal scratch']
  #allocation2 [shape = 'f32[80,64]{1,0:T(8,128)}', space=vmem, size = 0xa000, scoped, tag = 'scratch operand']
  %s0 = inlined_call_operand.vmem [shape: bf16[2,110,32], index: 0, kind: input, shape index: {}]
  %s1 = inlined_call_operand.vmem [shape: bf16[3,96,64], index: 1, kind: input, shape index: {}]
  %s2 = inlined_call_operand.vmem [shape: f32[1,64], index: 2, kind: input, shape index: {}]
  %s3 = inlined_call_operand.vmem [shape: bf16[2,7,6,64], index: 3, kind: output, shape index: {}]
  %s4 = sld [smem:[#allocation0]]
  $region45: #{cnn_forward.4} parent=0
    _
  %s6 = ssub.s32 1, %s4
  %s7 = scalar_select 0, %s6, %s4
  loop: start=0, step=1, limit=4
  $region2: #{cnn_forward.4} parent=0 // loop_pre_header
    _
  $region3: #{cnn_forward.4} parent=0 // loop_header
    %s9 = sphi 0, %s13
    %p10 = scmp.ge.s32.totalorder %s9, 4
    %s19 = sphi 0, %s21
    %s22 = sphi 0, %s19
    %s23 = sphi 0, %s22
    %s39 = sphi 0, %s23
    %s43 = sphi 0, %s43
    %s45 = sphi 0, %s43
    %s46 = sphi 0, %s45
    %s60 = sphi 0, %s46
    %s64 = sphi 0, %s64
    %s66 = sphi 0, %s64
    %s67 = sphi 0, %s66
    %s81 = sphi 0, %s67
    %s87 = sphi 0, %s89
    %s90 = sphi 0, %s87
    %s91 = sphi 0, %s90
    %s107 = sphi 0, %s91
  $region4: #{cnn_forward.4} parent=0 // loop_header_branch
    %12 = sbr.rel (%p10) target = $region8
  $region5: #{cnn_forward.4} parent=0 // loop_body
    %s14 = ssub.s32 %s9, 1
    %s15 = ssub.s32 %s9, 2
    %s16 = sadd.s32 %s9, 1
    %s17 = ssub.s32 %s9, %s16
    %p18 = scmp.eq.s32.totalorder %s17, 0
    %s20 = sadd.s32 %s19, 1
    %s21 = scalar_select %p18, %s19, %s20
    %p24 = pneg %p18
    %p25 = scmp.eq.s32.totalorder %s9, 1
    %p26 = por %p24, %p25
    %p27 = scmp.ne.s32.totalorder %s19, %s22
    %p28 = scmp.eq.s32.totalorder %s9, 0
    %p29 = por %p27, %p28
    %p30 = scmp.ne.s32.totalorder %s19, %s22
    %p31 = scmp.eq.s32.totalorder %s14, 1
    %p32 = por %p30, %p31
    %p33 = scmp.ne.s32.totalorder %s22, %s23
    %p34 = scmp.eq.s32.totalorder %s14, 0
    %p35 = por %p33, %p34
    %p36 = scmp.ne.s32.totalorder %s22, %s23
    %p37 = scmp.eq.s32.totalorder %s15, 1
    %p38 = por %p36, %p37
    %p40 = scmp.ne.s32.totalorder %s23, %s39
    %p41 = scmp.eq.s32.totalorder %s15, 0
    %p42 = por %p40, %p41
    %s44 = sadd.s32 %s43, 1
    %p47 = scmp.eq.s32.totalorder %s9, 1
    %p48 = scmp.ne.s32.totalorder %s43, %s45
    %p49 = scmp.eq.s32.totalorder %s9, 0
    %p50 = por %p48, %p49
    %p51 = scmp.ne.s32.totalorder %s43, %s45
    %p52 = scmp.eq.s32.totalorder %s14, 1
    %p53 = por %p51, %p52
    %p54 = scmp.ne.s32.totalorder %s45, %s46
    %p55 = scmp.eq.s32.totalorder %s14, 0
    %p56 = por %p54, %p55
    %p57 = scmp.ne.s32.totalorder %s45, %s46
    %p58 = scmp.eq.s32.totalorder %s15, 1
    %p59 = por %p57, %p58
    %p61 = scmp.ne.s32.totalorder %s46, %s60
    %p62 = scmp.eq.s32.totalorder %s15, 0
    %p63 = por %p61, %p62
    %s65 = sadd.s32 %s64, 1
    %p68 = scmp.eq.s32.totalorder %s9, 1
    %p69 = scmp.ne.s32.totalorder %s64, %s66
    %p70 = scmp.eq.s32.totalorder %s9, 0
    %p71 = por %p69, %p70
    %p72 = scmp.ne.s32.totalorder %s64, %s66
    %p73 = scmp.eq.s32.totalorder %s14, 1
    %p74 = por %p72, %p73
    %p75 = scmp.ne.s32.totalorder %s66, %s67
    %p76 = scmp.eq.s32.totalorder %s14, 0
    %p77 = por %p75, %p76
    %p78 = scmp.ne.s32.totalorder %s66, %s67
    %p79 = scmp.eq.s32.totalorder %s15, 1
    %p80 = por %p78, %p79
    %p82 = scmp.ne.s32.totalorder %s67, %s81
    %p83 = scmp.eq.s32.totalorder %s15, 0
    %p84 = por %p82, %p83
    %s85 = ssub.s32 %s9, %s16
    %p86 = scmp.eq.s32.totalorder %s85, 0
    %s88 = sadd.s32 %s87, 1
    %s89 = scalar_select %p86, %s87, %s88
    %p92 = pneg %p86
    %p93 = scmp.eq.s32.totalorder %s9, 1
    %p94 = por %p92, %p93
    %p95 = scmp.ne.s32.totalorder %s87, %s90
    %p96 = scmp.eq.s32.totalorder %s9, 0
    %p97 = por %p95, %p96
    %p98 = scmp.ne.s32.totalorder %s87, %s90
    %p99 = scmp.eq.s32.totalorder %s14, 1
    %p100 = por %p98, %p99
    %p101 = scmp.ne.s32.totalorder %s90, %s91
    %p102 = scmp.eq.s32.totalorder %s14, 0
    %p103 = por %p101, %p102
    %p104 = scmp.ne.s32.totalorder %s90, %s91
    %p105 = scmp.eq.s32.totalorder %s15, 1
    %p106 = por %p104, %p105
    %p108 = scmp.ne.s32.totalorder %s91, %s107
    %p109 = scmp.eq.s32.totalorder %s15, 0
    %p110 = por %p108, %p109
    %p111 = scmp.le.s32.totalorder 1, %s9
    %p112 = scmp.lt.s32.totalorder %s9, 3
    %p113 = pnand %p111, %p112
    %p114 = pneg %p113
    // Predicated region
    $region9: #{cnn_forward.4} parent=5 // pred_check
      _
    $region10: #{cnn_forward.4} parent=5 // pred_check_branch
      %116 = sbr.rel (%p113) target = $region12
    $region11: #{cnn_forward.4} parent=5 // pred_region
      %s117 = ssub.s32 %s9, 1
      // Predicated region
      $region13: #{cnn_forward.4} parent=11 // pred_check
        %p118 = pneg %p56
      $region14: #{cnn_forward.4} parent=11 // pred_check_branch
        %120 = sbr.rel (%p118) target = $region16
      $region15: #{cnn_forward.4} parent=11 // pred_region
        _
      $region16: #{cnn_forward.4} parent=11 // pred_fallthru
        _
      // Predicated region
      $region17: #{cnn_forward.4} parent=11 // pred_check
        %p121 = pneg %p77
      $region18: #{cnn_forward.4} parent=11 // pred_check_branch
        %123 = sbr.rel (%p121) target = $region20
      $region19: #{cnn_forward.4} parent=11 // pred_region
        _
      $region20: #{cnn_forward.4} parent=11 // pred_fallthru
        _
    $region12: #{cnn_forward.4} parent=5 // pred_fallthru
      _
    %p124 = scmp.lt.s32.totalorder %s9, 2
    // Predicated region
    $region21: #{cnn_forward.4} parent=5 // pred_check
      %p125 = pneg %p124
    $region22: #{cnn_forward.4} parent=5 // pred_check_branch
      %127 = sbr.rel (%p125) target = $region24
    $region23: #{cnn_forward.4} parent=5 // pred_region
      // Predicated region
      $region25: #{cnn_forward.4} parent=23 // pred_check
        %p128 = pneg %p29
      $region26: #{cnn_forward.4} parent=23 // pred_check_branch
        %130 = sbr.rel (%p128) target = $region28
      $region27: #{cnn_forward.4} parent=23 // pred_region
        %p131 = scmp.lt.s32.totalorder %s9, 1
        %s132 = scalar_select %p131, %s9, 1
        %s133 = smul.addr %s132, 14
        %s134 = smul.addr %s133, 4
        %s135 = scalar_lea.vmem %s0, %s134
      $region28: #{cnn_forward.4} parent=23 // pred_fallthru
        _
    $region24: #{cnn_forward.4} parent=5 // pred_fallthru
      _
    %p136 = scmp.le.s32.totalorder 1, %s9
    %p137 = scmp.lt.s32.totalorder %s9, 3
    %p138 = pnand %p136, %p137
    %p139 = pneg %p138
    // Predicated region
    $region29: #{cnn_forward.4} parent=5 // pred_check
      _
    $region30: #{cnn_forward.4} parent=5 // pred_check_branch
      %141 = sbr.rel (%p138) target = $region32
    $region31: #{cnn_forward.4} parent=5 // pred_region
      %s142 = ssub.s32 %s9, 1
      %p143 = scmp.lt.s32.totalorder %s14, 1
      %s144 = scalar_select %p143, %s14, 1
      %s145 = smul.addr %s144, 14
      %s146 = smul.addr %s145, 4
      %s147 = scalar_lea.vmem %s0, %s146
      %p148 = pneg %p35
      %p149 = pneg %p32
      %p150 = pneg %p56
      %p151 = pneg %p53
      %p152 = pneg %p77
      %p153 = pneg %p74
      %p154 = pneg %p103
      %p155 = pneg %p100
      %p156 = scmp.lt.s32.totalorder %s14, 1
      %s157 = scalar_select %p156, %s14, 1
      %s158 = smul.addr %s157, 7
      %s159 = smul.addr %s158, 4
      %s160 = scalar_lea.vmem %s3, %s159
      %p161 = scmp.lt.s32.totalorder %s14, 1
      %s162 = scalar_select %p161, %s14, 1
      %s163 = smul.addr %s162, 14
      %s164 = smul.addr %s163, 4
      %s165 = scalar_lea.vmem %s0, %s164
      %p166 = scmp.lt.s32.totalorder %s14, 1
      %s167 = scalar_select %p166, %s14, 1
      %s168 = smul.addr %s167, 7
      %s169 = smul.addr %s168, 4
      %s170 = scalar_lea.vmem %s3, %s169
      %v172 = vld [vmem:[%s2] sm:$0x1]
      %vm173 = vcmask 518144
      %174 = vst.msk [vmem:[%s170] sm:$0x7] %vm173, 0
      %s175 = scalar_lea.vmem %s170, 20
      %176 = vst.msk [vmem:[%s175] sm:$0x7] %vm173, 0
      %s177 = scalar_lea.vmem %s170, 24
      %178 = vst.msk [vmem:[%s177] sm:$0x7] %vm173, 0
      %v179 = vld [vmem:[%s165] sm:$0xf]
      %v180 = vld [vmem:[%s165 + $0x4] sm:$0xf]
      %v181 = vld [vmem:[%s165 + $0x8] sm:$0xf]
      %v182 = vld [vmem:[%s165 + $0xc] sm:$0xf]
      %v183 = vld [vmem:[%s165 + $0x10] sm:$0xf]
      %v184 = vld [vmem:[%s165 + $0x14] sm:$0xf]
      %v185 = vld [vmem:[%s165 + $0x18] sm:$0xf]
      %v186 = vld [vmem:[%s165 + $0x1c] sm:$0xf]
      %v187 = vld [vmem:[%s165 + $0x20] sm:$0xf]
      %v188 = vld [vmem:[%s165 + $0x24] sm:$0xf]
      %v189 = vld [vmem:[%s165 + $0x28] sm:$0x1]
      %v190 = vld [vmem:[%s165] sm:$0xe]
      %v201 = vunpack.c.l.b16 %v179
      %v202 = vunpack.c.l.b16 %v180
      %v203 = vunpack.c.l.b16 %v181
      %v204 = vunpack.c.l.b16 %v182
      %v205 = vunpack.c.l.b16 %v183
      %v206 = vunpack.c.l.b16 %v184
      %v207 = vunpack.c.l.b16 %v185
      %v208 = vunpack.c.l.b16 %v186
      %v209 = vunpack.c.l.b16 %v187
      %v210 = vunpack.c.l.b16 %v188
      %v211 = vpack.c.b16 %v202, %v201
      %v212 = vpack.c.b16 %v204, %v203
      %v213 = vpack.c.b16 %v206, %v205
      %v214 = vpack.c.b16 %v208, %v207
      %v215 = vpack.c.b16 %v210, %v209
      %v217 = vunpack.c.l.b16 %v189
      %v218 = vpack.c.b16 %v217, %v217
      %vm219 = vsmask.f32 7424
      %v221 = vshrl.u32 %v211, 16
      %v223 = vshll.u32 %v211, 16
      %v225 = vrot.slane %v223, 1
      %v226 = vor.u32 %v221, %v225
      %v228 = vshll.u32 %v212, 16
      %v230 = vrot.slane %v228, 1
      %v231 = vsel %vm219, %v226, %v230
      %v232 = vshrl.u32 %v212, 16
      %v234 = vor.u32 %v232, %v230
      %v236 = vshll.u32 %v213, 16
      %v238 = vrot.slane %v236, 1
      %v239 = vsel %vm219, %v234, %v238
      %v240 = vshrl.u32 %v213, 16
      %v242 = vor.u32 %v240, %v238
      %v244 = vshll.u32 %v214, 16
      %v246 = vrot.slane %v244, 1
      %v247 = vsel %vm219, %v242, %v246
      %v248 = vshrl.u32 %v214, 16
      %v250 = vor.u32 %v248, %v246
      %v252 = vshll.u32 %v215, 16
      %v254 = vrot.slane %v252, 1
      %v255 = vsel %vm219, %v250, %v254
      %v256 = vshrl.u32 %v215, 16
      %v258 = vor.u32 %v256, %v254
      %v260 = vshll.u32 %v218, 16
      %v262 = vrot.slane %v260, 1
      %v263 = vsel %vm219, %v258, %v262
      %264 = vrot.lane.b32.xlu0 %v231, 32
      %v265 = vpop.permute.xlu0 %264
      %266 = vrot.lane.b32.xlu0 %v239, 32
      %v267 = vpop.permute.xlu0 %266
      %268 = vrot.lane.b32.xlu0 %v247, 32
      %v269 = vpop.permute.xlu0 %268
      %270 = vrot.lane.b32.xlu0 %v255, 32
      %v271 = vpop.permute.xlu0 %270
      %272 = vrot.lane.b32.xlu0 %v263, 32
      %v273 = vpop.permute.xlu0 %272
      %v275 = vunpack.c.l.b16 %v190
      %v276 = vpack.c.b16 %v202, %v275
      %vm277 = vcmask 1046528
      %v278 = vrot.slane %v276, 1
      %v279 = vrot.slane %v212, 1
      %v280 = vsel %vm277, %v278, %v279
      %v281 = vrot.slane %v213, 1
      %v282 = vsel %vm277, %v279, %v281
      %v283 = vrot.slane %v214, 1
      %v284 = vsel %vm277, %v281, %v283
      %v285 = vrot.slane %v215, 1
      %v286 = vsel %vm277, %v283, %v285
      %v287 = vrot.slane %v218, 1
      %v288 = vsel %vm277, %v285, %v287
      %289 = vrot.lane.b32.xlu0 %v280, 64
      %v290 = vpop.permute.xlu0 %289
      %291 = vrot.lane.b32.xlu0 %v282, 64
      %v292 = vpop.permute.xlu0 %291
      %293 = vrot.lane.b32.xlu0 %v284, 64
      %v294 = vpop.permute.xlu0 %293
      %295 = vrot.lane.b32.xlu0 %v286, 64
      %v296 = vpop.permute.xlu0 %295
      %297 = vrot.lane.b32.xlu0 %v288, 64
      %v298 = vpop.permute.xlu0 %297
      %vm299 = vcmask 261120
      %v301 = vsel %vm299, %v211, %v265
      %v303 = vsel %vm299, %v212, %v267
      %v305 = vsel %vm299, %v213, %v269
      %v307 = vsel %vm299, %v214, %v271
      %v309 = vsel %vm299, %v215, %v273
      %vm310 = vcmask 523264
      %v312 = vsel %vm310, %v301, %v290
      %v314 = vsel %vm310, %v303, %v292
      %v316 = vsel %vm310, %v305, %v294
      %v318 = vsel %vm310, %v307, %v296
      %v320 = vsel %vm310, %v309, %v298
      %v321 = vld [vmem:[%s1] sm:$0xf]
      %v322 = vld [vmem:[%s1 + $0x4] sm:$0xf]
      %v323 = vld [vmem:[%s1 + $0x8] sm:$0xf]
      %v324 = vld [vmem:[%s1 + $0xc] sm:$0xf]
      %v325 = vld [vmem:[%s1 + $0x10] sm:$0xf]
      %v326 = vld [vmem:[%s1 + $0x14] sm:$0xf]
      %v327 = vld [vmem:[%s1 + $0x18] sm:$0xf]
      %v328 = vld [vmem:[%s1 + $0x1c] sm:$0xf]
      %v329 = vld [vmem:[%s1 + $0x20] sm:$0xf]
      %v330 = vld [vmem:[%s1 + $0x24] sm:$0xf]
      %v331 = vld [vmem:[%s1 + $0x28] sm:$0xf]
      %v332 = vld [vmem:[%s1 + $0x2c] sm:$0xf]
      %v333 = vld [vmem:[%s165 + $0x4] sm:$0xe]
      %v334 = vld [vmem:[%s165 + $0x28] sm:$0xf]
      %v335 = vld [vmem:[%s165 + $0x2c] sm:$0x1]
      %v336 = vld [vmem:[%s165 + $0x2c] sm:$0x3]
      %v337 = vld [vmem:[%s165 + $0x4] sm:$0xc]
      %v341 = vunpack.c.l.b16 %v333
      %v342 = vunpack.c.l.b16 %v334
      %v343 = vunpack.c.l.b16 %v335
      %v344 = vpack.c.b16 %v203, %v341
      %v345 = vpack.c.b16 %v205, %v204
      %v346 = vpack.c.b16 %v207, %v206
      %v347 = vpack.c.b16 %v209, %v208
      %v348 = vpack.c.b16 %v342, %v210
      %v349 = vpack.c.b16 %v343, %v343
      %v351 = vunpack.c.l.b16 %v336
      %v352 = vpack.c.b16 %v351, %v351
      %v354 = vshrl.u32 %v344, 16
      %v356 = vshll.u32 %v344, 16
      %v358 = vrot.slane %v356, 1
      %v359 = vor.u32 %v354, %v358
      %v361 = vshll.u32 %v345, 16
      %v363 = vrot.slane %v361, 1
      %v364 = vsel %vm219, %v359, %v363
      %v365 = vshrl.u32 %v345, 16
      %v367 = vor.u32 %v365, %v363
      %v369 = vshll.u32 %v346, 16
      %v371 = vrot.slane %v369, 1
      %v372 = vsel %vm219, %v367, %v371
      %v373 = vshrl.u32 %v346, 16
      %v375 = vor.u32 %v373, %v371
      %v377 = vshll.u32 %v347, 16
      %v379 = vrot.slane %v377, 1
      %v380 = vsel %vm219, %v375, %v379
      %v381 = vshrl.u32 %v347, 16
      %v383 = vor.u32 %v381, %v379
      %v385 = vshll.u32 %v348, 16
      %v387 = vrot.slane %v385, 1
      %v388 = vsel %vm219, %v383, %v387
      %v389 = vshrl.u32 %v348, 16
      %v391 = vor.u32 %v389, %v387
      %v393 = vshll.u32 %v352, 16
      %v395 = vrot.slane %v393, 1
      %v396 = vsel %vm219, %v391, %v395
      %v397 = vshrl.u32 %v352, 16
      %v399 = vor.u32 %v397, %v395
      %400 = vrot.lane.b32.xlu0 %v364, 32
      %v401 = vpop.permute.xlu0 %400
      %402 = vrot.lane.b32.xlu0 %v372, 32
      %v403 = vpop.permute.xlu0 %402
      %404 = vrot.lane.b32.xlu0 %v380, 32
      %v405 = vpop.permute.xlu0 %404
      %406 = vrot.lane.b32.xlu0 %v388, 32
      %v407 = vpop.permute.xlu0 %406
      %408 = vrot.lane.b32.xlu0 %v396, 32
      %v409 = vpop.permute.xlu0 %408
      %410 = vrot.lane.b32.xlu0 %v399, 32
      %v411 = vpop.permute.xlu0 %410
      %v413 = vunpack.c.l.b16 %v337
      %v414 = vpack.c.b16 %v203, %v413
      %v415 = vrot.slane %v414, 1
      %v416 = vrot.slane %v345, 1
      %v417 = vsel %vm277, %v415, %v416
      %v418 = vrot.slane %v346, 1
      %v419 = vsel %vm277, %v416, %v418
      %v420 = vrot.slane %v347, 1
      %v421 = vsel %vm277, %v418, %v420
      %v422 = vrot.slane %v348, 1
      %v423 = vsel %vm277, %v420, %v422
      %v424 = vrot.slane %v352, 1
      %v425 = vsel %vm277, %v422, %v424
      %426 = vrot.lane.b32.xlu0 %v417, 64
      %v427 = vpop.permute.xlu0 %426
      %428 = vrot.lane.b32.xlu0 %v419, 64
      %v429 = vpop.permute.xlu0 %428
      %430 = vrot.lane.b32.xlu0 %v421, 64
      %v431 = vpop.permute.xlu0 %430
      %432 = vrot.lane.b32.xlu0 %v423, 64
      %v433 = vpop.permute.xlu0 %432
      %434 = vrot.lane.b32.xlu0 %v425, 64
      %v435 = vpop.permute.xlu0 %434
      %436 = vrot.lane.b32.xlu0 %v424, 64
      %v437 = vpop.permute.xlu0 %436
      %v439 = vsel %vm299, %v344, %v401
      %v441 = vsel %vm299, %v345, %v403
      %v443 = vsel %vm299, %v346, %v405
      %v445 = vsel %vm299, %v347, %v407
      %v447 = vsel %vm299, %v348, %v409
      %v450 = vsel %vm299, %v349, %v411
      %v452 = vsel %vm310, %v439, %v427
      %v454 = vsel %vm310, %v441, %v429
      %v456 = vsel %vm310, %v443, %v431
      %v458 = vsel %vm310, %v445, %v433
      %v460 = vsel %vm310, %v447, %v435
      %v462 = vsel %vm310, %v450, %v437
      %s463 = scalar_lea.vmem %s1, 48
      %v464 = vld [vmem:[%s463] sm:$0xf]
      %v465 = vld [vmem:[%s463 + $0x4] sm:$0xf]
      %v466 = vld [vmem:[%s463 + $0x8] sm:$0xf]
      %v467 = vld [vmem:[%s463 + $0xc] sm:$0xf]
      %v468 = vld [vmem:[%s463 + $0x10] sm:$0xf]
      %v469 = vld [vmem:[%s463 + $0x14] sm:$0xf]
      %v470 = vld [vmem:[%s463 + $0x18] sm:$0xf]
      %v471 = vld [vmem:[%s463 + $0x1c] sm:$0xf]
      %v472 = vld [vmem:[%s463 + $0x20] sm:$0xf]
      %v473 = vld [vmem:[%s463 + $0x24] sm:$0xf]
      %v474 = vld [vmem:[%s463 + $0x28] sm:$0xf]
      %v475 = vld [vmem:[%s463 + $0x2c] sm:$0xf]
      %v482 = vrot.slane %v452, 1
      %v483 = vrot.slane %v454, 1
      %v484 = vsel %vm277, %v482, %v483
      %v485 = vrot.slane %v456, 1
      %v486 = vsel %vm277, %v483, %v485
      %v487 = vrot.slane %v458, 1
      %v488 = vsel %vm277, %v485, %v487
      %v489 = vrot.slane %v460, 1
      %v490 = vsel %vm277, %v487, %v489
      %v491 = vrot.slane %v462, 1
      %v492 = vsel %vm277, %v489, %v491
      %v505 = vunpack.c.l.b16 %v464
      %v506 = vunpack.c.l.b16 %v465
      %v507 = vunpack.c.l.b16 %v466
      %v508 = vunpack.c.l.b16 %v467
      %v509 = vunpack.c.l.b16 %v468
      %v510 = vunpack.c.l.b16 %v469
      %v511 = vunpack.c.l.b16 %v470
      %v512 = vunpack.c.l.b16 %v471
      %v513 = vunpack.c.l.b16 %v472
      %v514 = vunpack.c.l.b16 %v473
      %v515 = vunpack.c.l.b16 %v474
      %v516 = vunpack.c.l.b16 %v475
      %v517 = vpack.c.b16 %v506, %v505
      %v518 = vpack.c.b16 %v508, %v507
      %v519 = vpack.c.b16 %v510, %v509
      %v520 = vpack.c.b16 %v512, %v511
      %v521 = vpack.c.b16 %v514, %v513
      %v522 = vpack.c.b16 %v516, %v515
      %vm529 = vcmask 785408
      %v531 = vsel %vm529, %v484, 0
      %v534 = vsel %vm529, %v486, 0
      %v537 = vsel %vm529, %v488, 0
      %v540 = vsel %vm529, %v490, 0
      %v543 = vsel %vm529, %v492, 0
      %545 = vmatprep.subr.bf16.mxu0 0
      %546 = vmatpush1.bf16.msra.mxu0 0
      %547 = vmatprep.subr.bf16.mxu0 0
      %548 = vmatpush1.bf16.msra.mxu0 0
      %549 = vmatprep.subr.bf16.mxu0 0
      %550 = vmatpush1.bf16.msra.mxu0 %v522
      %551 = vmatprep.subr.bf16.mxu0 0
      %552 = vmatpush1.bf16.msra.mxu0 %v521
      %553 = vmatprep.subr.bf16.mxu0 0
      %554 = vmatpush1.bf16.msra.mxu0 %v520
      %555 = vmatprep.subr.bf16.mxu0 0
      %556 = vmatpush1.bf16.msra.mxu0 %v519
      %557 = vmatprep.subr.bf16.mxu0 0
      %558 = vmatpush1.bf16.msra.mxu0 %v518
      %559 = vmatprep.subr.bf16.mxu0 0
      %560 = vmatpush1.bf16.msra.mxu0 %v517
      %561 = vmatprep.subr.bf16.mxu0 0
      %562 = vmatpush2.bf16.msra.mxu0 0
      %563 = vmatprep.subr.bf16.mxu0 0
      %564 = vmatpush2.bf16.msra.mxu0 0
      %565 = vmatprep.subr.bf16.mxu0 0
      %566 = vmatpush2.bf16.msra.mxu0 0
      %567 = vmatprep.subr.bf16.mxu0 0
      %568 = vmatpush2.bf16.msra.mxu0 0
      %569 = vmatprep.subr.bf16.mxu0 0
      %570 = vmatpush2.bf16.msra.mxu0 0
      %571 = vmatprep.subr.bf16.mxu0 0
      %572 = vmatpush2.bf16.msra.mxu0 0
      %573 = vmatprep.subr.bf16.mxu0 0
      %574 = vmatpush2.bf16.msra.mxu0 0
      %575 = vmatprep.subr.bf16.mxu0 0
      %576 = vmatpush2.bf16.msra.mxu0 0
      %577 = vmatprep.mubr.bf16.mxu0 0
      %578 = vmatmul.mubr.bf16.gmra.mxu0 %v531
      %v579 = vpop.f32.mrf.mxu0
      %v580 = vadd.f32 0.0, %v579
      %v581 = vpop.f32.mrf.mxu0
      %v582 = vpop.f32.mrf.mxu0
      %v583 = vadd.f32 0.0, %v582
      %v584 = vpop.f32.mrf.mxu0
      %585 = vmatprep.mubr.bf16.mxu0 0
      %586 = vmatmul.mubr.bf16.gmra.mxu0 %v534
      %v587 = vpop.f32.mrf.mxu0
      %v588 = vadd.f32 0.0, %v587
      %v589 = vpop.f32.mrf.mxu0
      %v590 = vpop.f32.mrf.mxu0
      %v591 = vadd.f32 0.0, %v590
      %v592 = vpop.f32.mrf.mxu0
      %593 = vmatprep.mubr.bf16.mxu0 0
      %594 = vmatmul.mubr.bf16.gmra.mxu0 %v537
      %v595 = vpop.f32.mrf.mxu0
      %v596 = vadd.f32 0.0, %v595
      %v597 = vpop.f32.mrf.mxu0
      %v598 = vpop.f32.mrf.mxu0
      %v599 = vadd.f32 0.0, %v598
      %v600 = vpop.f32.mrf.mxu0
      %601 = vmatprep.mubr.bf16.mxu0 0
      %602 = vmatmul.mubr.bf16.gmra.mxu0 %v540
      %v603 = vpop.f32.mrf.mxu0
      %v604 = vadd.f32 0.0, %v603
      %v605 = vpop.f32.mrf.mxu0
      %v606 = vpop.f32.mrf.mxu0
      %v607 = vadd.f32 0.0, %v606
      %v608 = vpop.f32.mrf.mxu0
      %609 = vmatprep.mubr.bf16.mxu0 0
      %610 = vmatmul.mubr.bf16.gmra.mxu0 %v543
      %v611 = vpop.f32.mrf.mxu0
      %v612 = vadd.f32 0.0, %v611
      %v613 = vpop.f32.mrf.mxu0
      %v614 = vpop.f32.mrf.mxu0
      %v615 = vadd.f32 0.0, %v614
      %v616 = vpop.f32.mrf.mxu0
      %617 = vdwg.mxu0
      %v630 = vunpack.c.l.b16 %v321
      %v631 = vunpack.c.l.b16 %v322
      %v632 = vunpack.c.l.b16 %v323
      %v633 = vunpack.c.l.b16 %v324
      %v634 = vunpack.c.l.b16 %v325
      %v635 = vunpack.c.l.b16 %v326
      %v636 = vunpack.c.l.b16 %v327
      %v637 = vunpack.c.l.b16 %v328
      %v638 = vunpack.c.l.b16 %v329
      %v639 = vunpack.c.l.b16 %v330
      %v640 = vunpack.c.l.b16 %v331
      %v641 = vunpack.c.l.b16 %v332
      %v642 = vpack.c.b16 %v631, %v630
      %v643 = vpack.c.b16 %v633, %v632
      %v644 = vpack.c.b16 %v635, %v634
      %v645 = vpack.c.b16 %v637, %v636
      %v646 = vpack.c.b16 %v639, %v638
      %v647 = vpack.c.b16 %v641, %v640
      %v654 = vsel %vm529, %v312, 0
      %v656 = vsel %vm529, %v314, 0
      %v658 = vsel %vm529, %v316, 0
      %v660 = vsel %vm529, %v318, 0
      %v662 = vsel %vm529, %v320, 0
      %664 = vmatprep.subr.bf16.mxu0 0
      %665 = vmatpush1.bf16.msra.mxu0 0
      %666 = vmatprep.subr.bf16.mxu0 0
      %667 = vmatpush1.bf16.msra.mxu0 0
      %668 = vmatprep.subr.bf16.mxu0 0
      %669 = vmatpush1.bf16.msra.mxu0 %v647
      %670 = vmatprep.subr.bf16.mxu0 0
      %671 = vmatpush1.bf16.msra.mxu0 %v646
      %672 = vmatprep.subr.bf16.mxu0 0
      %673 = vmatpush1.bf16.msra.mxu0 %v645
      %674 = vmatprep.subr.bf16.mxu0 0
      %675 = vmatpush1.bf16.msra.mxu0 %v644
      %676 = vmatprep.subr.bf16.mxu0 0
      %677 = vmatpush1.bf16.msra.mxu0 %v643
      %678 = vmatprep.subr.bf16.mxu0 0
      %679 = vmatpush1.bf16.msra.mxu0 %v642
      %680 = vmatprep.subr.bf16.mxu0 0
      %681 = vmatpush2.bf16.msra.mxu0 0
      %682 = vmatprep.subr.bf16.mxu0 0
      %683 = vmatpush2.bf16.msra.mxu0 0
      %684 = vmatprep.subr.bf16.mxu0 0
      %685 = vmatpush2.bf16.msra.mxu0 0
      %686 = vmatprep.subr.bf16.mxu0 0
      %687 = vmatpush2.bf16.msra.mxu0 0
      %688 = vmatprep.subr.bf16.mxu0 0
      %689 = vmatpush2.bf16.msra.mxu0 0
      %690 = vmatprep.subr.bf16.mxu0 0
      %691 = vmatpush2.bf16.msra.mxu0 0
      %692 = vmatprep.subr.bf16.mxu0 0
      %693 = vmatpush2.bf16.msra.mxu0 0
      %694 = vmatprep.subr.bf16.mxu0 0
      %695 = vmatpush2.bf16.msra.mxu0 0
      %696 = vmatprep.mubr.bf16.mxu0 0
      %697 = vmatmul.mubr.bf16.gmra.mxu0 %v654
      %v698 = vpop.f32.mrf.mxu0
      %v699 = vadd.f32 %v580, %v698
      %v700 = vpop.f32.mrf.mxu0
      %v701 = vpop.f32.mrf.mxu0
      %v702 = vadd.f32 %v583, %v701
      %v703 = vpop.f32.mrf.mxu0
      %704 = vmatprep.mubr.bf16.mxu0 0
      %705 = vmatmul.mubr.bf16.gmra.mxu0 %v656
      %v706 = vpop.f32.mrf.mxu0
      %v707 = vadd.f32 %v588, %v706
      %v708 = vpop.f32.mrf.mxu0
      %v709 = vpop.f32.mrf.mxu0
      %v710 = vadd.f32 %v591, %v709
      %v711 = vpop.f32.mrf.mxu0
      %712 = vmatprep.mubr.bf16.mxu0 0
      %713 = vmatmul.mubr.bf16.gmra.mxu0 %v658
      %v714 = vpop.f32.mrf.mxu0
      %v715 = vadd.f32 %v596, %v714
      %v716 = vpop.f32.mrf.mxu0
      %v717 = vpop.f32.mrf.mxu0
      %v718 = vadd.f32 %v599, %v717
      %v719 = vpop.f32.mrf.mxu0
      %720 = vmatprep.mubr.bf16.mxu0 0
      %721 = vmatmul.mubr.bf16.gmra.mxu0 %v660
      %v722 = vpop.f32.mrf.mxu0
      %v723 = vadd.f32 %v604, %v722
      %v724 = vpop.f32.mrf.mxu0
      %v725 = vpop.f32.mrf.mxu0
      %v726 = vadd.f32 %v607, %v725
      %v727 = vpop.f32.mrf.mxu0
      %728 = vmatprep.mubr.bf16.mxu0 0
      %729 = vmatmul.mubr.bf16.gmra.mxu0 %v662
      %v730 = vpop.f32.mrf.mxu0
      %v731 = vadd.f32 %v612, %v730
      %v732 = vpop.f32.mrf.mxu0
      %v733 = vpop.f32.mrf.mxu0
      %v734 = vadd.f32 %v615, %v733
      %v735 = vpop.f32.mrf.mxu0
      %736 = vdwg.mxu0
      %v737 = vld [vmem:[%s165 + $0x8] sm:$0xc]
      %v738 = vld [vmem:[%s165 + $0xc] sm:$0xf]
      %v739 = vld [vmem:[%s165 + $0x10] sm:$0xf]
      %v740 = vld [vmem:[%s165 + $0x14] sm:$0xf]
      %v741 = vld [vmem:[%s165 + $0x18] sm:$0xf]
      %v742 = vld [vmem:[%s165 + $0x1c] sm:$0xf]
      %v743 = vld [vmem:[%s165 + $0x20] sm:$0xf]
      %v744 = vld [vmem:[%s165 + $0x24] sm:$0xf]
      %v745 = vld [vmem:[%s165 + $0x28] sm:$0xf]
      %v746 = vld [vmem:[%s165 + $0x2c] sm:$0xf]
      %v747 = vld [vmem:[%s165 + $0x30] sm:$0x3]
      %v748 = vld [vmem:[%s165 + $0x30] sm:$0x7]
      %v749 = vld [vmem:[%s165 + $0x8] sm:$0x8]
      %v761 = vunpack.c.l.b16 %v737
      %v762 = vunpack.c.l.b16 %v738
      %v763 = vunpack.c.l.b16 %v739
      %v764 = vunpack.c.l.b16 %v740
      %v765 = vunpack.c.l.b16 %v741
      %v766 = vunpack.c.l.b16 %v742
      %v767 = vunpack.c.l.b16 %v743
      %v768 = vunpack.c.l.b16 %v744
      %v769 = vunpack.c.l.b16 %v745
      %v770 = vunpack.c.l.b16 %v746
      %v771 = vunpack.c.l.b16 %v747
      %v772 = vpack.c.b16 %v762, %v761
      %v773 = vpack.c.b16 %v764, %v763
      %v774 = vpack.c.b16 %v766, %v765
      %v775 = vpack.c.b16 %v768, %v767
      %v776 = vpack.c.b16 %v770, %v769
      %v777 = vpack.c.b16 %v771, %v771
      %v779 = vunpack.c.l.b16 %v748
      %v780 = vpack.c.b16 %v779, %v779
      %v782 = vshrl.u32 %v772, 16
      %v784 = vshll.u32 %v772, 16
      %v786 = vrot.slane %v784, 1
      %v787 = vor.u32 %v782, %v786
      %v789 = vshll.u32 %v773, 16
      %v791 = vrot.slane %v789, 1
      %v792 = vsel %vm219, %v787, %v791
      %v793 = vshrl.u32 %v773, 16
      %v795 = vor.u32 %v793, %v791
      %v797 = vshll.u32 %v774, 16
      %v799 = vrot.slane %v797, 1
      %v800 = vsel %vm219, %v795, %v799
      %v801 = vshrl.u32 %v774, 16
      %v803 = vor.u32 %v801, %v799
      %v805 = vshll.u32 %v775, 16
      %v807 = vrot.slane %v805, 1
      %v808 = vsel %vm219, %v803, %v807
      %v809 = vshrl.u32 %v775, 16
      %v811 = vor.u32 %v809, %v807
      %v813 = vshll.u32 %v776, 16
      %v815 = vrot.slane %v813, 1
      %v816 = vsel %vm219, %v811, %v815
      %v817 = vshrl.u32 %v776, 16
      %v819 = vor.u32 %v817, %v815
      %v821 = vshll.u32 %v780, 16
      %v823 = vrot.slane %v821, 1
      %v824 = vsel %vm219, %v819, %v823
      %v825 = vshrl.u32 %v780, 16
      %v827 = vor.u32 %v825, %v823
      %828 = vrot.lane.b32.xlu0 %v792, 32
      %v829 = vpop.permute.xlu0 %828
      %830 = vrot.lane.b32.xlu0 %v800, 32
      %v831 = vpop.permute.xlu0 %830
      %832 = vrot.lane.b32.xlu0 %v808, 32
      %v833 = vpop.permute.xlu0 %832
      %834 = vrot.lane.b32.xlu0 %v816, 32
      %v835 = vpop.permute.xlu0 %834
      %836 = vrot.lane.b32.xlu0 %v824, 32
      %v837 = vpop.permute.xlu0 %836
      %838 = vrot.lane.b32.xlu0 %v827, 32
      %v839 = vpop.permute.xlu0 %838
      %v841 = vunpack.c.l.b16 %v749
      %v842 = vpack.c.b16 %v762, %v841
      %v843 = vrot.slane %v842, 1
      %v844 = vrot.slane %v773, 1
      %v845 = vsel %vm277, %v843, %v844
      %v846 = vrot.slane %v774, 1
      %v847 = vsel %vm277, %v844, %v846
      %v848 = vrot.slane %v775, 1
      %v849 = vsel %vm277, %v846, %v848
      %v850 = vrot.slane %v776, 1
      %v851 = vsel %vm277, %v848, %v850
      %v852 = vrot.slane %v780, 1
      %v853 = vsel %vm277, %v850, %v852
      %854 = vrot.lane.b32.xlu0 %v845, 64
      %v855 = vpop.permute.xlu0 %854
      %856 = vrot.lane.b32.xlu0 %v847, 64
      %v857 = vpop.permute.xlu0 %856
      %858 = vrot.lane.b32.xlu0 %v849, 64
      %v859 = vpop.permute.xlu0 %858
      %860 = vrot.lane.b32.xlu0 %v851, 64
      %v861 = vpop.permute.xlu0 %860
      %862 = vrot.lane.b32.xlu0 %v853, 64
      %v863 = vpop.permute.xlu0 %862
      %864 = vrot.lane.b32.xlu0 %v852, 64
      %v865 = vpop.permute.xlu0 %864
      %v867 = vsel %vm299, %v772, %v829
      %v869 = vsel %vm299, %v773, %v831
      %v871 = vsel %vm299, %v774, %v833
      %v873 = vsel %vm299, %v775, %v835
      %v875 = vsel %vm299, %v776, %v837
      %v878 = vsel %vm299, %v777, %v839
      %v880 = vsel %vm310, %v867, %v855
      %v882 = vsel %vm310, %v869, %v857
      %v884 = vsel %vm310, %v871, %v859
      %v886 = vsel %vm310, %v873, %v861
      %v888 = vsel %vm310, %v875, %v863
      %v890 = vsel %vm310, %v878, %v865
      %s891 = scalar_lea.vmem %s1, 96
      %v892 = vld [vmem:[%s891] sm:$0xf]
      %v893 = vld [vmem:[%s891 + $0x4] sm:$0xf]
      %v894 = vld [vmem:[%s891 + $0x8] sm:$0xf]
      %v895 = vld [vmem:[%s891 + $0xc] sm:$0xf]
      %v896 = vld [vmem:[%s891 + $0x10] sm:$0xf]
      %v897 = vld [vmem:[%s891 + $0x14] sm:$0xf]
      %v898 = vld [vmem:[%s891 + $0x18] sm:$0xf]
      %v899 = vld [vmem:[%s891 + $0x1c] sm:$0xf]
      %v900 = vld [vmem:[%s891 + $0x20] sm:$0xf]
      %v901 = vld [vmem:[%s891 + $0x24] sm:$0xf]
      %v902 = vld [vmem:[%s891 + $0x28] sm:$0xf]
      %v903 = vld [vmem:[%s891 + $0x2c] sm:$0xf]
      %vm910 = vcmask 1045504
      %v911 = vrot.slane %v880, 2
      %v912 = vrot.slane %v882, 2
      %v913 = vsel %vm910, %v911, %v912
      %v914 = vrot.slane %v884, 2
      %v915 = vsel %vm910, %v912, %v914
      %v916 = vrot.slane %v886, 2
      %v917 = vsel %vm910, %v914, %v916
      %v918 = vrot.slane %v888, 2
      %v919 = vsel %vm910, %v916, %v918
      %v920 = vrot.slane %v890, 2
      %v921 = vsel %vm910, %v918, %v920
      %v934 = vunpack.c.l.b16 %v892
      %v935 = vunpack.c.l.b16 %v893
      %v936 = vunpack.c.l.b16 %v894
      %v937 = vunpack.c.l.b16 %v895
      %v938 = vunpack.c.l.b16 %v896
      %v939 = vunpack.c.l.b16 %v897
      %v940 = vunpack.c.l.b16 %v898
      %v941 = vunpack.c.l.b16 %v899
      %v942 = vunpack.c.l.b16 %v900
      %v943 = vunpack.c.l.b16 %v901
      %v944 = vunpack.c.l.b16 %v902
      %v945 = vunpack.c.l.b16 %v903
      %v946 = vpack.c.b16 %v935, %v934
      %v947 = vpack.c.b16 %v937, %v936
      %v948 = vpack.c.b16 %v939, %v938
      %v949 = vpack.c.b16 %v941, %v940
      %v950 = vpack.c.b16 %v943, %v942
      %v951 = vpack.c.b16 %v945, %v944
      %v959 = vsel %vm529, %v913, 0
      %v962 = vsel %vm529, %v915, 0
      %v965 = vsel %vm529, %v917, 0
      %v968 = vsel %vm529, %v919, 0
      %v971 = vsel %vm529, %v921, 0
      %973 = vmatprep.subr.bf16.mxu0 0
      %974 = vmatpush1.bf16.msra.mxu0 0
      %975 = vmatprep.subr.bf16.mxu0 0
      %976 = vmatpush1.bf16.msra.mxu0 0
      %977 = vmatprep.subr.bf16.mxu0 0
      %978 = vmatpush1.bf16.msra.mxu0 %v951
      %979 = vmatprep.subr.bf16.mxu0 0
      %980 = vmatpush1.bf16.msra.mxu0 %v950
      %981 = vmatprep.subr.bf16.mxu0 0
      %982 = vmatpush1.bf16.msra.mxu0 %v949
      %983 = vmatprep.subr.bf16.mxu0 0
      %984 = vmatpush1.bf16.msra.mxu0 %v948
      %985 = vmatprep.subr.bf16.mxu0 0
      %986 = vmatpush1.bf16.msra.mxu0 %v947
      %987 = vmatprep.subr.bf16.mxu0 0
      %988 = vmatpush1.bf16.msra.mxu0 %v946
      %989 = vmatprep.subr.bf16.mxu0 0
      %990 = vmatpush2.bf16.msra.mxu0 0
      %991 = vmatprep.subr.bf16.mxu0 0
      %992 = vmatpush2.bf16.msra.mxu0 0
      %993 = vmatprep.subr.bf16.mxu0 0
      %994 = vmatpush2.bf16.msra.mxu0 0
      %995 = vmatprep.subr.bf16.mxu0 0
      %996 = vmatpush2.bf16.msra.mxu0 0
      %997 = vmatprep.subr.bf16.mxu0 0
      %998 = vmatpush2.bf16.msra.mxu0 0
      %999 = vmatprep.subr.bf16.mxu0 0
      %1000 = vmatpush2.bf16.msra.mxu0 0
      %1001 = vmatprep.subr.bf16.mxu0 0
      %1002 = vmatpush2.bf16.msra.mxu0 0
      %1003 = vmatprep.subr.bf16.mxu0 0
      %1004 = vmatpush2.bf16.msra.mxu0 0
      %1005 = vmatprep.mubr.bf16.mxu0 0
      %1006 = vmatmul.mubr.bf16.gmra.mxu0 %v959
      %v1007 = vpop.f32.mrf.mxu0
      %v1008 = vadd.f32 0.0, %v1007
      %v1009 = vpop.f32.mrf.mxu0
      %v1010 = vpop.f32.mrf.mxu0
      %v1011 = vadd.f32 0.0, %v1010
      %v1012 = vpop.f32.mrf.mxu0
      %1013 = vmatprep.mubr.bf16.mxu0 0
      %1014 = vmatmul.mubr.bf16.gmra.mxu0 %v962
      %v1015 = vpop.f32.mrf.mxu0
      %v1016 = vadd.f32 0.0, %v1015
      %v1017 = vpop.f32.mrf.mxu0
      %v1018 = vpop.f32.mrf.mxu0
      %v1019 = vadd.f32 0.0, %v1018
      %v1020 = vpop.f32.mrf.mxu0
      %1021 = vmatprep.mubr.bf16.mxu0 0
      %1022 = vmatmul.mubr.bf16.gmra.mxu0 %v965
      %v1023 = vpop.f32.mrf.mxu0
      %v1024 = vadd.f32 0.0, %v1023
      %v1025 = vpop.f32.mrf.mxu0
      %v1026 = vpop.f32.mrf.mxu0
      %v1027 = vadd.f32 0.0, %v1026
      %v1028 = vpop.f32.mrf.mxu0
      %1029 = vmatprep.mubr.bf16.mxu0 0
      %1030 = vmatmul.mubr.bf16.gmra.mxu0 %v968
      %v1031 = vpop.f32.mrf.mxu0
      %v1032 = vadd.f32 0.0, %v1031
      %v1033 = vpop.f32.mrf.mxu0
      %v1034 = vpop.f32.mrf.mxu0
      %v1035 = vadd.f32 0.0, %v1034
      %v1036 = vpop.f32.mrf.mxu0
      %1037 = vmatprep.mubr.bf16.mxu0 0
      %1038 = vmatmul.mubr.bf16.gmra.mxu0 %v971
      %v1039 = vpop.f32.mrf.mxu0
      %v1040 = vadd.f32 0.0, %v1039
      %v1041 = vpop.f32.mrf.mxu0
      %v1042 = vpop.f32.mrf.mxu0
      %v1043 = vadd.f32 0.0, %v1042
      %v1044 = vpop.f32.mrf.mxu0
      %1045 = vdwg.mxu0
      %v1046 = vadd.f32 %v699, %v1008
      %v1047 = vadd.f32 %v702, %v1011
      %v1048 = vadd.f32 %v707, %v1016
      %v1049 = vadd.f32 %v710, %v1019
      %v1050 = vadd.f32 %v715, %v1024
      %v1051 = vadd.f32 %v718, %v1027
      %v1052 = vadd.f32 %v723, %v1032
      %v1053 = vadd.f32 %v726, %v1035
      %v1054 = vadd.f32 %v731, %v1040
      %v1055 = vadd.f32 %v734, %v1043
      %1056 = vst.msk [vmem:[#allocation2] sm:$0xff] %vm310, %v1046
      %1057 = vst.msk [vmem:[#allocation2 + $0x8] sm:$0xff] %vm310, %v1047
      %1058 = vst.msk [vmem:[#allocation2 + $0x10] sm:$0xff] %vm310, %v1048
      %1059 = vst.msk [vmem:[#allocation2 + $0x18] sm:$0xff] %vm310, %v1049
      %1060 = vst.msk [vmem:[#allocation2 + $0x20] sm:$0xff] %vm310, %v1050
      %1061 = vst.msk [vmem:[#allocation2 + $0x28] sm:$0xff] %vm310, %v1051
      %1062 = vst.msk [vmem:[#allocation2 + $0x30] sm:$0xff] %vm310, %v1052
      %1063 = vst.msk [vmem:[#allocation2 + $0x38] sm:$0xff] %vm310, %v1053
      %1064 = vst.msk [vmem:[#allocation2 + $0x40] sm:$0xff] %vm310, %v1054
      %1065 = vst.msk [vmem:[#allocation2 + $0x48] sm:$0xff] %vm310, %v1055
      %v1066 = vld [vmem:[#allocation2] ss:$2 sm:$0xf]
      %s1067 = scalar_lea.vmem [#allocation2], 1
      %v1068 = vld [vmem:[%s1067] ss:$2 sm:$0xf]
      %v1069 = vmax.f32 %v1066, %v1068
      %s1070 = scalar_lea.vmem [#allocation2], 10
      %v1071 = vld [vmem:[%s1070] ss:$2 sm:$0xf]
      %s1072 = scalar_lea.vmem [#allocation2], 11
      %v1073 = vld [vmem:[%s1072] ss:$2 sm:$0xf]
      %v1074 = vmax.f32 %v1071, %v1073
      %v1075 = vmax.f32 %v1069, %v1074
      %v1077 = vlaneseq
      %v1078 = vshrl.u32 %v1077, 7
      %v1079 = vsub.s32 0, %v1078
      %v1080 = vrot.slane %v172, %v1079
      %v1082 = vadd.f32 %v1075, %v1080
      %v1083 = vmax.f32 %v1082, 0.0
      %v1085 = vrot.slane %v1083, 7
      %vm1087 = vcmask 1040384
      %v1088 = vsel %vm1087, 0.0, %v1085
      %vm1089 = vcmask 1044480
      %v1090 = vsel %vm1089, %v1088, 0.0
      %v1091 = vpack.c.bf16 %v1090, %v1090
      %s1092 = scalar_lea.vmem %s170, 4
      %1093 = vst.msk [vmem:[%s1092] sm:$0x7] %vm173, %v1091
      %s1094 = scalar_lea.vmem [#allocation2], 20
      %v1095 = vld [vmem:[%s1094] ss:$2 sm:$0xf]
      %s1096 = scalar_lea.vmem [#allocation2], 21
      %v1097 = vld [vmem:[%s1096] ss:$2 sm:$0xf]
      %v1098 = vmax.f32 %v1095, %v1097
      %s1099 = scalar_lea.vmem [#allocation2], 30
      %v1100 = vld [vmem:[%s1099] ss:$2 sm:$0xf]
      %s1101 = scalar_lea.vmem [#allocation2], 31
      %v1102 = vld [vmem:[%s1101] ss:$2 sm:$0xf]
      %v1103 = vmax.f32 %v1100, %v1102
      %v1104 = vmax.f32 %v1098, %v1103
      %v1105 = vadd.f32 %v1104, %v1080
      %v1106 = vmax.f32 %v1105, 0.0
      %v1108 = vrot.slane %v1106, 7
      %v1110 = vsel %vm1087, 0.0, %v1108
      %v1111 = vsel %vm1089, %v1110, 0.0
      %v1112 = vpack.c.bf16 %v1111, %v1111
      %s1113 = scalar_lea.vmem %s170, 8
      %1114 = vst.msk [vmem:[%s1113] sm:$0x7] %vm173, %v1112
      %s1115 = scalar_lea.vmem [#allocation2], 40
      %v1116 = vld [vmem:[%s1115] ss:$2 sm:$0xf]
      %s1117 = scalar_lea.vmem [#allocation2], 41
      %v1118 = vld [vmem:[%s1117] ss:$2 sm:$0xf]
      %v1119 = vmax.f32 %v1116, %v1118
      %s1120 = scalar_lea.vmem [#allocation2], 50
      %v1121 = vld [vmem:[%s1120] ss:$2 sm:$0xf]
      %s1122 = scalar_lea.vmem [#allocation2], 51
      %v1123 = vld [vmem:[%s1122] ss:$2 sm:$0xf]
      %v1124 = vmax.f32 %v1121, %v1123
      %v1125 = vmax.f32 %v1119, %v1124
      %v1126 = vadd.f32 %v1125, %v1080
      %v1127 = vmax.f32 %v1126, 0.0
      %v1129 = vrot.slane %v1127, 7
      %v1131 = vsel %vm1087, 0.0, %v1129
      %v1132 = vsel %vm1089, %v1131, 0.0
      %v1133 = vpack.c.bf16 %v1132, %v1132
      %s1134 = scalar_lea.vmem %s170, 12
      %1135 = vst.msk [vmem:[%s1134] sm:$0x7] %vm173, %v1133
      %s1136 = scalar_lea.vmem [#allocation2], 60
      %v1137 = vld [vmem:[%s1136] ss:$2 sm:$0xf]
      %s1138 = scalar_lea.vmem [#allocation2], 61
      %v1139 = vld [vmem:[%s1138] ss:$2 sm:$0xf]
      %v1140 = vmax.f32 %v1137, %v1139
      %s1141 = scalar_lea.vmem [#allocation2], 70
      %v1142 = vld [vmem:[%s1141] ss:$2 sm:$0xf]
      %s1143 = scalar_lea.vmem [#allocation2], 71
      %v1144 = vld [vmem:[%s1143] ss:$2 sm:$0xf]
      %v1145 = vmax.f32 %v1142, %v1144
      %v1146 = vmax.f32 %v1140, %v1145
      %v1147 = vadd.f32 %v1146, %v1080
      %v1148 = vmax.f32 %v1147, 0.0
      %v1150 = vrot.slane %v1148, 7
      %v1152 = vsel %vm1087, 0.0, %v1150
      %v1153 = vsel %vm1089, %v1152, 0.0
      %v1154 = vpack.c.bf16 %v1153, %v1153
      %s1155 = scalar_lea.vmem %s170, 16
      %1156 = vst.msk [vmem:[%s1155] sm:$0x7] %vm173, %v1154
      %p1157 = scmp.lt.s32.totalorder %s14, 1
      %s1158 = scalar_select %p1157, %s14, 1
      %s1159 = smul.addr %s1158, 7
      %s1160 = smul.addr %s1159, 4
      %s1161 = scalar_lea.vmem %s3, %s1160
      // Predicated region
      $region33: #{cnn_forward.4} parent=31 // pred_check
        %p1162 = pneg %p100
      $region34: #{cnn_forward.4} parent=31 // pred_check_branch
        %1164 = sbr.rel (%p1162) target = $region36
      $region35: #{cnn_forward.4} parent=31 // pred_region
        _
      $region36: #{cnn_forward.4} parent=31 // pred_fallthru
        _
    $region32: #{cnn_forward.4} parent=5 // pred_fallthru
      _
    %p1165 = scmp.le.s32.totalorder 2, %s9
    // Predicated region
    $region37: #{cnn_forward.4} parent=5 // pred_check
      %p1166 = pneg %p1165
    $region38: #{cnn_forward.4} parent=5 // pred_check_branch
      %1168 = sbr.rel (%p1166) target = $region40
    $region39: #{cnn_forward.4} parent=5 // pred_region
      %s1169 = ssub.s32 %s9, 2
      // Predicated region
      $region41: #{cnn_forward.4} parent=39 // pred_check
        %p1170 = pneg %p106
      $region42: #{cnn_forward.4} parent=39 // pred_check_branch
        %1172 = sbr.rel (%p1170) target = $region44
      $region43: #{cnn_forward.4} parent=39 // pred_region
        %p1173 = scmp.lt.s32.totalorder %s15, 1
        %s1174 = scalar_select %p1173, %s15, 1
        %s1175 = smul.addr %s1174, 7
        %s1176 = smul.addr %s1175, 4
        %s1177 = scalar_lea.vmem %s3, %s1176
      $region44: #{cnn_forward.4} parent=39 // pred_fallthru
        _
    $region40: #{cnn_forward.4} parent=5 // pred_fallthru
      _
  $region6: #{cnn_forward.4} parent=0 // loop_footer
    %s13 = sadd.s32 1, %s9
  $region7: #{cnn_forward.4} parent=0 // loop_footer_branch
    %8 = sbr.rel target = $region3
  $region8: #{cnn_forward.4} parent=0 // loop_exit
    _

// kernel: cnn_forward.5
$region0: #{cnn_forward.5}
  #allocation0 [shape = 'u32[]', space=smem, size = 0x4, offset = 0x4, fixed_abs, tag = 'smem constant byte address 0x4 - core index']
  #allocation1 [shape = 'u32[144,128]{1,0:T(1,128)}', space=vmem, size = 0x12000, scoped, tag = 'internal scratch']
  #allocation2 [shape = 'f32[24,128]{1,0:T(8,128)}', space=vmem, size = 0x3000, scoped, tag = 'scratch operand']
  %s0 = inlined_call_operand.vmem [shape: bf16[2,42,64], index: 0, kind: input, shape index: {}]
  %s1 = inlined_call_operand.vmem [shape: bf16[3,192,128], index: 1, kind: input, shape index: {}]
  %s2 = inlined_call_operand.vmem [shape: f32[1,128], index: 2, kind: input, shape index: {}]
  %s3 = inlined_call_operand.vmem [shape: bf16[128,256], index: 3, kind: input, shape index: {}]
  %s4 = inlined_call_operand.vmem [shape: f32[1,256], index: 4, kind: input, shape index: {}]
  %s5 = inlined_call_operand.vmem [shape: bf16[256,128], index: 5, kind: input, shape index: {}]
  %s6 = inlined_call_operand.vmem [shape: f32[1,128], index: 6, kind: input, shape index: {}]
  %s7 = inlined_call_operand.hbm [shape: f32[2,1,128], index: 7, kind: output, shape index: {}]
  %s8 = sld [smem:[#allocation0]]
  $region61: #{cnn_forward.5} parent=0
    _
  %s10 = ssub.s32 1, %s8
  %s11 = scalar_select 0, %s10, %s8
  $region1: #{cnn_forward.5} parent=0
    #allocation3 [shape = 'u8[1024]{0}', space=vmem, size = 0x400, scoped, tag = 'output window, operand 0']
    #allocation4 [shape = 's32[2]{0}', space=sflag, size = 0x8, scoped, tag = 'scoped memory for cnn_forward.5']
    %12 = vsyncpa [#allocation4], 0
    %s13 = scalar_lea.sflag [#allocation4], 1
    %14 = vsyncpa %s13, 0
    loop: start=0, step=1, limit=4
    $region2: #{cnn_forward.5} parent=1 // loop_pre_header
      _
    $region3: #{cnn_forward.5} parent=1 // loop_header
      %s16 = sphi 0, %s20
      %p17 = scmp.ge.s32.totalorder %s16, 4
      %s26 = sphi 0, %s28
      %s29 = sphi 0, %s26
      %s30 = sphi 0, %s29
      %s46 = sphi 0, %s30
      %s50 = sphi 0, %s50
      %s52 = sphi 0, %s50
      %s53 = sphi 0, %s52
      %s67 = sphi 0, %s53
      %s71 = sphi 0, %s71
      %s73 = sphi 0, %s71
      %s74 = sphi 0, %s73
      %s88 = sphi 0, %s74
      %s92 = sphi 0, %s92
      %s94 = sphi 0, %s92
      %s95 = sphi 0, %s94
      %s109 = sphi 0, %s95
      %s113 = sphi 0, %s113
      %s115 = sphi 0, %s113
      %s116 = sphi 0, %s115
      %s130 = sphi 0, %s116
      %s134 = sphi 0, %s134
      %s136 = sphi 0, %s134
      %s137 = sphi 0, %s136
      %s151 = sphi 0, %s137
      %s155 = sphi 0, %s155
      %s157 = sphi 0, %s155
      %s158 = sphi 0, %s157
      %s172 = sphi 0, %s158
      %s178 = sphi 0, %s180
      %s181 = sphi 0, %s178
      %s182 = sphi 0, %s181
      %s198 = sphi 0, %s182
    $region4: #{cnn_forward.5} parent=1 // loop_header_branch
      %19 = sbr.rel (%p17) target = $region8
    $region5: #{cnn_forward.5} parent=1 // loop_body
      %s21 = ssub.s32 %s16, 1
      %s22 = ssub.s32 %s16, 2
      %s23 = sadd.s32 %s16, 1
      %s24 = ssub.s32 %s16, %s23
      %p25 = scmp.eq.s32.totalorder %s24, 0
      %s27 = sadd.s32 %s26, 1
      %s28 = scalar_select %p25, %s26, %s27
      %p31 = pneg %p25
      %p32 = scmp.eq.s32.totalorder %s16, 1
      %p33 = por %p31, %p32
      %p34 = scmp.ne.s32.totalorder %s26, %s29
      %p35 = scmp.eq.s32.totalorder %s16, 0
      %p36 = por %p34, %p35
      %p37 = scmp.ne.s32.totalorder %s26, %s29
      %p38 = scmp.eq.s32.totalorder %s21, 1
      %p39 = por %p37, %p38
      %p40 = scmp.ne.s32.totalorder %s29, %s30
      %p41 = scmp.eq.s32.totalorder %s21, 0
      %p42 = por %p40, %p41
      %p43 = scmp.ne.s32.totalorder %s29, %s30
      %p44 = scmp.eq.s32.totalorder %s22, 1
      %p45 = por %p43, %p44
      %p47 = scmp.ne.s32.totalorder %s30, %s46
      %p48 = scmp.eq.s32.totalorder %s22, 0
      %p49 = por %p47, %p48
      %s51 = sadd.s32 %s50, 1
      %p54 = scmp.eq.s32.totalorder %s16, 1
      %p55 = scmp.ne.s32.totalorder %s50, %s52
      %p56 = scmp.eq.s32.totalorder %s16, 0
      %p57 = por %p55, %p56
      %p58 = scmp.ne.s32.totalorder %s50, %s52
      %p59 = scmp.eq.s32.totalorder %s21, 1
      %p60 = por %p58, %p59
      %p61 = scmp.ne.s32.totalorder %s52, %s53
      %p62 = scmp.eq.s32.totalorder %s21, 0
      %p63 = por %p61, %p62
      %p64 = scmp.ne.s32.totalorder %s52, %s53
      %p65 = scmp.eq.s32.totalorder %s22, 1
      %p66 = por %p64, %p65
      %p68 = scmp.ne.s32.totalorder %s53, %s67
      %p69 = scmp.eq.s32.totalorder %s22, 0
      %p70 = por %p68, %p69
      %s72 = sadd.s32 %s71, 1
      %p75 = scmp.eq.s32.totalorder %s16, 1
      %p76 = scmp.ne.s32.totalorder %s71, %s73
      %p77 = scmp.eq.s32.totalorder %s16, 0
      %p78 = por %p76, %p77
      %p79 = scmp.ne.s32.totalorder %s71, %s73
      %p80 = scmp.eq.s32.totalorder %s21, 1
      %p81 = por %p79, %p80
      %p82 = scmp.ne.s32.totalorder %s73, %s74
      %p83 = scmp.eq.s32.totalorder %s21, 0
      %p84 = por %p82, %p83
      %p85 = scmp.ne.s32.totalorder %s73, %s74
      %p86 = scmp.eq.s32.totalorder %s22, 1
      %p87 = por %p85, %p86
      %p89 = scmp.ne.s32.totalorder %s74, %s88
      %p90 = scmp.eq.s32.totalorder %s22, 0
      %p91 = por %p89, %p90
      %s93 = sadd.s32 %s92, 1
      %p96 = scmp.eq.s32.totalorder %s16, 1
      %p97 = scmp.ne.s32.totalorder %s92, %s94
      %p98 = scmp.eq.s32.totalorder %s16, 0
      %p99 = por %p97, %p98
      %p100 = scmp.ne.s32.totalorder %s92, %s94
      %p101 = scmp.eq.s32.totalorder %s21, 1
      %p102 = por %p100, %p101
      %p103 = scmp.ne.s32.totalorder %s94, %s95
      %p104 = scmp.eq.s32.totalorder %s21, 0
      %p105 = por %p103, %p104
      %p106 = scmp.ne.s32.totalorder %s94, %s95
      %p107 = scmp.eq.s32.totalorder %s22, 1
      %p108 = por %p106, %p107
      %p110 = scmp.ne.s32.totalorder %s95, %s109
      %p111 = scmp.eq.s32.totalorder %s22, 0
      %p112 = por %p110, %p111
      %s114 = sadd.s32 %s113, 1
      %p117 = scmp.eq.s32.totalorder %s16, 1
      %p118 = scmp.ne.s32.totalorder %s113, %s115
      %p119 = scmp.eq.s32.totalorder %s16, 0
      %p120 = por %p118, %p119
      %p121 = scmp.ne.s32.totalorder %s113, %s115
      %p122 = scmp.eq.s32.totalorder %s21, 1
      %p123 = por %p121, %p122
      %p124 = scmp.ne.s32.totalorder %s115, %s116
      %p125 = scmp.eq.s32.totalorder %s21, 0
      %p126 = por %p124, %p125
      %p127 = scmp.ne.s32.totalorder %s115, %s116
      %p128 = scmp.eq.s32.totalorder %s22, 1
      %p129 = por %p127, %p128
      %p131 = scmp.ne.s32.totalorder %s116, %s130
      %p132 = scmp.eq.s32.totalorder %s22, 0
      %p133 = por %p131, %p132
      %s135 = sadd.s32 %s134, 1
      %p138 = scmp.eq.s32.totalorder %s16, 1
      %p139 = scmp.ne.s32.totalorder %s134, %s136
      %p140 = scmp.eq.s32.totalorder %s16, 0
      %p141 = por %p139, %p140
      %p142 = scmp.ne.s32.totalorder %s134, %s136
      %p143 = scmp.eq.s32.totalorder %s21, 1
      %p144 = por %p142, %p143
      %p145 = scmp.ne.s32.totalorder %s136, %s137
      %p146 = scmp.eq.s32.totalorder %s21, 0
      %p147 = por %p145, %p146
      %p148 = scmp.ne.s32.totalorder %s136, %s137
      %p149 = scmp.eq.s32.totalorder %s22, 1
      %p150 = por %p148, %p149
      %p152 = scmp.ne.s32.totalorder %s137, %s151
      %p153 = scmp.eq.s32.totalorder %s22, 0
      %p154 = por %p152, %p153
      %s156 = sadd.s32 %s155, 1
      %p159 = scmp.eq.s32.totalorder %s16, 1
      %p160 = scmp.ne.s32.totalorder %s155, %s157
      %p161 = scmp.eq.s32.totalorder %s16, 0
      %p162 = por %p160, %p161
      %p163 = scmp.ne.s32.totalorder %s155, %s157
      %p164 = scmp.eq.s32.totalorder %s21, 1
      %p165 = por %p163, %p164
      %p166 = scmp.ne.s32.totalorder %s157, %s158
      %p167 = scmp.eq.s32.totalorder %s21, 0
      %p168 = por %p166, %p167
      %p169 = scmp.ne.s32.totalorder %s157, %s158
      %p170 = scmp.eq.s32.totalorder %s22, 1
      %p171 = por %p169, %p170
      %p173 = scmp.ne.s32.totalorder %s158, %s172
      %p174 = scmp.eq.s32.totalorder %s22, 0
      %p175 = por %p173, %p174
      %s176 = ssub.s32 %s16, %s23
      %p177 = scmp.eq.s32.totalorder %s176, 0
      %s179 = sadd.s32 %s178, 1
      %s180 = scalar_select %p177, %s178, %s179
      %p183 = pneg %p177
      %p184 = scmp.eq.s32.totalorder %s16, 1
      %p185 = por %p183, %p184
      %p186 = scmp.ne.s32.totalorder %s178, %s181
      %p187 = scmp.eq.s32.totalorder %s16, 0
      %p188 = por %p186, %p187
      %p189 = scmp.ne.s32.totalorder %s178, %s181
      %p190 = scmp.eq.s32.totalorder %s21, 1
      %p191 = por %p189, %p190
      %p192 = scmp.ne.s32.totalorder %s181, %s182
      %p193 = scmp.eq.s32.totalorder %s21, 0
      %p194 = por %p192, %p193
      %p195 = scmp.ne.s32.totalorder %s181, %s182
      %p196 = scmp.eq.s32.totalorder %s22, 1
      %p197 = por %p195, %p196
      %p199 = scmp.ne.s32.totalorder %s182, %s198
      %p200 = scmp.eq.s32.totalorder %s22, 0
      %p201 = por %p199, %p200
      %p202 = scmp.le.s32.totalorder 1, %s16
      %p203 = scmp.lt.s32.totalorder %s16, 3
      %p204 = pnand %p202, %p203
      %p205 = pneg %p204
      // Predicated region
      $region9: #{cnn_forward.5} parent=5 // pred_check
        _
      $region10: #{cnn_forward.5} parent=5 // pred_check_branch
        %207 = sbr.rel (%p204) target = $region12
      $region11: #{cnn_forward.5} parent=5 // pred_region
        %s208 = ssub.s32 %s16, 1
        // Predicated region
        $region13: #{cnn_forward.5} parent=11 // pred_check
          %p209 = pneg %p63
        $region14: #{cnn_forward.5} parent=11 // pred_check_branch
          %211 = sbr.rel (%p209) target = $region16
        $region15: #{cnn_forward.5} parent=11 // pred_region
          _
        $region16: #{cnn_forward.5} parent=11 // pred_fallthru
          _
        // Predicated region
        $region17: #{cnn_forward.5} parent=11 // pred_check
          %p212 = pneg %p84
        $region18: #{cnn_forward.5} parent=11 // pred_check_branch
          %214 = sbr.rel (%p212) target = $region20
        $region19: #{cnn_forward.5} parent=11 // pred_region
          _
        $region20: #{cnn_forward.5} parent=11 // pred_fallthru
          _
        // Predicated region
        $region21: #{cnn_forward.5} parent=11 // pred_check
          %p215 = pneg %p105
        $region22: #{cnn_forward.5} parent=11 // pred_check_branch
          %217 = sbr.rel (%p215) target = $region24
        $region23: #{cnn_forward.5} parent=11 // pred_region
          _
        $region24: #{cnn_forward.5} parent=11 // pred_fallthru
          _
        // Predicated region
        $region25: #{cnn_forward.5} parent=11 // pred_check
          %p218 = pneg %p126
        $region26: #{cnn_forward.5} parent=11 // pred_check_branch
          %220 = sbr.rel (%p218) target = $region28
        $region27: #{cnn_forward.5} parent=11 // pred_region
          _
        $region28: #{cnn_forward.5} parent=11 // pred_fallthru
          _
        // Predicated region
        $region29: #{cnn_forward.5} parent=11 // pred_check
          %p221 = pneg %p147
        $region30: #{cnn_forward.5} parent=11 // pred_check_branch
          %223 = sbr.rel (%p221) target = $region32
        $region31: #{cnn_forward.5} parent=11 // pred_region
          _
        $region32: #{cnn_forward.5} parent=11 // pred_fallthru
          _
        // Predicated region
        $region33: #{cnn_forward.5} parent=11 // pred_check
          %p224 = pneg %p168
        $region34: #{cnn_forward.5} parent=11 // pred_check_branch
          %226 = sbr.rel (%p224) target = $region36
        $region35: #{cnn_forward.5} parent=11 // pred_region
          _
        $region36: #{cnn_forward.5} parent=11 // pred_fallthru
          _
      $region12: #{cnn_forward.5} parent=5 // pred_fallthru
        _
      %p227 = scmp.lt.s32.totalorder %s16, 2
      // Predicated region
      $region37: #{cnn_forward.5} parent=5 // pred_check
        %p228 = pneg %p227
      $region38: #{cnn_forward.5} parent=5 // pred_check_branch
        %230 = sbr.rel (%p228) target = $region40
      $region39: #{cnn_forward.5} parent=5 // pred_region
        // Predicated region
        $region41: #{cnn_forward.5} parent=39 // pred_check
          %p231 = pneg %p36
        $region42: #{cnn_forward.5} parent=39 // pred_check_branch
          %233 = sbr.rel (%p231) target = $region44
        $region43: #{cnn_forward.5} parent=39 // pred_region
          %p234 = scmp.lt.s32.totalorder %s16, 1
          %s235 = scalar_select %p234, %s16, 1
          %s236 = smul.addr %s235, 6
          %s237 = smul.addr %s236, 4
          %s238 = scalar_lea.vmem %s0, %s237
        $region44: #{cnn_forward.5} parent=39 // pred_fallthru
          _
      $region40: #{cnn_forward.5} parent=5 // pred_fallthru
        _
      %p239 = scmp.le.s32.totalorder 1, %s16
      %p240 = scmp.lt.s32.totalorder %s16, 3
      %p241 = pnand %p239, %p240
      %p242 = pneg %p241
      // Predicated region
      $region45: #{cnn_forward.5} parent=5 // pred_check
        _
      $region46: #{cnn_forward.5} parent=5 // pred_check_branch
        %244 = sbr.rel (%p241) target = $region48
      $region47: #{cnn_forward.5} parent=5 // pred_region
        %s245 = ssub.s32 %s16, 1
        %p246 = scmp.lt.s32.totalorder %s21, 1
        %s247 = scalar_select %p246, %s21, 1
        %s248 = smul.addr %s247, 6
        %s249 = smul.addr %s248, 4
        %s250 = scalar_lea.vmem %s0, %s249
        %p251 = pneg %p42
        %p252 = pneg %p39
        %p253 = pneg %p63
        %p254 = pneg %p60
        %p255 = pneg %p84
        %p256 = pneg %p81
        %p257 = pneg %p105
        %p258 = pneg %p102
        %p259 = pneg %p126
        %p260 = pneg %p123
        %p261 = pneg %p147
        %p262 = pneg %p144
        %p263 = pneg %p168
        %p264 = pneg %p165
        %p265 = pneg %p194
        %p266 = pneg %p191
        %s267 = sand.u32 %s181, 1
        %s268 = scalar_lea.sflag [#allocation4], %s267
        %s269 = sand.u32 %s181, 1
        %s270 = scalar_lea.vmem [#allocation3], %s269
        %p271 = scmp.lt.s32.totalorder %s21, 1
        %s272 = scalar_select %p271, %s21, 1
        %s273 = smul.addr %s272, 6
        %s274 = smul.addr %s273, 4
        %s275 = scalar_lea.vmem %s0, %s274
        %v277 = vld [vmem:[%s2] sm:$0x1]
        %v278 = vld [vmem:[%s275] sm:$0xf]
        %v279 = vld [vmem:[%s275 + $0x4] sm:$0xf]
        %v280 = vld [vmem:[%s275 + $0x8] sm:$0xf]
        %v281 = vld [vmem:[%s275 + $0xc] sm:$0x1]
        %v282 = vld [vmem:[%s275] sm:$0xe]
        %v286 = vunpack.c.l.b16 %v278
        %v287 = vunpack.c.l.b16 %v279
        %v288 = vunpack.c.l.b16 %v280
        %v289 = vpack.c.b16 %v287, %v286
        %v290 = vpack.c.b16 %v288, %v288
        %v292 = vunpack.c.l.b16 %v281
        %v293 = vpack.c.b16 %v292, %v288
        %vm294 = vsmask.f32 7424
        %v296 = vshrl.u32 %v289, 16
        %v298 = vshll.u32 %v289, 16
        %v300 = vrot.slane %v298, 1
        %v301 = vor.u32 %v296, %v300
        %v303 = vshll.u32 %v293, 16
        %v305 = vrot.slane %v303, 1
        %v306 = vsel %vm294, %v301, %v305
        %v307 = vshrl.u32 %v293, 16
        %v309 = vor.u32 %v307, %v305
        %310 = vrot.lane.b32.xlu0 %v306, 64
        %v311 = vpop.permute.xlu0 %310
        %312 = vrot.lane.b32.xlu0 %v309, 64
        %v313 = vpop.permute.xlu0 %312
        %v315 = vunpack.c.l.b16 %v282
        %v316 = vpack.c.b16 %v287, %v315
        %vm317 = vcmask 1046528
        %v318 = vrot.slane %v316, 1
        %v319 = vrot.slane %v293, 1
        %v320 = vsel %vm317, %v318, %v319
        %vm321 = vcmask 523264
        %v323 = vsel %vm321, %v289, %v311
        %v327 = vsel %vm321, %v290, %v313
        %v329 = vld [vmem:[%s1] sm:$0xf]
        %v330 = vld [vmem:[%s1 + $0x4] sm:$0xf]
        %v331 = vld [vmem:[%s1 + $0x8] sm:$0xf]
        %v332 = vld [vmem:[%s1 + $0xc] sm:$0xf]
        %v333 = vld [vmem:[%s1 + $0x10] sm:$0xf]
        %v334 = vld [vmem:[%s1 + $0x14] sm:$0xf]
        %v335 = vld [vmem:[%s1 + $0x18] sm:$0xf]
        %v336 = vld [vmem:[%s1 + $0x1c] sm:$0xf]
        %v337 = vld [vmem:[%s1 + $0x20] sm:$0xf]
        %v338 = vld [vmem:[%s1 + $0x24] sm:$0xf]
        %v339 = vld [vmem:[%s1 + $0x28] sm:$0xf]
        %v340 = vld [vmem:[%s1 + $0x2c] sm:$0xf]
        %v341 = vld [vmem:[%s1 + $0x30] sm:$0xf]
        %v342 = vld [vmem:[%s1 + $0x34] sm:$0xf]
        %v343 = vld [vmem:[%s1 + $0x38] sm:$0xf]
        %v344 = vld [vmem:[%s1 + $0x3c] sm:$0xf]
        %v345 = vld [vmem:[%s1 + $0x40] sm:$0xf]
        %v346 = vld [vmem:[%s1 + $0x44] sm:$0xf]
        %v347 = vld [vmem:[%s1 + $0x48] sm:$0xf]
        %v348 = vld [vmem:[%s1 + $0x4c] sm:$0xf]
        %v349 = vld [vmem:[%s1 + $0x50] sm:$0xf]
        %v350 = vld [vmem:[%s1 + $0x54] sm:$0xf]
        %v351 = vld [vmem:[%s1 + $0x58] sm:$0xf]
        %v352 = vld [vmem:[%s1 + $0x5c] sm:$0xf]
        %v353 = vld [vmem:[%s275] sm:$0x8]
        %v354 = vld [vmem:[%s275 + $0xc] sm:$0x7]
        %v355 = vld [vmem:[%s275 + $0xc] sm:$0xf]
        %v358 = vunpack.c.l.b16 %v353
        %v359 = vunpack.c.l.b16 %v354
        %v360 = vpack.c.b16 %v287, %v358
        %v361 = vpack.c.b16 %v359, %v288
        %v363 = vunpack.c.l.b16 %v355
        %v364 = vpack.c.b16 %v363, %v288
        %v366 = vshrl.u32 %v360, 16
        %v368 = vshll.u32 %v360, 16
        %v370 = vrot.slane %v368, 1
        %v371 = vor.u32 %v366, %v370
        %v373 = vshll.u32 %v364, 16
        %v375 = vrot.slane %v373, 1
        %v376 = vsel %vm294, %v371, %v375
        %v377 = vshrl.u32 %v364, 16
        %v379 = vor.u32 %v377, %v375
        %380 = vrot.lane.b32.xlu0 %v376, 64
        %v381 = vpop.permute.xlu0 %380
        %382 = vrot.lane.b32.xlu0 %v379, 64
        %v383 = vpop.permute.xlu0 %382
        %v384 = vpack.c.b16 %v288, %v287
        %v385 = vpack.c.b16 %v363, %v363
        %vm386 = vcmask 1042432
        %v387 = vrot.slane %v384, 5
        %v388 = vrot.slane %v385, 5
        %v389 = vsel %vm386, %v387, %v388
        %v391 = vsel %vm321, %v360, %v381
        %v394 = vsel %vm321, %v361, %v383
        %s395 = scalar_lea.vmem %s1, 96
        %v396 = vld [vmem:[%s395] sm:$0xf]
        %v397 = vld [vmem:[%s395 + $0x4] sm:$0xf]
        %v398 = vld [vmem:[%s395 + $0x8] sm:$0xf]
        %v399 = vld [vmem:[%s395 + $0xc] sm:$0xf]
        %v400 = vld [vmem:[%s395 + $0x10] sm:$0xf]
        %v401 = vld [vmem:[%s395 + $0x14] sm:$0xf]
        %v402 = vld [vmem:[%s395 + $0x18] sm:$0xf]
        %v403 = vld [vmem:[%s395 + $0x1c] sm:$0xf]
        %v404 = vld [vmem:[%s395 + $0x20] sm:$0xf]
        %v405 = vld [vmem:[%s395 + $0x24] sm:$0xf]
        %v406 = vld [vmem:[%s395 + $0x28] sm:$0xf]
        %v407 = vld [vmem:[%s395 + $0x2c] sm:$0xf]
        %v408 = vld [vmem:[%s395 + $0x30] sm:$0xf]
        %v409 = vld [vmem:[%s395 + $0x34] sm:$0xf]
        %v410 = vld [vmem:[%s395 + $0x38] sm:$0xf]
        %v411 = vld [vmem:[%s395 + $0x3c] sm:$0xf]
        %v412 = vld [vmem:[%s395 + $0x40] sm:$0xf]
        %v413 = vld [vmem:[%s395 + $0x44] sm:$0xf]
        %v414 = vld [vmem:[%s395 + $0x48] sm:$0xf]
        %v415 = vld [vmem:[%s395 + $0x4c] sm:$0xf]
        %v416 = vld [vmem:[%s395 + $0x50] sm:$0xf]
        %v417 = vld [vmem:[%s395 + $0x54] sm:$0xf]
        %v418 = vld [vmem:[%s395 + $0x58] sm:$0xf]
        %v419 = vld [vmem:[%s395 + $0x5c] sm:$0xf]
        %vm422 = vcmask 1044480
        %v423 = vrot.slane %v391, 3
        %v424 = vrot.slane %v394, 3
        %v425 = vsel %vm422, %v423, %v424
        %v426 = vrot.slane %v387, 3
        %v427 = vrot.slane %v389, 3
        %v428 = vsel %vm422, %v426, %v427
        %v455 = vunpack.c.l.b16 %v396
        %v456 = vunpack.c.l.b16 %v397
        %v457 = vunpack.c.l.b16 %v398
        %v458 = vunpack.c.l.b16 %v399
        %v459 = vunpack.c.l.b16 %v400
        %v460 = vunpack.c.l.b16 %v401
        %v461 = vunpack.c.l.b16 %v402
        %v462 = vunpack.c.l.b16 %v403
        %v463 = vunpack.c.l.b16 %v404
        %v464 = vunpack.c.l.b16 %v405
        %v465 = vunpack.c.l.b16 %v406
        %v466 = vunpack.c.l.b16 %v407
        %v467 = vunpack.c.l.b16 %v408
        %v468 = vunpack.c.l.b16 %v409
        %v469 = vunpack.c.l.b16 %v410
        %v470 = vunpack.c.l.b16 %v411
        %v471 = vunpack.c.l.b16 %v412
        %v472 = vunpack.c.l.b16 %v413
        %v473 = vunpack.c.l.b16 %v414
        %v474 = vunpack.c.l.b16 %v415
        %v475 = vunpack.c.l.b16 %v416
        %v476 = vunpack.c.l.b16 %v417
        %v477 = vunpack.c.l.b16 %v418
        %v478 = vunpack.c.l.b16 %v419
        %v479 = vpack.c.b16 %v456, %v455
        %v480 = vpack.c.b16 %v458, %v457
        %v481 = vpack.c.b16 %v460, %v459
        %v482 = vpack.c.b16 %v462, %v461
        %v483 = vpack.c.b16 %v464, %v463
        %v484 = vpack.c.b16 %v466, %v465
        %v485 = vpack.c.b16 %v468, %v467
        %v486 = vpack.c.b16 %v470, %v469
        %v487 = vpack.c.b16 %v472, %v471
        %v488 = vpack.c.b16 %v474, %v473
        %v489 = vpack.c.b16 %v476, %v475
        %v490 = vpack.c.b16 %v478, %v477
        %v504 = vsel %vm321, %v428, 0
        %v507 = vsel %vm321, %v427, 0
        %509 = vmatprep.subr.bf16.mxu0 0
        %510 = vmatpush1.bf16.msra.mxu0 %v486
        %511 = vmatprep.subr.bf16.mxu0 0
        %512 = vmatpush1.bf16.msra.mxu0 %v485
        %513 = vmatprep.subr.bf16.mxu0 0
        %514 = vmatpush1.bf16.msra.mxu0 %v484
        %515 = vmatprep.subr.bf16.mxu0 0
        %516 = vmatpush1.bf16.msra.mxu0 %v483
        %517 = vmatprep.subr.bf16.mxu0 0
        %518 = vmatpush1.bf16.msra.mxu0 %v482
        %519 = vmatprep.subr.bf16.mxu0 0
        %520 = vmatpush1.bf16.msra.mxu0 %v481
        %521 = vmatprep.subr.bf16.mxu0 0
        %522 = vmatpush1.bf16.msra.mxu0 %v480
        %523 = vmatprep.subr.bf16.mxu0 0
        %524 = vmatpush1.bf16.msra.mxu0 %v479
        %525 = vmatprep.subr.bf16.mxu0 0
        %526 = vmatpush2.bf16.msra.mxu0 0
        %527 = vmatprep.subr.bf16.mxu0 0
        %528 = vmatpush2.bf16.msra.mxu0 0
        %529 = vmatprep.subr.bf16.mxu0 0
        %530 = vmatpush2.bf16.msra.mxu0 0
        %531 = vmatprep.subr.bf16.mxu0 0
        %532 = vmatpush2.bf16.msra.mxu0 0
        %533 = vmatprep.subr.bf16.mxu0 0
        %534 = vmatpush2.bf16.msra.mxu0 %v490
        %535 = vmatprep.subr.bf16.mxu0 0
        %536 = vmatpush2.bf16.msra.mxu0 %v489
        %537 = vmatprep.subr.bf16.mxu0 0
        %538 = vmatpush2.bf16.msra.mxu0 %v488
        %539 = vmatprep.subr.bf16.mxu0 0
        %540 = vmatpush2.bf16.msra.mxu0 %v487
        %541 = vmatprep.mubr.bf16.mxu0 %v504
        %542 = vmatmul.mubr.bf16.gmra.mxu0 %v425
        %v543 = vpop.f32.mrf.mxu0
        %v544 = vadd.f32 0.0, %v543
        %v545 = vpop.f32.mrf.mxu0
        %v546 = vpop.f32.mrf.mxu0
        %v547 = vadd.f32 0.0, %v546
        %v548 = vpop.f32.mrf.mxu0
        %549 = vmatprep.mubr.bf16.mxu0 %v507
        %550 = vmatmul.mubr.bf16.gmra.mxu0 %v424
        %v551 = vpop.f32.mrf.mxu0
        %v552 = vadd.f32 0.0, %v551
        %v553 = vpop.f32.mrf.mxu0
        %v554 = vpop.f32.mrf.mxu0
        %v555 = vpop.f32.mrf.mxu0
        %556 = vdwg.mxu0
        %v581 = vunpack.c.l.b16 %v329
        %v582 = vunpack.c.l.b16 %v330
        %v583 = vunpack.c.l.b16 %v331
        %v584 = vunpack.c.l.b16 %v332
        %v585 = vunpack.c.l.b16 %v333
        %v586 = vunpack.c.l.b16 %v334
        %v587 = vunpack.c.l.b16 %v335
        %v588 = vunpack.c.l.b16 %v336
        %v589 = vunpack.c.l.b16 %v337
        %v590 = vunpack.c.l.b16 %v338
        %v591 = vunpack.c.l.b16 %v339
        %v592 = vunpack.c.l.b16 %v340
        %v593 = vunpack.c.l.b16 %v341
        %v594 = vunpack.c.l.b16 %v342
        %v595 = vunpack.c.l.b16 %v343
        %v596 = vunpack.c.l.b16 %v344
        %v597 = vunpack.c.l.b16 %v345
        %v598 = vunpack.c.l.b16 %v346
        %v599 = vunpack.c.l.b16 %v347
        %v600 = vunpack.c.l.b16 %v348
        %v601 = vunpack.c.l.b16 %v349
        %v602 = vunpack.c.l.b16 %v350
        %v603 = vunpack.c.l.b16 %v351
        %v604 = vunpack.c.l.b16 %v352
        %v605 = vpack.c.b16 %v582, %v581
        %v606 = vpack.c.b16 %v584, %v583
        %v607 = vpack.c.b16 %v586, %v585
        %v608 = vpack.c.b16 %v588, %v587
        %v609 = vpack.c.b16 %v590, %v589
        %v610 = vpack.c.b16 %v592, %v591
        %v611 = vpack.c.b16 %v594, %v593
        %v612 = vpack.c.b16 %v596, %v595
        %v613 = vpack.c.b16 %v598, %v597
        %v614 = vpack.c.b16 %v600, %v599
        %v615 = vpack.c.b16 %v602, %v601
        %v616 = vpack.c.b16 %v604, %v603
        %v630 = vsel %vm321, %v320, 0
        %v633 = vsel %vm321, %v319, 0
        %635 = vmatprep.subr.bf16.mxu0 0
        %636 = vmatpush1.bf16.msra.mxu0 %v612
        %637 = vmatprep.subr.bf16.mxu0 0
        %638 = vmatpush1.bf16.msra.mxu0 %v611
        %639 = vmatprep.subr.bf16.mxu0 0
        %640 = vmatpush1.bf16.msra.mxu0 %v610
        %641 = vmatprep.subr.bf16.mxu0 0
        %642 = vmatpush1.bf16.msra.mxu0 %v609
        %643 = vmatprep.subr.bf16.mxu0 0
        %644 = vmatpush1.bf16.msra.mxu0 %v608
        %645 = vmatprep.subr.bf16.mxu0 0
        %646 = vmatpush1.bf16.msra.mxu0 %v607
        %647 = vmatprep.subr.bf16.mxu0 0
        %648 = vmatpush1.bf16.msra.mxu0 %v606
        %649 = vmatprep.subr.bf16.mxu0 0
        %650 = vmatpush1.bf16.msra.mxu0 %v605
        %651 = vmatprep.subr.bf16.mxu0 0
        %652 = vmatpush2.bf16.msra.mxu0 0
        %653 = vmatprep.subr.bf16.mxu0 0
        %654 = vmatpush2.bf16.msra.mxu0 0
        %655 = vmatprep.subr.bf16.mxu0 0
        %656 = vmatpush2.bf16.msra.mxu0 0
        %657 = vmatprep.subr.bf16.mxu0 0
        %658 = vmatpush2.bf16.msra.mxu0 0
        %659 = vmatprep.subr.bf16.mxu0 0
        %660 = vmatpush2.bf16.msra.mxu0 %v616
        %661 = vmatprep.subr.bf16.mxu0 0
        %662 = vmatpush2.bf16.msra.mxu0 %v615
        %663 = vmatprep.subr.bf16.mxu0 0
        %664 = vmatpush2.bf16.msra.mxu0 %v614
        %665 = vmatprep.subr.bf16.mxu0 0
        %666 = vmatpush2.bf16.msra.mxu0 %v613
        %667 = vmatprep.mubr.bf16.mxu0 %v630
        %668 = vmatmul.mubr.bf16.gmra.mxu0 %v323
        %v669 = vpop.f32.mrf.mxu0
        %v670 = vadd.f32 %v544, %v669
        %v671 = vpop.f32.mrf.mxu0
        %v672 = vpop.f32.mrf.mxu0
        %v673 = vadd.f32 %v547, %v672
        %v674 = vpop.f32.mrf.mxu0
        %675 = vmatprep.mubr.bf16.mxu0 %v633
        %676 = vmatmul.mubr.bf16.gmra.mxu0 %v327
        %v677 = vpop.f32.mrf.mxu0
        %v678 = vadd.f32 %v552, %v677
        %v679 = vpop.f32.mrf.mxu0
        %v680 = vpop.f32.mrf.mxu0
        %v681 = vpop.f32.mrf.mxu0
        %682 = vdwg.mxu0
        %v683 = vld [vmem:[%s275 + $0x4] sm:$0xc]
        %v684 = vld [vmem:[%s275 + $0x8] sm:$0xf]
        %v685 = vld [vmem:[%s275 + $0xc] sm:$0xf]
        %v686 = vld [vmem:[%s275 + $0x10] sm:$0x3]
        %v687 = vld [vmem:[%s275 + $0x10] sm:$0x7]
        %v688 = vld [vmem:[%s275 + $0x4] sm:$0x8]
        %v693 = vunpack.c.l.b16 %v683
        %v694 = vunpack.c.l.b16 %v684
        %v695 = vunpack.c.l.b16 %v685
        %v696 = vunpack.c.l.b16 %v686
        %v697 = vpack.c.b16 %v694, %v693
        %v698 = vpack.c.b16 %v696, %v695
        %v700 = vunpack.c.l.b16 %v687
        %v701 = vpack.c.b16 %v700, %v695
        %v703 = vshrl.u32 %v697, 16
        %v705 = vshll.u32 %v697, 16
        %v707 = vrot.slane %v705, 1
        %v708 = vor.u32 %v703, %v707
        %v710 = vshll.u32 %v701, 16
        %v712 = vrot.slane %v710, 1
        %v713 = vsel %vm294, %v708, %v712
        %v714 = vshrl.u32 %v701, 16
        %v716 = vor.u32 %v714, %v712
        %717 = vrot.lane.b32.xlu0 %v713, 64
        %v718 = vpop.permute.xlu0 %717
        %719 = vrot.lane.b32.xlu0 %v716, 64
        %v720 = vpop.permute.xlu0 %719
        %v722 = vunpack.c.l.b16 %v688
        %v723 = vpack.c.b16 %v694, %v722
        %v724 = vrot.slane %v723, 1
        %v725 = vrot.slane %v701, 1
        %v726 = vsel %vm317, %v724, %v725
        %v728 = vsel %vm321, %v697, %v718
        %v731 = vsel %vm321, %v698, %v720
        %s732 = scalar_lea.vmem %s1, 192
        %v733 = vld [vmem:[%s732] sm:$0xf]
        %v734 = vld [vmem:[%s732 + $0x4] sm:$0xf]
        %v735 = vld [vmem:[%s732 + $0x8] sm:$0xf]
        %v736 = vld [vmem:[%s732 + $0xc] sm:$0xf]
        %v737 = vld [vmem:[%s732 + $0x10] sm:$0xf]
        %v738 = vld [vmem:[%s732 + $0x14] sm:$0xf]
        %v739 = vld [vmem:[%s732 + $0x18] sm:$0xf]
        %v740 = vld [vmem:[%s732 + $0x1c] sm:$0xf]
        %v741 = vld [vmem:[%s732 + $0x20] sm:$0xf]
        %v742 = vld [vmem:[%s732 + $0x24] sm:$0xf]
        %v743 = vld [vmem:[%s732 + $0x28] sm:$0xf]
        %v744 = vld [vmem:[%s732 + $0x2c] sm:$0xf]
        %v745 = vld [vmem:[%s732 + $0x30] sm:$0xf]
        %v746 = vld [vmem:[%s732 + $0x34] sm:$0xf]
        %v747 = vld [vmem:[%s732 + $0x38] sm:$0xf]
        %v748 = vld [vmem:[%s732 + $0x3c] sm:$0xf]
        %v749 = vld [vmem:[%s732 + $0x40] sm:$0xf]
        %v750 = vld [vmem:[%s732 + $0x44] sm:$0xf]
        %v751 = vld [vmem:[%s732 + $0x48] sm:$0xf]
        %v752 = vld [vmem:[%s732 + $0x4c] sm:$0xf]
        %v753 = vld [vmem:[%s732 + $0x50] sm:$0xf]
        %v754 = vld [vmem:[%s732 + $0x54] sm:$0xf]
        %v755 = vld [vmem:[%s732 + $0x58] sm:$0xf]
        %v756 = vld [vmem:[%s732 + $0x5c] sm:$0xf]
        %vm759 = vcmask 1045504
        %v760 = vrot.slane %v728, 2
        %v761 = vrot.slane %v731, 2
        %v762 = vsel %vm759, %v760, %v761
        %v763 = vrot.slane %v726, 2
        %v764 = vrot.slane %v725, 2
        %v765 = vsel %vm759, %v763, %v764
        %v792 = vunpack.c.l.b16 %v733
        %v793 = vunpack.c.l.b16 %v734
        %v794 = vunpack.c.l.b16 %v735
        %v795 = vunpack.c.l.b16 %v736
        %v796 = vunpack.c.l.b16 %v737
        %v797 = vunpack.c.l.b16 %v738
        %v798 = vunpack.c.l.b16 %v739
        %v799 = vunpack.c.l.b16 %v740
        %v800 = vunpack.c.l.b16 %v741
        %v801 = vunpack.c.l.b16 %v742
        %v802 = vunpack.c.l.b16 %v743
        %v803 = vunpack.c.l.b16 %v744
        %v804 = vunpack.c.l.b16 %v745
        %v805 = vunpack.c.l.b16 %v746
        %v806 = vunpack.c.l.b16 %v747
        %v807 = vunpack.c.l.b16 %v748
        %v808 = vunpack.c.l.b16 %v749
        %v809 = vunpack.c.l.b16 %v750
        %v810 = vunpack.c.l.b16 %v751
        %v811 = vunpack.c.l.b16 %v752
        %v812 = vunpack.c.l.b16 %v753
        %v813 = vunpack.c.l.b16 %v754
        %v814 = vunpack.c.l.b16 %v755
        %v815 = vunpack.c.l.b16 %v756
        %v816 = vpack.c.b16 %v793, %v792
        %v817 = vpack.c.b16 %v795, %v794
        %v818 = vpack.c.b16 %v797, %v796
        %v819 = vpack.c.b16 %v799, %v798
        %v820 = vpack.c.b16 %v801, %v800
        %v821 = vpack.c.b16 %v803, %v802
        %v822 = vpack.c.b16 %v805, %v804
        %v823 = vpack.c.b16 %v807, %v806
        %v824 = vpack.c.b16 %v809, %v808
        %v825 = vpack.c.b16 %v811, %v810
        %v826 = vpack.c.b16 %v813, %v812
        %v827 = vpack.c.b16 %v815, %v814
        %v841 = vsel %vm321, %v765, 0
        %v844 = vsel %vm321, %v764, 0
        %846 = vmatprep.subr.bf16.mxu0 0
        %847 = vmatpush1.bf16.msra.mxu0 %v823
        %848 = vmatprep.subr.bf16.mxu0 0
        %849 = vmatpush1.bf16.msra.mxu0 %v822
        %850 = vmatprep.subr.bf16.mxu0 0
        %851 = vmatpush1.bf16.msra.mxu0 %v821
        %852 = vmatprep.subr.bf16.mxu0 0
        %853 = vmatpush1.bf16.msra.mxu0 %v820
        %854 = vmatprep.subr.bf16.mxu0 0
        %855 = vmatpush1.bf16.msra.mxu0 %v819
        %856 = vmatprep.subr.bf16.mxu0 0
        %857 = vmatpush1.bf16.msra.mxu0 %v818
        %858 = vmatprep.subr.bf16.mxu0 0
        %859 = vmatpush1.bf16.msra.mxu0 %v817
        %860 = vmatprep.subr.bf16.mxu0 0
        %861 = vmatpush1.bf16.msra.mxu0 %v816
        %862 = vmatprep.subr.bf16.mxu0 0
        %863 = vmatpush2.bf16.msra.mxu0 0
        %864 = vmatprep.subr.bf16.mxu0 0
        %865 = vmatpush2.bf16.msra.mxu0 0
        %866 = vmatprep.subr.bf16.mxu0 0
        %867 = vmatpush2.bf16.msra.mxu0 0
        %868 = vmatprep.subr.bf16.mxu0 0
        %869 = vmatpush2.bf16.msra.mxu0 0
        %870 = vmatprep.subr.bf16.mxu0 0
        %871 = vmatpush2.bf16.msra.mxu0 %v827
        %872 = vmatprep.subr.bf16.mxu0 0
        %873 = vmatpush2.bf16.msra.mxu0 %v826
        %874 = vmatprep.subr.bf16.mxu0 0
        %875 = vmatpush2.bf16.msra.mxu0 %v825
        %876 = vmatprep.subr.bf16.mxu0 0
        %877 = vmatpush2.bf16.msra.mxu0 %v824
        %878 = vmatprep.mubr.bf16.mxu0 %v841
        %879 = vmatmul.mubr.bf16.gmra.mxu0 %v762
        %v880 = vpop.f32.mrf.mxu0
        %v881 = vadd.f32 0.0, %v880
        %v882 = vpop.f32.mrf.mxu0
        %v883 = vpop.f32.mrf.mxu0
        %v884 = vadd.f32 0.0, %v883
        %v885 = vpop.f32.mrf.mxu0
        %886 = vmatprep.mubr.bf16.mxu0 %v844
        %887 = vmatmul.mubr.bf16.gmra.mxu0 %v761
        %v888 = vpop.f32.mrf.mxu0
        %v889 = vadd.f32 0.0, %v888
        %v890 = vpop.f32.mrf.mxu0
        %v891 = vpop.f32.mrf.mxu0
        %v892 = vpop.f32.mrf.mxu0
        %893 = vdwg.mxu0
        %v894 = vadd.f32 %v670, %v881
        %v895 = vadd.f32 %v673, %v884
        %v896 = vadd.f32 %v678, %v889
        %897 = vst [vmem:[#allocation2] sm:$0xff] %v894
        %898 = vst [vmem:[#allocation2 + $0x8] sm:$0xff] %v895
        %899 = vst [vmem:[#allocation2 + $0x10] sm:$0xff] %v896
        %v900 = vld [vmem:[#allocation2] ss:$2 sm:$0x3]
        %s901 = scalar_lea.vmem [#allocation2], 1
        %v902 = vld [vmem:[%s901] ss:$2 sm:$0x3]
        %v903 = vmax.f32 %v900, %v902
        %s904 = scalar_lea.vmem [#allocation2], 6
        %v905 = vld [vmem:[%s904] ss:$2 sm:$0x3]
        %s906 = scalar_lea.vmem [#allocation2], 7
        %v907 = vld [vmem:[%s906] ss:$2 sm:$0x3]
        %v908 = vmax.f32 %v905, %v907
        %v909 = vmax.f32 %v903, %v908
        %v911 = vlaneseq
        %v912 = vshrl.u32 %v911, 7
        %v913 = vsub.s32 0, %v912
        %v914 = vrot.slane %v277, %v913
        %v916 = vadd.f32 %v909, %v914
        %v917 = vmax.f32 %v916, 0.0
        %vm918 = vcmask 1041408
        %v919 = vsel %vm918, %v917, 0.0
        %v920 = vrot.slane %v919, 4
        %v921 = vadd.f32 %v919, %v920
        %v922 = vrot.slane %v921, 2
        %v923 = vadd.f32 %v921, %v922
        %v924 = vrot.slane %v923, 1
        %v925 = vadd.f32 %v923, %v924
        %v926 = vadd.f32 %v925, 0.0
        %s927 = scalar_lea.vmem [#allocation2], 12
        %v928 = vld [vmem:[%s927] ss:$2 sm:$0x3]
        %s929 = scalar_lea.vmem [#allocation2], 13
        %v930 = vld [vmem:[%s929] ss:$2 sm:$0x3]
        %v931 = vmax.f32 %v928, %v930
        %s932 = scalar_lea.vmem [#allocation2], 18
        %v933 = vld [vmem:[%s932] ss:$2 sm:$0x3]
        %s934 = scalar_lea.vmem [#allocation2], 19
        %v935 = vld [vmem:[%s934] ss:$2 sm:$0x3]
        %v936 = vmax.f32 %v933, %v935
        %v937 = vmax.f32 %v931, %v936
        %v938 = vadd.f32 %v937, %v914
        %v939 = vmax.f32 %v938, 0.0
        %v940 = vsel %vm918, %v939, 0.0
        %v941 = vrot.slane %v940, 4
        %v942 = vadd.f32 %v940, %v941
        %v943 = vrot.slane %v942, 2
        %v944 = vadd.f32 %v942, %v943
        %v945 = vrot.slane %v944, 1
        %v946 = vadd.f32 %v944, %v945
        %v947 = vadd.f32 %v926, %v946
        %v948 = vmul.f32 %v947, 0.25
        %v949 = vpack.c.bf16 %v948, %v948
        %v950 = vld [vmem:[%s3] sm:$0xff]
        %v951 = vld [vmem:[%s3 + $0x8] sm:$0xff]
        %v952 = vld [vmem:[%s3 + $0x10] sm:$0xff]
        %v953 = vld [vmem:[%s3 + $0x18] sm:$0xff]
        %v954 = vld [vmem:[%s3 + $0x20] sm:$0xff]
        %v955 = vld [vmem:[%s3 + $0x28] sm:$0xff]
        %v956 = vld [vmem:[%s3 + $0x30] sm:$0xff]
        %v957 = vld [vmem:[%s3 + $0x38] sm:$0xff]
        %v958 = vld [vmem:[%s3 + $0x40] sm:$0xff]
        %v959 = vld [vmem:[%s3 + $0x48] sm:$0xff]
        %v960 = vld [vmem:[%s3 + $0x50] sm:$0xff]
        %v961 = vld [vmem:[%s3 + $0x58] sm:$0xff]
        %v962 = vld [vmem:[%s3 + $0x60] sm:$0xff]
        %v963 = vld [vmem:[%s3 + $0x68] sm:$0xff]
        %v964 = vld [vmem:[%s3 + $0x70] sm:$0xff]
        %v965 = vld [vmem:[%s3 + $0x78] sm:$0xff]
        %v966 = vld [vmem:[%s4] sm:$0x3]
        %v983 = vunpack.c.l.b16 %v950
        %v984 = vunpack.c.h.b16 %v950
        %v985 = vunpack.c.l.b16 %v951
        %v986 = vunpack.c.h.b16 %v951
        %v987 = vunpack.c.l.b16 %v952
        %v988 = vunpack.c.h.b16 %v952
        %v989 = vunpack.c.l.b16 %v953
        %v990 = vunpack.c.h.b16 %v953
        %v991 = vunpack.c.l.b16 %v954
        %v992 = vunpack.c.h.b16 %v954
        %v993 = vunpack.c.l.b16 %v955
        %v994 = vunpack.c.h.b16 %v955
        %v995 = vunpack.c.l.b16 %v956
        %v996 = vunpack.c.h.b16 %v956
        %v997 = vunpack.c.l.b16 %v957
        %v998 = vunpack.c.h.b16 %v957
        %v999 = vunpack.c.l.b16 %v958
        %v1000 = vunpack.c.h.b16 %v958
        %v1001 = vunpack.c.l.b16 %v959
        %v1002 = vunpack.c.h.b16 %v959
        %v1003 = vunpack.c.l.b16 %v960
        %v1004 = vunpack.c.h.b16 %v960
        %v1005 = vunpack.c.l.b16 %v961
        %v1006 = vunpack.c.h.b16 %v961
        %v1007 = vunpack.c.l.b16 %v962
        %v1008 = vunpack.c.h.b16 %v962
        %v1009 = vunpack.c.l.b16 %v963
        %v1010 = vunpack.c.h.b16 %v963
        %v1011 = vunpack.c.l.b16 %v964
        %v1012 = vunpack.c.h.b16 %v964
        %v1013 = vunpack.c.l.b16 %v965
        %v1014 = vunpack.c.h.b16 %v965
        %v1015 = vpack.c.b16 %v985, %v983
        %v1016 = vpack.c.b16 %v986, %v984
        %v1017 = vpack.c.b16 %v989, %v987
        %v1018 = vpack.c.b16 %v990, %v988
        %v1019 = vpack.c.b16 %v993, %v991
        %v1020 = vpack.c.b16 %v994, %v992
        %v1021 = vpack.c.b16 %v997, %v995
        %v1022 = vpack.c.b16 %v998, %v996
        %v1023 = vpack.c.b16 %v1001, %v999
        %v1024 = vpack.c.b16 %v1002, %v1000
        %v1025 = vpack.c.b16 %v1005, %v1003
        %v1026 = vpack.c.b16 %v1006, %v1004
        %v1027 = vpack.c.b16 %v1009, %v1007
        %v1028 = vpack.c.b16 %v1010, %v1008
        %v1029 = vpack.c.b16 %v1013, %v1011
        %v1030 = vpack.c.b16 %v1014, %v1012
        %v1048 = vlaneseq
        %v1049 = vshrl.u32 %v1048, 7
        %v1050 = vsub.s32 0, %v1049
        %v1051 = vrot.slane %v966, %v1050
        %v1052 = vlaneseq
        %v1053 = vshrl.u32 %v1052, 7
        %v1054 = vsub.s32 1, %v1053
        %v1055 = vrot.slane %v966, %v1054
        %1058 = vmatprep.subr.bf16.mxu0 %v1030
        %1059 = vmatpush1.bf16.msra.mxu0 %v1029
        %1060 = vmatprep.subr.bf16.mxu0 %v1028
        %1061 = vmatpush1.bf16.msra.mxu0 %v1027
        %1062 = vmatprep.subr.bf16.mxu0 %v1026
        %1063 = vmatpush1.bf16.msra.mxu0 %v1025
        %1064 = vmatprep.subr.bf16.mxu0 %v1024
        %1065 = vmatpush1.bf16.msra.mxu0 %v1023
        %1066 = vmatprep.subr.bf16.mxu0 %v1022
        %1067 = vmatpush1.bf16.msra.mxu0 %v1021
        %1068 = vmatprep.subr.bf16.mxu0 %v1020
        %1069 = vmatpush1.bf16.msra.mxu0 %v1019
        %1070 = vmatprep.subr.bf16.mxu0 %v1018
        %1071 = vmatpush1.bf16.msra.mxu0 %v1017
        %1072 = vmatprep.subr.bf16.mxu0 %v1016
        %1073 = vmatpush1.bf16.msra.mxu0 %v1015
        %1074 = vmatprep.subr.bf16.mxu0 0
        %1075 = vmatpush2.bf16.msra.mxu0 0
        %1076 = vmatprep.subr.bf16.mxu0 0
        %1077 = vmatpush2.bf16.msra.mxu0 0
        %1078 = vmatprep.subr.bf16.mxu0 0
        %1079 = vmatpush2.bf16.msra.mxu0 0
        %1080 = vmatprep.subr.bf16.mxu0 0
        %1081 = vmatpush2.bf16.msra.mxu0 0
        %1082 = vmatprep.subr.bf16.mxu0 0
        %1083 = vmatpush2.bf16.msra.mxu0 0
        %1084 = vmatprep.subr.bf16.mxu0 0
        %1085 = vmatpush2.bf16.msra.mxu0 0
        %1086 = vmatprep.subr.bf16.mxu0 0
        %1087 = vmatpush2.bf16.msra.mxu0 0
        %1088 = vmatprep.subr.bf16.mxu0 0
        %1089 = vmatpush2.bf16.msra.mxu0 0
        %1090 = vmatprep.mubr.bf16.mxu0 0
        %1091 = vmatmul.mubr.bf16.gmra.mxu0 %v949
        %v1092 = vpop.f32.mrf.mxu0
        %v1093 = vadd.f32 %v1051, %v1092
        %v1094 = vpop.f32.mrf.mxu0
        %v1095 = vadd.f32 %v1055, %v1094
        %v1096 = vpop.f32.mrf.mxu0
        %v1097 = vpop.f32.mrf.mxu0
        %1098 = vdwg.mxu0
        %v1099 = vmax.f32 %v1093, 0.0
        %v1100 = vmax.f32 %v1095, 0.0
        %v1101 = vpack.c.bf16 %v1099, %v1099
        %v1102 = vpack.c.bf16 %v1100, %v1100
        %v1103 = vld [vmem:[%s5] sm:$0xf]
        %v1104 = vld [vmem:[%s5 + $0x4] sm:$0xf]
        %v1105 = vld [vmem:[%s5 + $0x8] sm:$0xf]
        %v1106 = vld [vmem:[%s5 + $0xc] sm:$0xf]
        %v1107 = vld [vmem:[%s5 + $0x10] sm:$0xf]
        %v1108 = vld [vmem:[%s5 + $0x14] sm:$0xf]
        %v1109 = vld [vmem:[%s5 + $0x18] sm:$0xf]
        %v1110 = vld [vmem:[%s5 + $0x1c] sm:$0xf]
        %v1111 = vld [vmem:[%s5 + $0x20] sm:$0xf]
        %v1112 = vld [vmem:[%s5 + $0x24] sm:$0xf]
        %v1113 = vld [vmem:[%s5 + $0x28] sm:$0xf]
        %v1114 = vld [vmem:[%s5 + $0x2c] sm:$0xf]
        %v1115 = vld [vmem:[%s5 + $0x30] sm:$0xf]
        %v1116 = vld [vmem:[%s5 + $0x34] sm:$0xf]
        %v1117 = vld [vmem:[%s5 + $0x38] sm:$0xf]
        %v1118 = vld [vmem:[%s5 + $0x3c] sm:$0xf]
        %v1119 = vld [vmem:[%s5 + $0x40] sm:$0xf]
        %v1120 = vld [vmem:[%s5 + $0x44] sm:$0xf]
        %v1121 = vld [vmem:[%s5 + $0x48] sm:$0xf]
        %v1122 = vld [vmem:[%s5 + $0x4c] sm:$0xf]
        %v1123 = vld [vmem:[%s5 + $0x50] sm:$0xf]
        %v1124 = vld [vmem:[%s5 + $0x54] sm:$0xf]
        %v1125 = vld [vmem:[%s5 + $0x58] sm:$0xf]
        %v1126 = vld [vmem:[%s5 + $0x5c] sm:$0xf]
        %v1127 = vld [vmem:[%s5 + $0x60] sm:$0xf]
        %v1128 = vld [vmem:[%s5 + $0x64] sm:$0xf]
        %v1129 = vld [vmem:[%s5 + $0x68] sm:$0xf]
        %v1130 = vld [vmem:[%s5 + $0x6c] sm:$0xf]
        %v1131 = vld [vmem:[%s5 + $0x70] sm:$0xf]
        %v1132 = vld [vmem:[%s5 + $0x74] sm:$0xf]
        %v1133 = vld [vmem:[%s5 + $0x78] sm:$0xf]
        %v1134 = vld [vmem:[%s5 + $0x7c] sm:$0xf]
        %v1135 = vld [vmem:[%s6] sm:$0x1]
        %v1168 = vunpack.c.l.b16 %v1103
        %v1169 = vunpack.c.l.b16 %v1104
        %v1170 = vunpack.c.l.b16 %v1105
        %v1171 = vunpack.c.l.b16 %v1106
        %v1172 = vunpack.c.l.b16 %v1107
        %v1173 = vunpack.c.l.b16 %v1108
        %v1174 = vunpack.c.l.b16 %v1109
        %v1175 = vunpack.c.l.b16 %v1110
        %v1176 = vunpack.c.l.b16 %v1111
        %v1177 = vunpack.c.l.b16 %v1112
        %v1178 = vunpack.c.l.b16 %v1113
        %v1179 = vunpack.c.l.b16 %v1114
        %v1180 = vunpack.c.l.b16 %v1115
        %v1181 = vunpack.c.l.b16 %v1116
        %v1182 = vunpack.c.l.b16 %v1117
        %v1183 = vunpack.c.l.b16 %v1118
        %v1184 = vunpack.c.l.b16 %v1119
        %v1185 = vunpack.c.l.b16 %v1120
        %v1186 = vunpack.c.l.b16 %v1121
        %v1187 = vunpack.c.l.b16 %v1122
        %v1188 = vunpack.c.l.b16 %v1123
        %v1189 = vunpack.c.l.b16 %v1124
        %v1190 = vunpack.c.l.b16 %v1125
        %v1191 = vunpack.c.l.b16 %v1126
        %v1192 = vunpack.c.l.b16 %v1127
        %v1193 = vunpack.c.l.b16 %v1128
        %v1194 = vunpack.c.l.b16 %v1129
        %v1195 = vunpack.c.l.b16 %v1130
        %v1196 = vunpack.c.l.b16 %v1131
        %v1197 = vunpack.c.l.b16 %v1132
        %v1198 = vunpack.c.l.b16 %v1133
        %v1199 = vunpack.c.l.b16 %v1134
        %v1200 = vpack.c.b16 %v1169, %v1168
        %v1201 = vpack.c.b16 %v1171, %v1170
        %v1202 = vpack.c.b16 %v1173, %v1172
        %v1203 = vpack.c.b16 %v1175, %v1174
        %v1204 = vpack.c.b16 %v1177, %v1176
        %v1205 = vpack.c.b16 %v1179, %v1178
        %v1206 = vpack.c.b16 %v1181, %v1180
        %v1207 = vpack.c.b16 %v1183, %v1182
        %v1208 = vpack.c.b16 %v1185, %v1184
        %v1209 = vpack.c.b16 %v1187, %v1186
        %v1210 = vpack.c.b16 %v1189, %v1188
        %v1211 = vpack.c.b16 %v1191, %v1190
        %v1212 = vpack.c.b16 %v1193, %v1192
        %v1213 = vpack.c.b16 %v1195, %v1194
        %v1214 = vpack.c.b16 %v1197, %v1196
        %v1215 = vpack.c.b16 %v1199, %v1198
        %1232 = vmatprep.subr.bf16.mxu0 0
        %1233 = vmatpush1.bf16.msra.mxu0 %v1207
        %1234 = vmatprep.subr.bf16.mxu0 0
        %1235 = vmatpush1.bf16.msra.mxu0 %v1206
        %1236 = vmatprep.subr.bf16.mxu0 0
        %1237 = vmatpush1.bf16.msra.mxu0 %v1205
        %1238 = vmatprep.subr.bf16.mxu0 0
        %1239 = vmatpush1.bf16.msra.mxu0 %v1204
        %1240 = vmatprep.subr.bf16.mxu0 0
        %1241 = vmatpush1.bf16.msra.mxu0 %v1203
        %1242 = vmatprep.subr.bf16.mxu0 0
        %1243 = vmatpush1.bf16.msra.mxu0 %v1202
        %1244 = vmatprep.subr.bf16.mxu0 0
        %1245 = vmatpush1.bf16.msra.mxu0 %v1201
        %1246 = vmatprep.subr.bf16.mxu0 0
        %1247 = vmatpush1.bf16.msra.mxu0 %v1200
        %1248 = vmatprep.subr.bf16.mxu0 0
        %1249 = vmatpush2.bf16.msra.mxu0 %v1215
        %1250 = vmatprep.subr.bf16.mxu0 0
        %1251 = vmatpush2.bf16.msra.mxu0 %v1214
        %1252 = vmatprep.subr.bf16.mxu0 0
        %1253 = vmatpush2.bf16.msra.mxu0 %v1213
        %1254 = vmatprep.subr.bf16.mxu0 0
        %1255 = vmatpush2.bf16.msra.mxu0 %v1212
        %1256 = vmatprep.subr.bf16.mxu0 0
        %1257 = vmatpush2.bf16.msra.mxu0 %v1211
        %1258 = vmatprep.subr.bf16.mxu0 0
        %1259 = vmatpush2.bf16.msra.mxu0 %v1210
        %1260 = vmatprep.subr.bf16.mxu0 0
        %1261 = vmatpush2.bf16.msra.mxu0 %v1209
        %1262 = vmatprep.subr.bf16.mxu0 0
        %1263 = vmatpush2.bf16.msra.mxu0 %v1208
        %1264 = vmatprep.mubr.bf16.mxu0 %v1102
        %1265 = vmatmul.mubr.bf16.gmra.mxu0 %v1101
        %v1266 = vpop.f32.mrf.mxu0
        %v1267 = vadd.f32 %v1135, %v1266
        %v1268 = vpop.f32.mrf.mxu0
        %v1269 = vpop.f32.mrf.mxu0
        %v1270 = vpop.f32.mrf.mxu0
        %1271 = vdwg.mxu0
        %1272 = vst [vmem:[%s270] sm:$0x1] %v1267
        %s1273 = sand.u32 %s181, 1
        %s1274 = scalar_lea.sflag [#allocation4], %s1273
        %s1275 = sand.u32 %s181, 1
        %s1276 = scalar_lea.vmem [#allocation3], %s1275
        // Predicated region
        $region49: #{cnn_forward.5} parent=47 // pred_check
          %p1277 = pneg %p191
        $region50: #{cnn_forward.5} parent=47 // pred_check_branch
          %1279 = sbr.rel (%p1277) target = $region52
        $region51: #{cnn_forward.5} parent=47 // pred_region
          %s1281 = ssub.s32 16, 16
          %1282 = vsyncadd %s1274, %s1281
          %s1283 = smul.addr %s21, 16
          %s1284 = scalar_lea.hbm %s7, %s1283
          %s1286 = sshll.u32 %s1276, 4
          %s1287 = int_to_ptr.vmem [resolvable:$true] %s1286
          %1289 = dma.vmem_to_hbm [thread:$0]  %s1287, 16, %s1284, %s1274
        $region52: #{cnn_forward.5} parent=47 // pred_fallthru
          _
      $region48: #{cnn_forward.5} parent=5 // pred_fallthru
        _
      %p1290 = scmp.le.s32.totalorder 2, %s16
      // Predicated region
      $region53: #{cnn_forward.5} parent=5 // pred_check
        %p1291 = pneg %p1290
      $region54: #{cnn_forward.5} parent=5 // pred_check_branch
        %1293 = sbr.rel (%p1291) target = $region56
      $region55: #{cnn_forward.5} parent=5 // pred_region
        %s1294 = ssub.s32 %s16, 2
        // Predicated region
        $region57: #{cnn_forward.5} parent=55 // pred_check
          %p1295 = pneg %p197
        $region58: #{cnn_forward.5} parent=55 // pred_check_branch
          %1297 = sbr.rel (%p1295) target = $region60
        $region59: #{cnn_forward.5} parent=55 // pred_region
          %s1298 = sand.u32 %s182, 1
          %s1299 = scalar_lea.sflag [#allocation4], %s1298
          %s1300 = sand.u32 %s182, 1
          %s1301 = scalar_lea.vmem [#allocation3], %s1300
          %1302 = dma.done %s1299, 16
        $region60: #{cnn_forward.5} parent=55 // pred_fallthru
          _
      $region56: #{cnn_forward.5} parent=5 // pred_fallthru
        _
    $region6: #{cnn_forward.5} parent=1 // loop_footer
      %s20 = sadd.s32 1, %s16
    $region7: #{cnn_forward.5} parent=1 // loop_footer_branch
      %15 = sbr.rel target = $region3
    $region8: #{cnn_forward.5} parent=1 // loop_exit
      _
    %1303 = vsyncpa [#allocation4], 1
    %s1304 = scalar_lea.sflag [#allocation4], 1
    %1305 = vsyncpa %s1304, 1

</llo_original>
